<compile_context>
chip_gen: v7x
topology: tpu7x:2x2x1
jax: 0.10.0
libtpu: 0.0.40
codegen_flags: <defaults>
</compile_context>

<pallas_src>
import jax
import jax.numpy as jnp
from jax.experimental import pallas as pl
from jax.experimental.pallas import tpu as pltpu

# ---------------- model hyper-parameters (small, forward-consistent) ----------
B = 2                                   # batch
FRAMES = 2                              # temporal frames ('f' axis of the Rearrange)
C_IN = 3                                # image channels
IMG = 16                                # image height / width
PATCH = 8                               # patch height / width
GRID_HW = IMG // PATCH                  # 2
NPP = FRAMES * GRID_HW * GRID_HW        # 8 patches per sample
PATCH_DIM = C_IN * PATCH * PATCH        # 192
N = NPP + 1                             # +cls token -> 9 real tokens
NP = 16                                 # tokens per batch padded to a sublane-aligned block
R = B * NP                              # 32 rows in the padded residual slab
DIM = 32
DEPTH = 2
HEADS = 4
DIM_HEAD = 16
INNER = HEADS * DIM_HEAD                # 64
MLP = 64
NUM_CLASSES = 2
SCALE = DIM_HEAD ** -0.5
LN_EPS = 1e-5
NEG_INF = -1e9


# ---------------- shared math helpers (used in kernel and reference) ----------
def _ln_nogain(x):
    """LayerNorm over the last dim without affine (affine folded into weights)."""
    mu = jnp.mean(x, axis=-1, keepdims=True)
    var = jnp.mean(jnp.square(x - mu), axis=-1, keepdims=True)
    return (x - mu) * jax.lax.rsqrt(var + LN_EPS)


def _ln_affine(x, g, b):
    return _ln_nogain(x) * g + b


def _gelu_tanh(x):
    # TODO(synk): nn.GELU() uses the exact erf form; the tanh approximation is
    # used here (and in the reference) since erf lowering is not guaranteed in Mosaic.
    c = 0.7978845608028654  # sqrt(2/pi)
    return 0.5 * x * (1.0 + jnp.tanh(c * (x + 0.044715 * x * x * x)))


# ------------------------------- Pallas kernel --------------------------------
def vit_kernel(patch_ref, wp_ref, bp_ref, ln2g_ref, ln2b_ref,
               cls_base_ref, pos_pad_ref, patch_mask_ref, attn_bias_ref,
               wq_ref, wk_ref, wv_ref, bq_ref, bk_ref, bv_ref,
               wo_ref, bo_ref, w1_ref, b1_ref, w2_ref, b2_ref,
               wh_ref, bh_ref, o_ref):
    f32 = jnp.float32

    # ---- patch embedding on the padded (R, PATCH_DIM) slab: LN -> Linear -> LN2 ----
    p = patch_ref[...]                                              # (R, PATCH_DIM)
    emb = jnp.dot(_ln_nogain(p), wp_ref[...],
                  preferred_element_type=f32) + bp_ref[...]
    emb = _ln_nogain(emb) * ln2g_ref[...] + ln2b_ref[...]           # (R, DIM)

    # ---- residual stream assembly (pure elementwise, no unaligned stores) ----
    # patch rows: emb + pos ; cls rows: cls + pos0 ; pad rows: 0
    x = patch_mask_ref[...] * (emb + pos_pad_ref[...]) + cls_base_ref[...]   # (R, DIM)

    bias = attn_bias_ref[...]                                       # (R, R) additive mask

    # ---- transformer layers (unrolled; DEPTH is tiny) ----
    for l in range(DEPTH):
        # -- attention (LN affine folded into W_q/W_k/W_v) --
        xn = _ln_nogain(x)
        q = jnp.dot(xn, wq_ref[l], preferred_element_type=f32) + bq_ref[l]   # (R, INNER)
        k = jnp.dot(xn, wk_ref[l], preferred_element_type=f32) + bk_ref[l]
        v = jnp.dot(xn, wv_ref[l], preferred_element_type=f32) + bv_ref[l]

        # heads as a leading batch dim: (HEADS, R, DIM_HEAD)
        qh = jnp.stack([q[:, h * DIM_HEAD:(h + 1) * DIM_HEAD] for h in range(HEADS)], axis=0)
        kh = jnp.stack([k[:, h * DIM_HEAD:(h + 1) * DIM_HEAD] for h in range(HEADS)], axis=0)
        vh = jnp.stack([v[:, h * DIM_HEAD:(h + 1) * DIM_HEAD] for h in range(HEADS)], axis=0)

        # single batched score / AV contraction per layer; bias masks cross-batch
        # and pad keys so the whole (R) slab is processed at once.
        s = jnp.einsum('hnd,hmd->hnm', qh, kh,
                       preferred_element_type=f32) * SCALE + bias             # (H, R, R)
        s = s - jnp.max(s, axis=-1, keepdims=True)
        e = jnp.exp(s)
        attn = e * pl.reciprocal(jnp.sum(e, axis=-1, keepdims=True), approx=True)
        oh = jnp.einsum('hnm,hmd->hnd', attn, vh,
                        preferred_element_type=f32)                           # (H, R, DIM_HEAD)

        out = jnp.concatenate([oh[h] for h in range(HEADS)], axis=-1)         # (R, INNER)
        x = x + jnp.dot(out, wo_ref[l], preferred_element_type=f32) + bo_ref[l]

        # -- feed-forward (LN affine folded into W1 / b1) --
        xn = _ln_nogain(x)
        h1 = jnp.dot(xn, w1_ref[l], preferred_element_type=f32) + b1_ref[l]
        h1 = _gelu_tanh(h1)
        x = x + jnp.dot(h1, w2_ref[l], preferred_element_type=f32) + b2_ref[l]

    # ---- final LN (folded into head) + cls pooling + mlp_head: one matmul, one store ----
    cls_rows = jnp.concatenate([x[b * NP:b * NP + 1, :] for b in range(B)], axis=0)  # (B, DIM)
    o_ref[...] = jnp.dot(_ln_nogain(cls_rows), wh_ref[...],
                         preferred_element_type=f32) + bh_ref[...]


# ------------------------------- wrappers --------------------------------------
def _to_patches(img):
    """einops Rearrange('b f c (h p1) (w p2) -> b (f h w) (p1 p2 c)')."""
    b, f, c, hh, ww = img.shape
    gh, gw = hh // PATCH, ww // PATCH
    x = img.reshape(b, f, c, gh, PATCH, gw, PATCH)
    x = x.transpose(0, 1, 3, 5, 4, 6, 2)                        # b f h w p1 p2 c
    return x.reshape(b, f * gh * gw, PATCH * PATCH * c)


def vit_pallas(img, p):
    f32 = jnp.float32

    # real patches placed at rows b*NP + 1 .. b*NP + NPP of the padded slab
    patches = _to_patches(img)                                   # (B, NPP, PATCH_DIM)
    patches_padded = jnp.zeros((B, NP, PATCH_DIM), f32).at[:, 1:1 + NPP, :].set(patches)
    patches_padded = patches_padded.reshape(R, PATCH_DIM)

    # --- fold LayerNorm affines (in f32) into the Linear that follows them ---
    w_patch_f = p['ln1_g'][:, None] * p['w_patch']
    b_patch_f = (p['ln1_b'] @ p['w_patch'] + p['b_patch'])[None, :]

    w_q = p['w_qkv'][:, :, :INNER]
    w_k = p['w_qkv'][:, :, INNER:2 * INNER]
    w_v = p['w_qkv'][:, :, 2 * INNER:]
    g_attn = p['attn_ln_g'][:, :, None]
    w_q_f, w_k_f, w_v_f = g_attn * w_q, g_attn * w_k, g_attn * w_v
    b_q_f = jnp.einsum('ld,ldk->lk', p['attn_ln_b'], w_q)[:, None, :]
    b_k_f = jnp.einsum('ld,ldk->lk', p['attn_ln_b'], w_k)[:, None, :]
    b_v_f = jnp.einsum('ld,ldk->lk', p['attn_ln_b'], w_v)[:, None, :]

    w1_f = p['ffn_ln_g'][:, :, None] * p['w1']
    b1_f = (jnp.einsum('ld,ldk->lk', p['ffn_ln_b'], p['w1']) + p['b1'])[:, None, :]

    w_head_f = p['fin_g'][:, None] * p['w_head']
    b_head_f = (p['fin_b'] @ p['w_head'] + p['b_head'])[None, :]

    # --- padded-token layout helpers (built once in the wrapper) ---
    tok = jnp.arange(NP)
    is_cls = (tok == 0)
    is_patch = (tok >= 1) & (tok < N)
    cls_row = p['cls'][0, 0] + p['pos'][0, 0]                               # (DIM,)
    cls_base = jnp.where(is_cls[:, None], cls_row[None, :], 0.0).astype(f32)
    cls_base = jnp.tile(cls_base, (B, 1))                                   # (R, DIM)
    pos_rows = jnp.zeros((NP, DIM), f32).at[1:N, :].set(p['pos'][0, 1:N])
    pos_pad = jnp.tile(pos_rows, (B, 1))                                    # (R, DIM)
    patch_mask = jnp.tile(is_patch.astype(f32)[:, None], (B, 1))            # (R, 1)

    # additive attention bias: allow only same-batch-block, non-pad keys
    blk = jnp.arange(R) // NP
    key_pos = jnp.arange(R) % NP
    valid = (blk[:, None] == blk[None, :]) & (key_pos[None, :] < N)
    attn_bias = jnp.where(valid, 0.0, NEG_INF).astype(f32)                  # (R, R)

    vmem_spec = pl.BlockSpec(memory_space=pltpu.MemorySpace.VMEM)
    n_in = 23

    return pl.pallas_call(
        vit_kernel,
        out_shape=jax.ShapeDtypeStruct((B, NUM_CLASSES), f32),
        in_specs=[vmem_spec] * n_in,
        out_specs=vmem_spec,
        compiler_params=pltpu.CompilerParams(vmem_limit_bytes=32 * 1024 * 1024),
    )(patches_padded, w_patch_f, b_patch_f,
      p['ln2_g'][None, :], p['ln2_b'][None, :],
      cls_base, pos_pad, patch_mask, attn_bias,
      w_q_f, w_k_f, w_v_f, b_q_f, b_k_f, b_v_f,
      p['w_out'], p['b_out'][:, None, :],
      w1_f, b1_f, p['w2'], p['b2'][:, None, :],
      w_head_f, b_head_f)


# ------------------------------- pure-JAX reference ----------------------------
def vit_reference(img, p):
    x = _to_patches(img)                                        # (B, NPP, PATCH_DIM)
    x = _ln_affine(x, p['ln1_g'], p['ln1_b'])
    x = x @ p['w_patch'] + p['b_patch']
    x = _ln_affine(x, p['ln2_g'], p['ln2_b'])
    cls = jnp.broadcast_to(p['cls'], (B, 1, DIM))
    x = jnp.concatenate([cls, x], axis=1)
    x = x + p['pos'][:, :N]
    for l in range(DEPTH):
        # attention block
        xn = _ln_affine(x, p['attn_ln_g'][l], p['attn_ln_b'][l])
        qkv = xn @ p['w_qkv'][l]
        q, k, v = jnp.split(qkv, 3, axis=-1)

        def heads(t):
            return t.reshape(B, N, HEADS, DIM_HEAD).transpose(0, 2, 1, 3)

        q, k, v = heads(q), heads(k), heads(v)
        dots = jnp.einsum('bhnd,bhmd->bhnm', q, k) * SCALE
        attn = jax.nn.softmax(dots, axis=-1)
        out = jnp.einsum('bhnm,bhmd->bhnd', attn, v)
        out = out.transpose(0, 2, 1, 3).reshape(B, N, INNER)
        x = x + (out @ p['w_out'][l] + p['b_out'][l])
        # feed-forward block
        xn = _ln_affine(x, p['ffn_ln_g'][l], p['ffn_ln_b'][l])
        h = _gelu_tanh(xn @ p['w1'][l] + p['b1'][l])
        x = x + (h @ p['w2'][l] + p['b2'][l])
    x = _ln_affine(x, p['fin_g'], p['fin_b'])
    x = x[:, 0]                                                 # cls pooling
    return x @ p['w_head'] + p['b_head']


if __name__ == "__main__":
    key = jax.random.PRNGKey(0)
    ks = jax.random.split(key, 24)
    f32 = jnp.float32

    img = jax.random.normal(ks[0], (B, FRAMES, C_IN, IMG, IMG), dtype=f32)

    params = {
        'ln1_g': 1.0 + 0.1 * jax.random.normal(ks[1], (PATCH_DIM,), f32),
        'ln1_b': 0.1 * jax.random.normal(ks[2], (PATCH_DIM,), f32),
        'w_patch': 0.05 * jax.random.normal(ks[3], (PATCH_DIM, DIM), f32),
        'b_patch': 0.02 * jax.random.normal(ks[4], (DIM,), f32),
        'ln2_g': 1.0 + 0.1 * jax.random.normal(ks[5], (DIM,), f32),
        'ln2_b': 0.1 * jax.random.normal(ks[6], (DIM,), f32),
        'cls': 0.02 * jax.random.normal(ks[7], (1, 1, DIM), f32),
        'pos': 0.02 * jax.random.normal(ks[8], (1, N, DIM), f32),
        'attn_ln_g': 1.0 + 0.1 * jax.random.normal(ks[9], (DEPTH, DIM), f32),
        'attn_ln_b': 0.1 * jax.random.normal(ks[10], (DEPTH, DIM), f32),
        'w_qkv': 0.05 * jax.random.normal(ks[11], (DEPTH, DIM, 3 * INNER), f32),
        'w_out': 0.05 * jax.random.normal(ks[12], (DEPTH, INNER, DIM), f32),
        'b_out': 0.02 * jax.random.normal(ks[13], (DEPTH, DIM), f32),
        'ffn_ln_g': 1.0 + 0.1 * jax.random.normal(ks[14], (DEPTH, DIM), f32),
        'ffn_ln_b': 0.1 * jax.random.normal(ks[15], (DEPTH, DIM), f32),
        'w1': 0.05 * jax.random.normal(ks[16], (DEPTH, DIM, MLP), f32),
        'b1': 0.02 * jax.random.normal(ks[17], (DEPTH, MLP), f32),
        'w2': 0.05 * jax.random.normal(ks[18], (DEPTH, MLP, DIM), f32),
        'b2': 0.02 * jax.random.normal(ks[19], (DEPTH, DIM), f32),
        'fin_g': 1.0 + 0.1 * jax.random.normal(ks[20], (DIM,), f32),
        'fin_b': 0.1 * jax.random.normal(ks[21], (DIM,), f32),
        'w_head': 0.05 * jax.random.normal(ks[22], (DIM, NUM_CLASSES), f32),
        'b_head': 0.02 * jax.random.normal(ks[23], (NUM_CLASSES,), f32),
    }

    y = vit_pallas(img, params)
    y = jax.block_until_ready(y)

    y_ref = vit_reference(img, params)
    assert y.shape == (B, NUM_CLASSES)
    assert jnp.allclose(y, y_ref, rtol=1e-3, atol=1e-3), "mismatch vs reference"

    print("KERNEL_OK")
</pallas_src>

<mosaic_0001>
module attributes {stable_mosaic.version = 11 : i64} {
  func.func @vit_kernel(%arg0: memref<32x192xf32, #tpu.memory_space<vmem>>, %arg1: memref<192x32xf32, #tpu.memory_space<vmem>>, %arg2: memref<1x32xf32, #tpu.memory_space<vmem>>, %arg3: memref<1x32xf32, #tpu.memory_space<vmem>>, %arg4: memref<1x32xf32, #tpu.memory_space<vmem>>, %arg5: memref<32x32xf32, #tpu.memory_space<vmem>>, %arg6: memref<32x32xf32, #tpu.memory_space<vmem>>, %arg7: memref<32x1xf32, #tpu.memory_space<vmem>>, %arg8: memref<32x32xf32, #tpu.memory_space<vmem>>, %arg9: memref<2x32x64xf32, #tpu.memory_space<vmem>>, %arg10: memref<2x32x64xf32, #tpu.memory_space<vmem>>, %arg11: memref<2x32x64xf32, #tpu.memory_space<vmem>>, %arg12: memref<2x1x64xf32, #tpu.memory_space<vmem>>, %arg13: memref<2x1x64xf32, #tpu.memory_space<vmem>>, %arg14: memref<2x1x64xf32, #tpu.memory_space<vmem>>, %arg15: memref<2x64x32xf32, #tpu.memory_space<vmem>>, %arg16: memref<2x1x32xf32, #tpu.memory_space<vmem>>, %arg17: memref<2x32x64xf32, #tpu.memory_space<vmem>>, %arg18: memref<2x1x64xf32, #tpu.memory_space<vmem>>, %arg19: memref<2x64x32xf32, #tpu.memory_space<vmem>>, %arg20: memref<2x1x32xf32, #tpu.memory_space<vmem>>, %arg21: memref<32x2xf32, #tpu.memory_space<vmem>>, %arg22: memref<1x2xf32, #tpu.memory_space<vmem>>, %arg23: memref<2x2xf32, #tpu.memory_space<vmem>>) attributes {dimension_semantics = [], scalar_prefetch = 0 : i64, scratch_operands = 0 : i64, tpu.core_type = #tpu.core_type<tc>} {
    %c0 = arith.constant 0 : index
    %c0_0 = arith.constant 0 : index
    %0 = vector.load %arg0[%c0, %c0_0] : memref<32x192xf32, #tpu.memory_space<vmem>>, vector<32x192xf32>
    %cst = arith.constant dense<0.000000e+00> : vector<32xf32>
    %1 = vector.multi_reduction <add>, %0, %cst [1] : vector<32x192xf32> to vector<32xf32>
    %2 = vector.shape_cast %1 : vector<32xf32> to vector<32x1xf32>
    %cst_1 = arith.constant 1.920000e+02 : f32
    %3 = vector.broadcast %cst_1 : f32 to vector<32x1xf32>
    %4 = arith.divf %2, %3 : vector<32x1xf32>
    %5 = vector.broadcast %4 : vector<32x1xf32> to vector<32x192xf32>
    %6 = arith.subf %0, %5 : vector<32x192xf32>
    %7 = arith.mulf %6, %6 : vector<32x192xf32>
    %cst_2 = arith.constant dense<0.000000e+00> : vector<32xf32>
    %8 = vector.multi_reduction <add>, %7, %cst_2 [1] : vector<32x192xf32> to vector<32xf32>
    %9 = vector.shape_cast %8 : vector<32xf32> to vector<32x1xf32>
    %cst_3 = arith.constant 1.920000e+02 : f32
    %10 = vector.broadcast %cst_3 : f32 to vector<32x1xf32>
    %11 = arith.divf %9, %10 : vector<32x1xf32>
    %12 = vector.broadcast %4 : vector<32x1xf32> to vector<32x192xf32>
    %13 = arith.subf %0, %12 : vector<32x192xf32>
    %cst_4 = arith.constant 9.99999974E-6 : f32
    %14 = vector.broadcast %cst_4 : f32 to vector<32x1xf32>
    %15 = arith.addf %11, %14 : vector<32x1xf32>
    %16 = math.rsqrt %15 : vector<32x1xf32>
    %17 = vector.broadcast %16 : vector<32x1xf32> to vector<32x192xf32>
    %18 = arith.mulf %13, %17 : vector<32x192xf32>
    %c0_5 = arith.constant 0 : index
    %c0_6 = arith.constant 0 : index
    %19 = vector.load %arg1[%c0_5, %c0_6] : memref<192x32xf32, #tpu.memory_space<vmem>>, vector<192x32xf32>
    %cst_7 = arith.constant dense<0.000000e+00> : vector<32x32xf32>
    %20 = tpu.matmul %18, %19, %cst_7 {dimension_numbers = #tpu.dot_dimension_numbers<[1], [0], [0], [1], [0, 0, 1, 1], [], []>} : vector<32x192xf32>, vector<192x32xf32>, vector<32x32xf32> -> vector<32x32xf32>
    %c0_8 = arith.constant 0 : index
    %c0_9 = arith.constant 0 : index
    %21 = vector.load %arg2[%c0_8, %c0_9] : memref<1x32xf32, #tpu.memory_space<vmem>>, vector<1x32xf32>
    %22 = vector.broadcast %21 : vector<1x32xf32> to vector<32x32xf32>
    %23 = arith.addf %20, %22 : vector<32x32xf32>
    %cst_10 = arith.constant dense<0.000000e+00> : vector<32xf32>
    %24 = vector.multi_reduction <add>, %23, %cst_10 [1] : vector<32x32xf32> to vector<32xf32>
    %25 = vector.shape_cast %24 : vector<32xf32> to vector<32x1xf32>
    %cst_11 = arith.constant 3.200000e+01 : f32
    %26 = vector.broadcast %cst_11 : f32 to vector<32x1xf32>
    %27 = arith.divf %25, %26 : vector<32x1xf32>
    %28 = vector.broadcast %27 : vector<32x1xf32> to vector<32x32xf32>
    %29 = arith.subf %23, %28 : vector<32x32xf32>
    %30 = arith.mulf %29, %29 : vector<32x32xf32>
    %cst_12 = arith.constant dense<0.000000e+00> : vector<32xf32>
    %31 = vector.multi_reduction <add>, %30, %cst_12 [1] : vector<32x32xf32> to vector<32xf32>
    %32 = vector.shape_cast %31 : vector<32xf32> to vector<32x1xf32>
    %cst_13 = arith.constant 3.200000e+01 : f32
    %33 = vector.broadcast %cst_13 : f32 to vector<32x1xf32>
    %34 = arith.divf %32, %33 : vector<32x1xf32>
    %35 = vector.broadcast %27 : vector<32x1xf32> to vector<32x32xf32>
    %36 = arith.subf %23, %35 : vector<32x32xf32>
    %cst_14 = arith.constant 9.99999974E-6 : f32
    %37 = vector.broadcast %cst_14 : f32 to vector<32x1xf32>
    %38 = arith.addf %34, %37 : vector<32x1xf32>
    %39 = math.rsqrt %38 : vector<32x1xf32>
    %40 = vector.broadcast %39 : vector<32x1xf32> to vector<32x32xf32>
    %41 = arith.mulf %36, %40 : vector<32x32xf32>
    %c0_15 = arith.constant 0 : index
    %c0_16 = arith.constant 0 : index
    %42 = vector.load %arg3[%c0_15, %c0_16] : memref<1x32xf32, #tpu.memory_space<vmem>>, vector<1x32xf32>
    %43 = vector.broadcast %42 : vector<1x32xf32> to vector<32x32xf32>
    %44 = arith.mulf %41, %43 : vector<32x32xf32>
    %c0_17 = arith.constant 0 : index
    %c0_18 = arith.constant 0 : index
    %45 = vector.load %arg4[%c0_17, %c0_18] : memref<1x32xf32, #tpu.memory_space<vmem>>, vector<1x32xf32>
    %46 = vector.broadcast %45 : vector<1x32xf32> to vector<32x32xf32>
    %47 = arith.addf %44, %46 : vector<32x32xf32>
    %c0_19 = arith.constant 0 : index
    %c0_20 = arith.constant 0 : index
    %48 = vector.load %arg7[%c0_19, %c0_20] : memref<32x1xf32, #tpu.memory_space<vmem>>, vector<32x1xf32>
    %c0_21 = arith.constant 0 : index
    %c0_22 = arith.constant 0 : index
    %49 = vector.load %arg6[%c0_21, %c0_22] : memref<32x32xf32, #tpu.memory_space<vmem>>, vector<32x32xf32>
    %50 = arith.addf %47, %49 : vector<32x32xf32>
    %51 = vector.broadcast %48 : vector<32x1xf32> to vector<32x32xf32>
    %52 = arith.mulf %51, %50 : vector<32x32xf32>
    %c0_23 = arith.constant 0 : index
    %c0_24 = arith.constant 0 : index
    %53 = vector.load %arg5[%c0_23, %c0_24] : memref<32x32xf32, #tpu.memory_space<vmem>>, vector<32x32xf32>
    %54 = arith.addf %52, %53 : vector<32x32xf32>
    %c0_25 = arith.constant 0 : index
    %c0_26 = arith.constant 0 : index
    %55 = vector.load %arg8[%c0_25, %c0_26] : memref<32x32xf32, #tpu.memory_space<vmem>>, vector<32x32xf32>
    %cst_27 = arith.constant dense<0.000000e+00> : vector<32xf32>
    %56 = vector.multi_reduction <add>, %54, %cst_27 [1] : vector<32x32xf32> to vector<32xf32>
    %57 = vector.shape_cast %56 : vector<32xf32> to vector<32x1xf32>
    %cst_28 = arith.constant 3.200000e+01 : f32
    %58 = vector.broadcast %cst_28 : f32 to vector<32x1xf32>
    %59 = arith.divf %57, %58 : vector<32x1xf32>
    %60 = vector.broadcast %59 : vector<32x1xf32> to vector<32x32xf32>
    %61 = arith.subf %54, %60 : vector<32x32xf32>
    %62 = arith.mulf %61, %61 : vector<32x32xf32>
    %cst_29 = arith.constant dense<0.000000e+00> : vector<32xf32>
    %63 = vector.multi_reduction <add>, %62, %cst_29 [1] : vector<32x32xf32> to vector<32xf32>
    %64 = vector.shape_cast %63 : vector<32xf32> to vector<32x1xf32>
    %cst_30 = arith.constant 3.200000e+01 : f32
    %65 = vector.broadcast %cst_30 : f32 to vector<32x1xf32>
    %66 = arith.divf %64, %65 : vector<32x1xf32>
    %67 = vector.broadcast %59 : vector<32x1xf32> to vector<32x32xf32>
    %68 = arith.subf %54, %67 : vector<32x32xf32>
    %cst_31 = arith.constant 9.99999974E-6 : f32
    %69 = vector.broadcast %cst_31 : f32 to vector<32x1xf32>
    %70 = arith.addf %66, %69 : vector<32x1xf32>
    %71 = math.rsqrt %70 : vector<32x1xf32>
    %72 = vector.broadcast %71 : vector<32x1xf32> to vector<32x32xf32>
    %73 = arith.mulf %68, %72 : vector<32x32xf32>
    %c0_32 = arith.constant 0 : index
    %c0_33 = arith.constant 0 : index
    %c0_34 = arith.constant 0 : index
    %74 = vector.load %arg9[%c0_32, %c0_33, %c0_34] : memref<2x32x64xf32, #tpu.memory_space<vmem>>, vector<1x32x64xf32>
    %75 = vector.shape_cast %74 : vector<1x32x64xf32> to vector<32x64xf32>
    %cst_35 = arith.constant dense<0.000000e+00> : vector<32x64xf32>
    %76 = tpu.matmul %73, %75, %cst_35 {dimension_numbers = #tpu.dot_dimension_numbers<[1], [0], [0], [1], [0, 0, 1, 1], [], []>} : vector<32x32xf32>, vector<32x64xf32>, vector<32x64xf32> -> vector<32x64xf32>
    %c0_36 = arith.constant 0 : index
    %c0_37 = arith.constant 0 : index
    %c0_38 = arith.constant 0 : index
    %77 = vector.load %arg12[%c0_36, %c0_37, %c0_38] : memref<2x1x64xf32, #tpu.memory_space<vmem>>, vector<1x1x64xf32>
    %78 = vector.shape_cast %77 : vector<1x1x64xf32> to vector<1x64xf32>
    %79 = vector.broadcast %78 : vector<1x64xf32> to vector<32x64xf32>
    %80 = arith.addf %76, %79 : vector<32x64xf32>
    %c0_39 = arith.constant 0 : index
    %c0_40 = arith.constant 0 : index
    %c0_41 = arith.constant 0 : index
    %81 = vector.load %arg10[%c0_39, %c0_40, %c0_41] : memref<2x32x64xf32, #tpu.memory_space<vmem>>, vector<1x32x64xf32>
    %82 = vector.shape_cast %81 : vector<1x32x64xf32> to vector<32x64xf32>
    %cst_42 = arith.constant dense<0.000000e+00> : vector<32x64xf32>
    %83 = tpu.matmul %73, %82, %cst_42 {dimension_numbers = #tpu.dot_dimension_numbers<[1], [0], [0], [1], [0, 0, 1, 1], [], []>} : vector<32x32xf32>, vector<32x64xf32>, vector<32x64xf32> -> vector<32x64xf32>
    %c0_43 = arith.constant 0 : index
    %c0_44 = arith.constant 0 : index
    %c0_45 = arith.constant 0 : index
    %84 = vector.load %arg13[%c0_43, %c0_44, %c0_45] : memref<2x1x64xf32, #tpu.memory_space<vmem>>, vector<1x1x64xf32>
    %85 = vector.shape_cast %84 : vector<1x1x64xf32> to vector<1x64xf32>
    %86 = vector.broadcast %85 : vector<1x64xf32> to vector<32x64xf32>
    %87 = arith.addf %83, %86 : vector<32x64xf32>
    %c0_46 = arith.constant 0 : index
    %c0_47 = arith.constant 0 : index
    %c0_48 = arith.constant 0 : index
    %88 = vector.load %arg11[%c0_46, %c0_47, %c0_48] : memref<2x32x64xf32, #tpu.memory_space<vmem>>, vector<1x32x64xf32>
    %89 = vector.shape_cast %88 : vector<1x32x64xf32> to vector<32x64xf32>
    %cst_49 = arith.constant dense<0.000000e+00> : vector<32x64xf32>
    %90 = tpu.matmul %73, %89, %cst_49 {dimension_numbers = #tpu.dot_dimension_numbers<[1], [0], [0], [1], [0, 0, 1, 1], [], []>} : vector<32x32xf32>, vector<32x64xf32>, vector<32x64xf32> -> vector<32x64xf32>
    %c0_50 = arith.constant 0 : index
    %c0_51 = arith.constant 0 : index
    %c0_52 = arith.constant 0 : index
    %91 = vector.load %arg14[%c0_50, %c0_51, %c0_52] : memref<2x1x64xf32, #tpu.memory_space<vmem>>, vector<1x1x64xf32>
    %92 = vector.shape_cast %91 : vector<1x1x64xf32> to vector<1x64xf32>
    %93 = vector.broadcast %92 : vector<1x64xf32> to vector<32x64xf32>
    %94 = arith.addf %90, %93 : vector<32x64xf32>
    %95 = vector.extract_strided_slice %80 {offsets = [0, 0], sizes = [32, 16], strides = [1, 1]} : vector<32x64xf32> to vector<32x16xf32>
    %96 = vector.extract_strided_slice %80 {offsets = [0, 16], sizes = [32, 16], strides = [1, 1]} : vector<32x64xf32> to vector<32x16xf32>
    %97 = vector.extract_strided_slice %80 {offsets = [0, 32], sizes = [32, 16], strides = [1, 1]} : vector<32x64xf32> to vector<32x16xf32>
    %98 = vector.extract_strided_slice %80 {offsets = [0, 48], sizes = [32, 16], strides = [1, 1]} : vector<32x64xf32> to vector<32x16xf32>
    %99 = vector.shape_cast %95 : vector<32x16xf32> to vector<1x32x16xf32>
    %100 = vector.shape_cast %96 : vector<32x16xf32> to vector<1x32x16xf32>
    %101 = vector.shape_cast %97 : vector<32x16xf32> to vector<1x32x16xf32>
    %102 = vector.shape_cast %98 : vector<32x16xf32> to vector<1x32x16xf32>
    %103 = tpu.concatenate %99, %100, %101, %102 in 0 : vector<1x32x16xf32>, vector<1x32x16xf32>, vector<1x32x16xf32>, vector<1x32x16xf32> -> vector<4x32x16xf32>
    %104 = vector.extract_strided_slice %87 {offsets = [0, 0], sizes = [32, 16], strides = [1, 1]} : vector<32x64xf32> to vector<32x16xf32>
    %105 = vector.extract_strided_slice %87 {offsets = [0, 16], sizes = [32, 16], strides = [1, 1]} : vector<32x64xf32> to vector<32x16xf32>
    %106 = vector.extract_strided_slice %87 {offsets = [0, 32], sizes = [32, 16], strides = [1, 1]} : vector<32x64xf32> to vector<32x16xf32>
    %107 = vector.extract_strided_slice %87 {offsets = [0, 48], sizes = [32, 16], strides = [1, 1]} : vector<32x64xf32> to vector<32x16xf32>
    %108 = vector.shape_cast %104 : vector<32x16xf32> to vector<1x32x16xf32>
    %109 = vector.shape_cast %105 : vector<32x16xf32> to vector<1x32x16xf32>
    %110 = vector.shape_cast %106 : vector<32x16xf32> to vector<1x32x16xf32>
    %111 = vector.shape_cast %107 : vector<32x16xf32> to vector<1x32x16xf32>
    %112 = tpu.concatenate %108, %109, %110, %111 in 0 : vector<1x32x16xf32>, vector<1x32x16xf32>, vector<1x32x16xf32>, vector<1x32x16xf32> -> vector<4x32x16xf32>
    %113 = vector.extract_strided_slice %94 {offsets = [0, 0], sizes = [32, 16], strides = [1, 1]} : vector<32x64xf32> to vector<32x16xf32>
    %114 = vector.extract_strided_slice %94 {offsets = [0, 16], sizes = [32, 16], strides = [1, 1]} : vector<32x64xf32> to vector<32x16xf32>
    %115 = vector.extract_strided_slice %94 {offsets = [0, 32], sizes = [32, 16], strides = [1, 1]} : vector<32x64xf32> to vector<32x16xf32>
    %116 = vector.extract_strided_slice %94 {offsets = [0, 48], sizes = [32, 16], strides = [1, 1]} : vector<32x64xf32> to vector<32x16xf32>
    %117 = vector.shape_cast %113 : vector<32x16xf32> to vector<1x32x16xf32>
    %118 = vector.shape_cast %114 : vector<32x16xf32> to vector<1x32x16xf32>
    %119 = vector.shape_cast %115 : vector<32x16xf32> to vector<1x32x16xf32>
    %120 = vector.shape_cast %116 : vector<32x16xf32> to vector<1x32x16xf32>
    %121 = tpu.concatenate %117, %118, %119, %120 in 0 : vector<1x32x16xf32>, vector<1x32x16xf32>, vector<1x32x16xf32>, vector<1x32x16xf32> -> vector<4x32x16xf32>
    "tpu.trace_start"() <{level = 10 : i32, message = "hnd,hmd->hnm"}> : () -> ()
    %cst_53 = arith.constant dense<0.000000e+00> : vector<4x32x32xf32>
    %122 = tpu.matmul %103, %112, %cst_53 {dimension_numbers = #tpu.dot_dimension_numbers<[2], [2], [1], [1], [0, 0, 0, 1, 1, 1], [0], [0]>} : vector<4x32x16xf32>, vector<4x32x16xf32>, vector<4x32x32xf32> -> vector<4x32x32xf32>
    "tpu.trace_stop"() : () -> ()
    %cst_54 = arith.constant 2.500000e-01 : f32
    %123 = vector.broadcast %cst_54 : f32 to vector<4x32x32xf32>
    %124 = arith.mulf %122, %123 : vector<4x32x32xf32>
    %125 = vector.shape_cast %55 : vector<32x32xf32> to vector<1x32x32xf32>
    %126 = vector.broadcast %125 : vector<1x32x32xf32> to vector<4x32x32xf32>
    %127 = arith.addf %124, %126 : vector<4x32x32xf32>
    %cst_55 = arith.constant dense<0xFF800000> : vector<4x32xf32>
    %128 = vector.multi_reduction <maximumf>, %127, %cst_55 [2] : vector<4x32x32xf32> to vector<4x32xf32>
    %129 = vector.shape_cast %128 : vector<4x32xf32> to vector<4x32x1xf32>
    %130 = vector.broadcast %129 : vector<4x32x1xf32> to vector<4x32x32xf32>
    %131 = arith.subf %127, %130 : vector<4x32x32xf32>
    %132 = math.exp %131 : vector<4x32x32xf32>
    %cst_56 = arith.constant dense<0.000000e+00> : vector<4x32xf32>
    %133 = vector.multi_reduction <add>, %132, %cst_56 [2] : vector<4x32x32xf32> to vector<4x32xf32>
    %134 = vector.shape_cast %133 : vector<4x32xf32> to vector<4x32x1xf32>
    %135 = tpu.reciprocal %134 {approx = true} : vector<4x32x1xf32> -> vector<4x32x1xf32>
    %136 = vector.broadcast %135 : vector<4x32x1xf32> to vector<4x32x32xf32>
    %137 = arith.mulf %132, %136 : vector<4x32x32xf32>
    "tpu.trace_start"() <{level = 10 : i32, message = "hnm,hmd->hnd"}> : () -> ()
    %cst_57 = arith.constant dense<0.000000e+00> : vector<4x32x16xf32>
    %138 = tpu.matmul %137, %121, %cst_57 {dimension_numbers = #tpu.dot_dimension_numbers<[2], [1], [1], [2], [0, 0, 0, 1, 1, 2], [0], [0]>} : vector<4x32x32xf32>, vector<4x32x16xf32>, vector<4x32x16xf32> -> vector<4x32x16xf32>
    "tpu.trace_stop"() : () -> ()
    %139 = vector.extract_strided_slice %138 {offsets = [0, 0, 0], sizes = [1, 32, 16], strides = [1, 1, 1]} : vector<4x32x16xf32> to vector<1x32x16xf32>
    %140 = vector.shape_cast %139 : vector<1x32x16xf32> to vector<32x16xf32>
    %141 = vector.extract_strided_slice %138 {offsets = [1, 0, 0], sizes = [1, 32, 16], strides = [1, 1, 1]} : vector<4x32x16xf32> to vector<1x32x16xf32>
    %142 = vector.shape_cast %141 : vector<1x32x16xf32> to vector<32x16xf32>
    %143 = vector.extract_strided_slice %138 {offsets = [2, 0, 0], sizes = [1, 32, 16], strides = [1, 1, 1]} : vector<4x32x16xf32> to vector<1x32x16xf32>
    %144 = vector.shape_cast %143 : vector<1x32x16xf32> to vector<32x16xf32>
    %145 = vector.extract_strided_slice %138 {offsets = [3, 0, 0], sizes = [1, 32, 16], strides = [1, 1, 1]} : vector<4x32x16xf32> to vector<1x32x16xf32>
    %146 = vector.shape_cast %145 : vector<1x32x16xf32> to vector<32x16xf32>
    %147 = tpu.concatenate %140, %142, %144, %146 in 1 : vector<32x16xf32>, vector<32x16xf32>, vector<32x16xf32>, vector<32x16xf32> -> vector<32x64xf32>
    %c0_58 = arith.constant 0 : index
    %c0_59 = arith.constant 0 : index
    %c0_60 = arith.constant 0 : index
    %148 = vector.load %arg15[%c0_58, %c0_59, %c0_60] : memref<2x64x32xf32, #tpu.memory_space<vmem>>, vector<1x64x32xf32>
    %149 = vector.shape_cast %148 : vector<1x64x32xf32> to vector<64x32xf32>
    %cst_61 = arith.constant dense<0.000000e+00> : vector<32x32xf32>
    %150 = tpu.matmul %147, %149, %cst_61 {dimension_numbers = #tpu.dot_dimension_numbers<[1], [0], [0], [1], [0, 0, 1, 1], [], []>} : vector<32x64xf32>, vector<64x32xf32>, vector<32x32xf32> -> vector<32x32xf32>
    %151 = arith.addf %54, %150 : vector<32x32xf32>
    %c0_62 = arith.constant 0 : index
    %c0_63 = arith.constant 0 : index
    %c0_64 = arith.constant 0 : index
    %152 = vector.load %arg16[%c0_62, %c0_63, %c0_64] : memref<2x1x32xf32, #tpu.memory_space<vmem>>, vector<1x1x32xf32>
    %153 = vector.shape_cast %152 : vector<1x1x32xf32> to vector<1x32xf32>
    %154 = vector.broadcast %153 : vector<1x32xf32> to vector<32x32xf32>
    %155 = arith.addf %151, %154 : vector<32x32xf32>
    %cst_65 = arith.constant dense<0.000000e+00> : vector<32xf32>
    %156 = vector.multi_reduction <add>, %155, %cst_65 [1] : vector<32x32xf32> to vector<32xf32>
    %157 = vector.shape_cast %156 : vector<32xf32> to vector<32x1xf32>
    %cst_66 = arith.constant 3.200000e+01 : f32
    %158 = vector.broadcast %cst_66 : f32 to vector<32x1xf32>
    %159 = arith.divf %157, %158 : vector<32x1xf32>
    %160 = vector.broadcast %159 : vector<32x1xf32> to vector<32x32xf32>
    %161 = arith.subf %155, %160 : vector<32x32xf32>
    %162 = arith.mulf %161, %161 : vector<32x32xf32>
    %cst_67 = arith.constant dense<0.000000e+00> : vector<32xf32>
    %163 = vector.multi_reduction <add>, %162, %cst_67 [1] : vector<32x32xf32> to vector<32xf32>
    %164 = vector.shape_cast %163 : vector<32xf32> to vector<32x1xf32>
    %cst_68 = arith.constant 3.200000e+01 : f32
    %165 = vector.broadcast %cst_68 : f32 to vector<32x1xf32>
    %166 = arith.divf %164, %165 : vector<32x1xf32>
    %167 = vector.broadcast %159 : vector<32x1xf32> to vector<32x32xf32>
    %168 = arith.subf %155, %167 : vector<32x32xf32>
    %cst_69 = arith.constant 9.99999974E-6 : f32
    %169 = vector.broadcast %cst_69 : f32 to vector<32x1xf32>
    %170 = arith.addf %166, %169 : vector<32x1xf32>
    %171 = math.rsqrt %170 : vector<32x1xf32>
    %172 = vector.broadcast %171 : vector<32x1xf32> to vector<32x32xf32>
    %173 = arith.mulf %168, %172 : vector<32x32xf32>
    %c0_70 = arith.constant 0 : index
    %c0_71 = arith.constant 0 : index
    %c0_72 = arith.constant 0 : index
    %174 = vector.load %arg17[%c0_70, %c0_71, %c0_72] : memref<2x32x64xf32, #tpu.memory_space<vmem>>, vector<1x32x64xf32>
    %175 = vector.shape_cast %174 : vector<1x32x64xf32> to vector<32x64xf32>
    %cst_73 = arith.constant dense<0.000000e+00> : vector<32x64xf32>
    %176 = tpu.matmul %173, %175, %cst_73 {dimension_numbers = #tpu.dot_dimension_numbers<[1], [0], [0], [1], [0, 0, 1, 1], [], []>} : vector<32x32xf32>, vector<32x64xf32>, vector<32x64xf32> -> vector<32x64xf32>
    %c0_74 = arith.constant 0 : index
    %c0_75 = arith.constant 0 : index
    %c0_76 = arith.constant 0 : index
    %177 = vector.load %arg18[%c0_74, %c0_75, %c0_76] : memref<2x1x64xf32, #tpu.memory_space<vmem>>, vector<1x1x64xf32>
    %178 = vector.shape_cast %177 : vector<1x1x64xf32> to vector<1x64xf32>
    %179 = vector.broadcast %178 : vector<1x64xf32> to vector<32x64xf32>
    %180 = arith.addf %176, %179 : vector<32x64xf32>
    %cst_77 = arith.constant 5.000000e-01 : f32
    %181 = vector.broadcast %cst_77 : f32 to vector<32x64xf32>
    %182 = arith.mulf %181, %180 : vector<32x64xf32>
    %cst_78 = arith.constant 4.471500e-02 : f32
    %183 = vector.broadcast %cst_78 : f32 to vector<32x64xf32>
    %184 = arith.mulf %183, %180 : vector<32x64xf32>
    %185 = arith.mulf %184, %180 : vector<32x64xf32>
    %186 = arith.mulf %185, %180 : vector<32x64xf32>
    %187 = arith.addf %180, %186 : vector<32x64xf32>
    %cst_79 = arith.constant 0.797884583 : f32
    %188 = vector.broadcast %cst_79 : f32 to vector<32x64xf32>
    %189 = arith.mulf %188, %187 : vector<32x64xf32>
    %190 = math.tanh %189 : vector<32x64xf32>
    %cst_80 = arith.constant 1.000000e+00 : f32
    %191 = vector.broadcast %cst_80 : f32 to vector<32x64xf32>
    %192 = arith.addf %191, %190 : vector<32x64xf32>
    %193 = arith.mulf %182, %192 : vector<32x64xf32>
    %c0_81 = arith.constant 0 : index
    %c0_82 = arith.constant 0 : index
    %c0_83 = arith.constant 0 : index
    %194 = vector.load %arg19[%c0_81, %c0_82, %c0_83] : memref<2x64x32xf32, #tpu.memory_space<vmem>>, vector<1x64x32xf32>
    %195 = vector.shape_cast %194 : vector<1x64x32xf32> to vector<64x32xf32>
    %cst_84 = arith.constant dense<0.000000e+00> : vector<32x32xf32>
    %196 = tpu.matmul %193, %195, %cst_84 {dimension_numbers = #tpu.dot_dimension_numbers<[1], [0], [0], [1], [0, 0, 1, 1], [], []>} : vector<32x64xf32>, vector<64x32xf32>, vector<32x32xf32> -> vector<32x32xf32>
    %197 = arith.addf %155, %196 : vector<32x32xf32>
    %c0_85 = arith.constant 0 : index
    %c0_86 = arith.constant 0 : index
    %c0_87 = arith.constant 0 : index
    %198 = vector.load %arg20[%c0_85, %c0_86, %c0_87] : memref<2x1x32xf32, #tpu.memory_space<vmem>>, vector<1x1x32xf32>
    %199 = vector.shape_cast %198 : vector<1x1x32xf32> to vector<1x32xf32>
    %200 = vector.broadcast %199 : vector<1x32xf32> to vector<32x32xf32>
    %201 = arith.addf %197, %200 : vector<32x32xf32>
    %cst_88 = arith.constant dense<0.000000e+00> : vector<32xf32>
    %202 = vector.multi_reduction <add>, %201, %cst_88 [1] : vector<32x32xf32> to vector<32xf32>
    %203 = vector.shape_cast %202 : vector<32xf32> to vector<32x1xf32>
    %cst_89 = arith.constant 3.200000e+01 : f32
    %204 = vector.broadcast %cst_89 : f32 to vector<32x1xf32>
    %205 = arith.divf %203, %204 : vector<32x1xf32>
    %206 = vector.broadcast %205 : vector<32x1xf32> to vector<32x32xf32>
    %207 = arith.subf %201, %206 : vector<32x32xf32>
    %208 = arith.mulf %207, %207 : vector<32x32xf32>
    %cst_90 = arith.constant dense<0.000000e+00> : vector<32xf32>
    %209 = vector.multi_reduction <add>, %208, %cst_90 [1] : vector<32x32xf32> to vector<32xf32>
    %210 = vector.shape_cast %209 : vector<32xf32> to vector<32x1xf32>
    %cst_91 = arith.constant 3.200000e+01 : f32
    %211 = vector.broadcast %cst_91 : f32 to vector<32x1xf32>
    %212 = arith.divf %210, %211 : vector<32x1xf32>
    %213 = vector.broadcast %205 : vector<32x1xf32> to vector<32x32xf32>
    %214 = arith.subf %201, %213 : vector<32x32xf32>
    %cst_92 = arith.constant 9.99999974E-6 : f32
    %215 = vector.broadcast %cst_92 : f32 to vector<32x1xf32>
    %216 = arith.addf %212, %215 : vector<32x1xf32>
    %217 = math.rsqrt %216 : vector<32x1xf32>
    %218 = vector.broadcast %217 : vector<32x1xf32> to vector<32x32xf32>
    %219 = arith.mulf %214, %218 : vector<32x32xf32>
    %c1 = arith.constant 1 : index
    %c0_93 = arith.constant 0 : index
    %c0_94 = arith.constant 0 : index
    %220 = vector.load %arg9[%c1, %c0_93, %c0_94] : memref<2x32x64xf32, #tpu.memory_space<vmem>>, vector<1x32x64xf32>
    %221 = vector.shape_cast %220 : vector<1x32x64xf32> to vector<32x64xf32>
    %cst_95 = arith.constant dense<0.000000e+00> : vector<32x64xf32>
    %222 = tpu.matmul %219, %221, %cst_95 {dimension_numbers = #tpu.dot_dimension_numbers<[1], [0], [0], [1], [0, 0, 1, 1], [], []>} : vector<32x32xf32>, vector<32x64xf32>, vector<32x64xf32> -> vector<32x64xf32>
    %c1_96 = arith.constant 1 : index
    %c0_97 = arith.constant 0 : index
    %c0_98 = arith.constant 0 : index
    %223 = vector.load %arg12[%c1_96, %c0_97, %c0_98] : memref<2x1x64xf32, #tpu.memory_space<vmem>>, vector<1x1x64xf32>
    %224 = vector.shape_cast %223 : vector<1x1x64xf32> to vector<1x64xf32>
    %225 = vector.broadcast %224 : vector<1x64xf32> to vector<32x64xf32>
    %226 = arith.addf %222, %225 : vector<32x64xf32>
    %c1_99 = arith.constant 1 : index
    %c0_100 = arith.constant 0 : index
    %c0_101 = arith.constant 0 : index
    %227 = vector.load %arg10[%c1_99, %c0_100, %c0_101] : memref<2x32x64xf32, #tpu.memory_space<vmem>>, vector<1x32x64xf32>
    %228 = vector.shape_cast %227 : vector<1x32x64xf32> to vector<32x64xf32>
    %cst_102 = arith.constant dense<0.000000e+00> : vector<32x64xf32>
    %229 = tpu.matmul %219, %228, %cst_102 {dimension_numbers = #tpu.dot_dimension_numbers<[1], [0], [0], [1], [0, 0, 1, 1], [], []>} : vector<32x32xf32>, vector<32x64xf32>, vector<32x64xf32> -> vector<32x64xf32>
    %c1_103 = arith.constant 1 : index
    %c0_104 = arith.constant 0 : index
    %c0_105 = arith.constant 0 : index
    %230 = vector.load %arg13[%c1_103, %c0_104, %c0_105] : memref<2x1x64xf32, #tpu.memory_space<vmem>>, vector<1x1x64xf32>
    %231 = vector.shape_cast %230 : vector<1x1x64xf32> to vector<1x64xf32>
    %232 = vector.broadcast %231 : vector<1x64xf32> to vector<32x64xf32>
    %233 = arith.addf %229, %232 : vector<32x64xf32>
    %c1_106 = arith.constant 1 : index
    %c0_107 = arith.constant 0 : index
    %c0_108 = arith.constant 0 : index
    %234 = vector.load %arg11[%c1_106, %c0_107, %c0_108] : memref<2x32x64xf32, #tpu.memory_space<vmem>>, vector<1x32x64xf32>
    %235 = vector.shape_cast %234 : vector<1x32x64xf32> to vector<32x64xf32>
    %cst_109 = arith.constant dense<0.000000e+00> : vector<32x64xf32>
    %236 = tpu.matmul %219, %235, %cst_109 {dimension_numbers = #tpu.dot_dimension_numbers<[1], [0], [0], [1], [0, 0, 1, 1], [], []>} : vector<32x32xf32>, vector<32x64xf32>, vector<32x64xf32> -> vector<32x64xf32>
    %c1_110 = arith.constant 1 : index
    %c0_111 = arith.constant 0 : index
    %c0_112 = arith.constant 0 : index
    %237 = vector.load %arg14[%c1_110, %c0_111, %c0_112] : memref<2x1x64xf32, #tpu.memory_space<vmem>>, vector<1x1x64xf32>
    %238 = vector.shape_cast %237 : vector<1x1x64xf32> to vector<1x64xf32>
    %239 = vector.broadcast %238 : vector<1x64xf32> to vector<32x64xf32>
    %240 = arith.addf %236, %239 : vector<32x64xf32>
    %241 = vector.extract_strided_slice %226 {offsets = [0, 0], sizes = [32, 16], strides = [1, 1]} : vector<32x64xf32> to vector<32x16xf32>
    %242 = vector.extract_strided_slice %226 {offsets = [0, 16], sizes = [32, 16], strides = [1, 1]} : vector<32x64xf32> to vector<32x16xf32>
    %243 = vector.extract_strided_slice %226 {offsets = [0, 32], sizes = [32, 16], strides = [1, 1]} : vector<32x64xf32> to vector<32x16xf32>
    %244 = vector.extract_strided_slice %226 {offsets = [0, 48], sizes = [32, 16], strides = [1, 1]} : vector<32x64xf32> to vector<32x16xf32>
    %245 = vector.shape_cast %241 : vector<32x16xf32> to vector<1x32x16xf32>
    %246 = vector.shape_cast %242 : vector<32x16xf32> to vector<1x32x16xf32>
    %247 = vector.shape_cast %243 : vector<32x16xf32> to vector<1x32x16xf32>
    %248 = vector.shape_cast %244 : vector<32x16xf32> to vector<1x32x16xf32>
    %249 = tpu.concatenate %245, %246, %247, %248 in 0 : vector<1x32x16xf32>, vector<1x32x16xf32>, vector<1x32x16xf32>, vector<1x32x16xf32> -> vector<4x32x16xf32>
    %250 = vector.extract_strided_slice %233 {offsets = [0, 0], sizes = [32, 16], strides = [1, 1]} : vector<32x64xf32> to vector<32x16xf32>
    %251 = vector.extract_strided_slice %233 {offsets = [0, 16], sizes = [32, 16], strides = [1, 1]} : vector<32x64xf32> to vector<32x16xf32>
    %252 = vector.extract_strided_slice %233 {offsets = [0, 32], sizes = [32, 16], strides = [1, 1]} : vector<32x64xf32> to vector<32x16xf32>
    %253 = vector.extract_strided_slice %233 {offsets = [0, 48], sizes = [32, 16], strides = [1, 1]} : vector<32x64xf32> to vector<32x16xf32>
    %254 = vector.shape_cast %250 : vector<32x16xf32> to vector<1x32x16xf32>
    %255 = vector.shape_cast %251 : vector<32x16xf32> to vector<1x32x16xf32>
    %256 = vector.shape_cast %252 : vector<32x16xf32> to vector<1x32x16xf32>
    %257 = vector.shape_cast %253 : vector<32x16xf32> to vector<1x32x16xf32>
    %258 = tpu.concatenate %254, %255, %256, %257 in 0 : vector<1x32x16xf32>, vector<1x32x16xf32>, vector<1x32x16xf32>, vector<1x32x16xf32> -> vector<4x32x16xf32>
    %259 = vector.extract_strided_slice %240 {offsets = [0, 0], sizes = [32, 16], strides = [1, 1]} : vector<32x64xf32> to vector<32x16xf32>
    %260 = vector.extract_strided_slice %240 {offsets = [0, 16], sizes = [32, 16], strides = [1, 1]} : vector<32x64xf32> to vector<32x16xf32>
    %261 = vector.extract_strided_slice %240 {offsets = [0, 32], sizes = [32, 16], strides = [1, 1]} : vector<32x64xf32> to vector<32x16xf32>
    %262 = vector.extract_strided_slice %240 {offsets = [0, 48], sizes = [32, 16], strides = [1, 1]} : vector<32x64xf32> to vector<32x16xf32>
    %263 = vector.shape_cast %259 : vector<32x16xf32> to vector<1x32x16xf32>
    %264 = vector.shape_cast %260 : vector<32x16xf32> to vector<1x32x16xf32>
    %265 = vector.shape_cast %261 : vector<32x16xf32> to vector<1x32x16xf32>
    %266 = vector.shape_cast %262 : vector<32x16xf32> to vector<1x32x16xf32>
    %267 = tpu.concatenate %263, %264, %265, %266 in 0 : vector<1x32x16xf32>, vector<1x32x16xf32>, vector<1x32x16xf32>, vector<1x32x16xf32> -> vector<4x32x16xf32>
    "tpu.trace_start"() <{level = 10 : i32, message = "hnd,hmd->hnm"}> : () -> ()
    %cst_113 = arith.constant dense<0.000000e+00> : vector<4x32x32xf32>
    %268 = tpu.matmul %249, %258, %cst_113 {dimension_numbers = #tpu.dot_dimension_numbers<[2], [2], [1], [1], [0, 0, 0, 1, 1, 1], [0], [0]>} : vector<4x32x16xf32>, vector<4x32x16xf32>, vector<4x32x32xf32> -> vector<4x32x32xf32>
    "tpu.trace_stop"() : () -> ()
    %cst_114 = arith.constant 2.500000e-01 : f32
    %269 = vector.broadcast %cst_114 : f32 to vector<4x32x32xf32>
    %270 = arith.mulf %268, %269 : vector<4x32x32xf32>
    %271 = vector.shape_cast %55 : vector<32x32xf32> to vector<1x32x32xf32>
    %272 = vector.broadcast %271 : vector<1x32x32xf32> to vector<4x32x32xf32>
    %273 = arith.addf %270, %272 : vector<4x32x32xf32>
    %cst_115 = arith.constant dense<0xFF800000> : vector<4x32xf32>
    %274 = vector.multi_reduction <maximumf>, %273, %cst_115 [2] : vector<4x32x32xf32> to vector<4x32xf32>
    %275 = vector.shape_cast %274 : vector<4x32xf32> to vector<4x32x1xf32>
    %276 = vector.broadcast %275 : vector<4x32x1xf32> to vector<4x32x32xf32>
    %277 = arith.subf %273, %276 : vector<4x32x32xf32>
    %278 = math.exp %277 : vector<4x32x32xf32>
    %cst_116 = arith.constant dense<0.000000e+00> : vector<4x32xf32>
    %279 = vector.multi_reduction <add>, %278, %cst_116 [2] : vector<4x32x32xf32> to vector<4x32xf32>
    %280 = vector.shape_cast %279 : vector<4x32xf32> to vector<4x32x1xf32>
    %281 = tpu.reciprocal %280 {approx = true} : vector<4x32x1xf32> -> vector<4x32x1xf32>
    %282 = vector.broadcast %281 : vector<4x32x1xf32> to vector<4x32x32xf32>
    %283 = arith.mulf %278, %282 : vector<4x32x32xf32>
    "tpu.trace_start"() <{level = 10 : i32, message = "hnm,hmd->hnd"}> : () -> ()
    %cst_117 = arith.constant dense<0.000000e+00> : vector<4x32x16xf32>
    %284 = tpu.matmul %283, %267, %cst_117 {dimension_numbers = #tpu.dot_dimension_numbers<[2], [1], [1], [2], [0, 0, 0, 1, 1, 2], [0], [0]>} : vector<4x32x32xf32>, vector<4x32x16xf32>, vector<4x32x16xf32> -> vector<4x32x16xf32>
    "tpu.trace_stop"() : () -> ()
    %285 = vector.extract_strided_slice %284 {offsets = [0, 0, 0], sizes = [1, 32, 16], strides = [1, 1, 1]} : vector<4x32x16xf32> to vector<1x32x16xf32>
    %286 = vector.shape_cast %285 : vector<1x32x16xf32> to vector<32x16xf32>
    %287 = vector.extract_strided_slice %284 {offsets = [1, 0, 0], sizes = [1, 32, 16], strides = [1, 1, 1]} : vector<4x32x16xf32> to vector<1x32x16xf32>
    %288 = vector.shape_cast %287 : vector<1x32x16xf32> to vector<32x16xf32>
    %289 = vector.extract_strided_slice %284 {offsets = [2, 0, 0], sizes = [1, 32, 16], strides = [1, 1, 1]} : vector<4x32x16xf32> to vector<1x32x16xf32>
    %290 = vector.shape_cast %289 : vector<1x32x16xf32> to vector<32x16xf32>
    %291 = vector.extract_strided_slice %284 {offsets = [3, 0, 0], sizes = [1, 32, 16], strides = [1, 1, 1]} : vector<4x32x16xf32> to vector<1x32x16xf32>
    %292 = vector.shape_cast %291 : vector<1x32x16xf32> to vector<32x16xf32>
    %293 = tpu.concatenate %286, %288, %290, %292 in 1 : vector<32x16xf32>, vector<32x16xf32>, vector<32x16xf32>, vector<32x16xf32> -> vector<32x64xf32>
    %c1_118 = arith.constant 1 : index
    %c0_119 = arith.constant 0 : index
    %c0_120 = arith.constant 0 : index
    %294 = vector.load %arg15[%c1_118, %c0_119, %c0_120] : memref<2x64x32xf32, #tpu.memory_space<vmem>>, vector<1x64x32xf32>
    %295 = vector.shape_cast %294 : vector<1x64x32xf32> to vector<64x32xf32>
    %cst_121 = arith.constant dense<0.000000e+00> : vector<32x32xf32>
    %296 = tpu.matmul %293, %295, %cst_121 {dimension_numbers = #tpu.dot_dimension_numbers<[1], [0], [0], [1], [0, 0, 1, 1], [], []>} : vector<32x64xf32>, vector<64x32xf32>, vector<32x32xf32> -> vector<32x32xf32>
    %297 = arith.addf %201, %296 : vector<32x32xf32>
    %c1_122 = arith.constant 1 : index
    %c0_123 = arith.constant 0 : index
    %c0_124 = arith.constant 0 : index
    %298 = vector.load %arg16[%c1_122, %c0_123, %c0_124] : memref<2x1x32xf32, #tpu.memory_space<vmem>>, vector<1x1x32xf32>
    %299 = vector.shape_cast %298 : vector<1x1x32xf32> to vector<1x32xf32>
    %300 = vector.broadcast %299 : vector<1x32xf32> to vector<32x32xf32>
    %301 = arith.addf %297, %300 : vector<32x32xf32>
    %cst_125 = arith.constant dense<0.000000e+00> : vector<32xf32>
    %302 = vector.multi_reduction <add>, %301, %cst_125 [1] : vector<32x32xf32> to vector<32xf32>
    %303 = vector.shape_cast %302 : vector<32xf32> to vector<32x1xf32>
    %cst_126 = arith.constant 3.200000e+01 : f32
    %304 = vector.broadcast %cst_126 : f32 to vector<32x1xf32>
    %305 = arith.divf %303, %304 : vector<32x1xf32>
    %306 = vector.broadcast %305 : vector<32x1xf32> to vector<32x32xf32>
    %307 = arith.subf %301, %306 : vector<32x32xf32>
    %308 = arith.mulf %307, %307 : vector<32x32xf32>
    %cst_127 = arith.constant dense<0.000000e+00> : vector<32xf32>
    %309 = vector.multi_reduction <add>, %308, %cst_127 [1] : vector<32x32xf32> to vector<32xf32>
    %310 = vector.shape_cast %309 : vector<32xf32> to vector<32x1xf32>
    %cst_128 = arith.constant 3.200000e+01 : f32
    %311 = vector.broadcast %cst_128 : f32 to vector<32x1xf32>
    %312 = arith.divf %310, %311 : vector<32x1xf32>
    %313 = vector.broadcast %305 : vector<32x1xf32> to vector<32x32xf32>
    %314 = arith.subf %301, %313 : vector<32x32xf32>
    %cst_129 = arith.constant 9.99999974E-6 : f32
    %315 = vector.broadcast %cst_129 : f32 to vector<32x1xf32>
    %316 = arith.addf %312, %315 : vector<32x1xf32>
    %317 = math.rsqrt %316 : vector<32x1xf32>
    %318 = vector.broadcast %317 : vector<32x1xf32> to vector<32x32xf32>
    %319 = arith.mulf %314, %318 : vector<32x32xf32>
    %c1_130 = arith.constant 1 : index
    %c0_131 = arith.constant 0 : index
    %c0_132 = arith.constant 0 : index
    %320 = vector.load %arg17[%c1_130, %c0_131, %c0_132] : memref<2x32x64xf32, #tpu.memory_space<vmem>>, vector<1x32x64xf32>
    %321 = vector.shape_cast %320 : vector<1x32x64xf32> to vector<32x64xf32>
    %cst_133 = arith.constant dense<0.000000e+00> : vector<32x64xf32>
    %322 = tpu.matmul %319, %321, %cst_133 {dimension_numbers = #tpu.dot_dimension_numbers<[1], [0], [0], [1], [0, 0, 1, 1], [], []>} : vector<32x32xf32>, vector<32x64xf32>, vector<32x64xf32> -> vector<32x64xf32>
    %c1_134 = arith.constant 1 : index
    %c0_135 = arith.constant 0 : index
    %c0_136 = arith.constant 0 : index
    %323 = vector.load %arg18[%c1_134, %c0_135, %c0_136] : memref<2x1x64xf32, #tpu.memory_space<vmem>>, vector<1x1x64xf32>
    %324 = vector.shape_cast %323 : vector<1x1x64xf32> to vector<1x64xf32>
    %325 = vector.broadcast %324 : vector<1x64xf32> to vector<32x64xf32>
    %326 = arith.addf %322, %325 : vector<32x64xf32>
    %cst_137 = arith.constant 5.000000e-01 : f32
    %327 = vector.broadcast %cst_137 : f32 to vector<32x64xf32>
    %328 = arith.mulf %327, %326 : vector<32x64xf32>
    %cst_138 = arith.constant 4.471500e-02 : f32
    %329 = vector.broadcast %cst_138 : f32 to vector<32x64xf32>
    %330 = arith.mulf %329, %326 : vector<32x64xf32>
    %331 = arith.mulf %330, %326 : vector<32x64xf32>
    %332 = arith.mulf %331, %326 : vector<32x64xf32>
    %333 = arith.addf %326, %332 : vector<32x64xf32>
    %cst_139 = arith.constant 0.797884583 : f32
    %334 = vector.broadcast %cst_139 : f32 to vector<32x64xf32>
    %335 = arith.mulf %334, %333 : vector<32x64xf32>
    %336 = math.tanh %335 : vector<32x64xf32>
    %cst_140 = arith.constant 1.000000e+00 : f32
    %337 = vector.broadcast %cst_140 : f32 to vector<32x64xf32>
    %338 = arith.addf %337, %336 : vector<32x64xf32>
    %339 = arith.mulf %328, %338 : vector<32x64xf32>
    %c1_141 = arith.constant 1 : index
    %c0_142 = arith.constant 0 : index
    %c0_143 = arith.constant 0 : index
    %340 = vector.load %arg19[%c1_141, %c0_142, %c0_143] : memref<2x64x32xf32, #tpu.memory_space<vmem>>, vector<1x64x32xf32>
    %341 = vector.shape_cast %340 : vector<1x64x32xf32> to vector<64x32xf32>
    %cst_144 = arith.constant dense<0.000000e+00> : vector<32x32xf32>
    %342 = tpu.matmul %339, %341, %cst_144 {dimension_numbers = #tpu.dot_dimension_numbers<[1], [0], [0], [1], [0, 0, 1, 1], [], []>} : vector<32x64xf32>, vector<64x32xf32>, vector<32x32xf32> -> vector<32x32xf32>
    %343 = arith.addf %301, %342 : vector<32x32xf32>
    %c1_145 = arith.constant 1 : index
    %c0_146 = arith.constant 0 : index
    %c0_147 = arith.constant 0 : index
    %344 = vector.load %arg20[%c1_145, %c0_146, %c0_147] : memref<2x1x32xf32, #tpu.memory_space<vmem>>, vector<1x1x32xf32>
    %345 = vector.shape_cast %344 : vector<1x1x32xf32> to vector<1x32xf32>
    %346 = vector.broadcast %345 : vector<1x32xf32> to vector<32x32xf32>
    %347 = arith.addf %343, %346 : vector<32x32xf32>
    %348 = vector.extract_strided_slice %347 {offsets = [0, 0], sizes = [1, 32], strides = [1, 1]} : vector<32x32xf32> to vector<1x32xf32>
    %349 = vector.extract_strided_slice %347 {offsets = [16, 0], sizes = [1, 32], strides = [1, 1]} : vector<32x32xf32> to vector<1x32xf32>
    %350 = tpu.concatenate %348, %349 in 0 : vector<1x32xf32>, vector<1x32xf32> -> vector<2x32xf32>
    %cst_148 = arith.constant dense<0.000000e+00> : vector<2xf32>
    %351 = vector.multi_reduction <add>, %350, %cst_148 [1] : vector<2x32xf32> to vector<2xf32>
    %352 = vector.shape_cast %351 : vector<2xf32> to vector<2x1xf32>
    %cst_149 = arith.constant 3.200000e+01 : f32
    %353 = vector.broadcast %cst_149 : f32 to vector<2x1xf32>
    %354 = arith.divf %352, %353 : vector<2x1xf32>
    %355 = vector.broadcast %354 : vector<2x1xf32> to vector<2x32xf32>
    %356 = arith.subf %350, %355 : vector<2x32xf32>
    %357 = arith.mulf %356, %356 : vector<2x32xf32>
    %cst_150 = arith.constant dense<0.000000e+00> : vector<2xf32>
    %358 = vector.multi_reduction <add>, %357, %cst_150 [1] : vector<2x32xf32> to vector<2xf32>
    %359 = vector.shape_cast %358 : vector<2xf32> to vector<2x1xf32>
    %cst_151 = arith.constant 3.200000e+01 : f32
    %360 = vector.broadcast %cst_151 : f32 to vector<2x1xf32>
    %361 = arith.divf %359, %360 : vector<2x1xf32>
    %362 = vector.broadcast %354 : vector<2x1xf32> to vector<2x32xf32>
    %363 = arith.subf %350, %362 : vector<2x32xf32>
    %cst_152 = arith.constant 9.99999974E-6 : f32
    %364 = vector.broadcast %cst_152 : f32 to vector<2x1xf32>
    %365 = arith.addf %361, %364 : vector<2x1xf32>
    %366 = math.rsqrt %365 : vector<2x1xf32>
    %367 = vector.broadcast %366 : vector<2x1xf32> to vector<2x32xf32>
    %368 = arith.mulf %363, %367 : vector<2x32xf32>
    %c0_153 = arith.constant 0 : index
    %c0_154 = arith.constant 0 : index
    %369 = vector.load %arg21[%c0_153, %c0_154] : memref<32x2xf32, #tpu.memory_space<vmem>>, vector<32x2xf32>
    %cst_155 = arith.constant dense<0.000000e+00> : vector<2x2xf32>
    %370 = tpu.matmul %368, %369, %cst_155 {dimension_numbers = #tpu.dot_dimension_numbers<[1], [0], [0], [1], [0, 0, 1, 1], [], []>} : vector<2x32xf32>, vector<32x2xf32>, vector<2x2xf32> -> vector<2x2xf32>
    %c0_156 = arith.constant 0 : index
    %c0_157 = arith.constant 0 : index
    %371 = vector.load %arg22[%c0_156, %c0_157] : memref<1x2xf32, #tpu.memory_space<vmem>>, vector<1x2xf32>
    %372 = vector.broadcast %371 : vector<1x2xf32> to vector<2x2xf32>
    %373 = arith.addf %370, %372 : vector<2x2xf32>
    %c0_158 = arith.constant 0 : index
    %c0_159 = arith.constant 0 : index
    %374 = vector.load %arg23[%c0_158, %c0_159] : memref<2x2xf32, #tpu.memory_space<vmem>>, vector<2x2xf32>
    tpu.vector_store %arg23[%c0_158, %c0_159], %373 {strides = array<i32>} : memref<2x2xf32, #tpu.memory_space<vmem>>, vector<2x2xf32>,
    return
  }
}

</mosaic_0001>

<llo_original>
// kernel: tpu_custom_call.1
$region0: #{tpu_custom_call.1}
  #allocation0 [shape = 'u32[]', space=smem, size = 0x4, offset = 0x4, fixed_abs, tag = 'smem constant byte address 0x4 - core index']
  #allocation1 [shape = 'u32[144,128]{1,0:T(1,128)}', space=vmem, size = 0x12000, scoped, tag = 'internal scratch']
  %s0 = inlined_call_operand.vmem [shape: f32[32,192], index: 0, kind: input, shape index: {}]
  %s1 = inlined_call_operand.vmem [shape: f32[192,32], index: 1, kind: input, shape index: {}]
  %s2 = inlined_call_operand.vmem [shape: f32[1,32], index: 2, kind: input, shape index: {}]
  %s3 = inlined_call_operand.vmem [shape: f32[1,32], index: 3, kind: input, shape index: {}]
  %s4 = inlined_call_operand.vmem [shape: f32[1,32], index: 4, kind: input, shape index: {}]
  %s5 = inlined_call_operand.vmem [shape: f32[32,32], index: 5, kind: input, shape index: {}]
  %s6 = inlined_call_operand.vmem [shape: f32[32,32], index: 6, kind: input, shape index: {}]
  %s7 = inlined_call_operand.vmem [shape: f32[32,1], index: 7, kind: input, shape index: {}]
  %s8 = inlined_call_operand.vmem [shape: f32[32,32], index: 8, kind: input, shape index: {}]
  %s9 = inlined_call_operand.vmem [shape: f32[2,32,64], index: 9, kind: input, shape index: {}]
  %s10 = inlined_call_operand.vmem [shape: f32[2,32,64], index: 10, kind: input, shape index: {}]
  %s11 = inlined_call_operand.vmem [shape: f32[2,32,64], index: 11, kind: input, shape index: {}]
  %s12 = inlined_call_operand.vmem [shape: f32[2,1,64], index: 12, kind: input, shape index: {}]
  %s13 = inlined_call_operand.vmem [shape: f32[2,1,64], index: 13, kind: input, shape index: {}]
  %s14 = inlined_call_operand.vmem [shape: f32[2,1,64], index: 14, kind: input, shape index: {}]
  %s15 = inlined_call_operand.vmem [shape: f32[2,64,32], index: 15, kind: input, shape index: {}]
  %s16 = inlined_call_operand.vmem [shape: f32[2,1,32], index: 16, kind: input, shape index: {}]
  %s17 = inlined_call_operand.vmem [shape: f32[2,32,64], index: 17, kind: input, shape index: {}]
  %s18 = inlined_call_operand.vmem [shape: f32[2,1,64], index: 18, kind: input, shape index: {}]
  %s19 = inlined_call_operand.vmem [shape: f32[2,64,32], index: 19, kind: input, shape index: {}]
  %s20 = inlined_call_operand.vmem [shape: f32[2,1,32], index: 20, kind: input, shape index: {}]
  %s21 = inlined_call_operand.vmem [shape: f32[32,2], index: 21, kind: input, shape index: {}]
  %s22 = inlined_call_operand.vmem [shape: f32[1,2], index: 22, kind: input, shape index: {}]
  %s23 = inlined_call_operand.hbm [shape: f32[2,2], index: 23, kind: output, shape index: {}]
  %s24 = sld [smem:[#allocation0]]
  $region102: #{tpu_custom_call.1} parent=0
    _
  %s26 = ssub.s32 1, %s24
  %s27 = scalar_select 0, %s26, %s24
  $region1: #{tpu_custom_call.1} parent=0
    #allocation2 [shape = 'u8[1024]{0}', space=vmem, size = 0x400, scoped, tag = 'output window, operand 0, single buffered']
    #allocation3 [shape = 's32[1]{0}', space=sflag, size = 0x4, scoped, tag = 'scoped memory for tpu_custom_call.1']
    %28 = vsyncpa [#allocation3], 0
    // Predicated region
    $region2: #{tpu_custom_call.1} parent=1 // pred_check
      _
    $region3: #{tpu_custom_call.1} parent=1 // pred_check_branch
      %30 = sbr.rel (0) target = $region5
    $region4: #{tpu_custom_call.1} parent=1 // pred_region
      _
    $region5: #{tpu_custom_call.1} parent=1 // pred_fallthru
      _
    // Predicated region
    $region6: #{tpu_custom_call.1} parent=1 // pred_check
      _
    $region7: #{tpu_custom_call.1} parent=1 // pred_check_branch
      %32 = sbr.rel (0) target = $region9
    $region8: #{tpu_custom_call.1} parent=1 // pred_region
      _
    $region9: #{tpu_custom_call.1} parent=1 // pred_fallthru
      _
    // Predicated region
    $region10: #{tpu_custom_call.1} parent=1 // pred_check
      _
    $region11: #{tpu_custom_call.1} parent=1 // pred_check_branch
      %34 = sbr.rel (0) target = $region13
    $region12: #{tpu_custom_call.1} parent=1 // pred_region
      _
    $region13: #{tpu_custom_call.1} parent=1 // pred_fallthru
      _
    // Predicated region
    $region14: #{tpu_custom_call.1} parent=1 // pred_check
      _
    $region15: #{tpu_custom_call.1} parent=1 // pred_check_branch
      %36 = sbr.rel (0) target = $region17
    $region16: #{tpu_custom_call.1} parent=1 // pred_region
      _
    $region17: #{tpu_custom_call.1} parent=1 // pred_fallthru
      _
    // Predicated region
    $region18: #{tpu_custom_call.1} parent=1 // pred_check
      _
    $region19: #{tpu_custom_call.1} parent=1 // pred_check_branch
      %38 = sbr.rel (0) target = $region21
    $region20: #{tpu_custom_call.1} parent=1 // pred_region
      _
    $region21: #{tpu_custom_call.1} parent=1 // pred_fallthru
      _
    // Predicated region
    $region22: #{tpu_custom_call.1} parent=1 // pred_check
      _
    $region23: #{tpu_custom_call.1} parent=1 // pred_check_branch
      %40 = sbr.rel (0) target = $region25
    $region24: #{tpu_custom_call.1} parent=1 // pred_region
      _
    $region25: #{tpu_custom_call.1} parent=1 // pred_fallthru
      _
    // Predicated region
    $region26: #{tpu_custom_call.1} parent=1 // pred_check
      _
    $region27: #{tpu_custom_call.1} parent=1 // pred_check_branch
      %42 = sbr.rel (0) target = $region29
    $region28: #{tpu_custom_call.1} parent=1 // pred_region
      _
    $region29: #{tpu_custom_call.1} parent=1 // pred_fallthru
      _
    // Predicated region
    $region30: #{tpu_custom_call.1} parent=1 // pred_check
      _
    $region31: #{tpu_custom_call.1} parent=1 // pred_check_branch
      %44 = sbr.rel (0) target = $region33
    $region32: #{tpu_custom_call.1} parent=1 // pred_region
      _
    $region33: #{tpu_custom_call.1} parent=1 // pred_fallthru
      _
    // Predicated region
    $region34: #{tpu_custom_call.1} parent=1 // pred_check
      _
    $region35: #{tpu_custom_call.1} parent=1 // pred_check_branch
      %46 = sbr.rel (0) target = $region37
    $region36: #{tpu_custom_call.1} parent=1 // pred_region
      _
    $region37: #{tpu_custom_call.1} parent=1 // pred_fallthru
      _
    // Predicated region
    $region38: #{tpu_custom_call.1} parent=1 // pred_check
      _
    $region39: #{tpu_custom_call.1} parent=1 // pred_check_branch
      %48 = sbr.rel (0) target = $region41
    $region40: #{tpu_custom_call.1} parent=1 // pred_region
      _
    $region41: #{tpu_custom_call.1} parent=1 // pred_fallthru
      _
    // Predicated region
    $region42: #{tpu_custom_call.1} parent=1 // pred_check
      _
    $region43: #{tpu_custom_call.1} parent=1 // pred_check_branch
      %50 = sbr.rel (0) target = $region45
    $region44: #{tpu_custom_call.1} parent=1 // pred_region
      _
    $region45: #{tpu_custom_call.1} parent=1 // pred_fallthru
      _
    // Predicated region
    $region46: #{tpu_custom_call.1} parent=1 // pred_check
      _
    $region47: #{tpu_custom_call.1} parent=1 // pred_check_branch
      %52 = sbr.rel (0) target = $region49
    $region48: #{tpu_custom_call.1} parent=1 // pred_region
      _
    $region49: #{tpu_custom_call.1} parent=1 // pred_fallthru
      _
    // Predicated region
    $region50: #{tpu_custom_call.1} parent=1 // pred_check
      _
    $region51: #{tpu_custom_call.1} parent=1 // pred_check_branch
      %54 = sbr.rel (0) target = $region53
    $region52: #{tpu_custom_call.1} parent=1 // pred_region
      _
    $region53: #{tpu_custom_call.1} parent=1 // pred_fallthru
      _
    // Predicated region
    $region54: #{tpu_custom_call.1} parent=1 // pred_check
      _
    $region55: #{tpu_custom_call.1} parent=1 // pred_check_branch
      %56 = sbr.rel (0) target = $region57
    $region56: #{tpu_custom_call.1} parent=1 // pred_region
      _
    $region57: #{tpu_custom_call.1} parent=1 // pred_fallthru
      _
    // Predicated region
    $region58: #{tpu_custom_call.1} parent=1 // pred_check
      _
    $region59: #{tpu_custom_call.1} parent=1 // pred_check_branch
      %58 = sbr.rel (0) target = $region61
    $region60: #{tpu_custom_call.1} parent=1 // pred_region
      _
    $region61: #{tpu_custom_call.1} parent=1 // pred_fallthru
      _
    // Predicated region
    $region62: #{tpu_custom_call.1} parent=1 // pred_check
      _
    $region63: #{tpu_custom_call.1} parent=1 // pred_check_branch
      %60 = sbr.rel (0) target = $region65
    $region64: #{tpu_custom_call.1} parent=1 // pred_region
      _
    $region65: #{tpu_custom_call.1} parent=1 // pred_fallthru
      _
    // Predicated region
    $region66: #{tpu_custom_call.1} parent=1 // pred_check
      _
    $region67: #{tpu_custom_call.1} parent=1 // pred_check_branch
      %62 = sbr.rel (0) target = $region69
    $region68: #{tpu_custom_call.1} parent=1 // pred_region
      _
    $region69: #{tpu_custom_call.1} parent=1 // pred_fallthru
      _
    // Predicated region
    $region70: #{tpu_custom_call.1} parent=1 // pred_check
      _
    $region71: #{tpu_custom_call.1} parent=1 // pred_check_branch
      %64 = sbr.rel (0) target = $region73
    $region72: #{tpu_custom_call.1} parent=1 // pred_region
      _
    $region73: #{tpu_custom_call.1} parent=1 // pred_fallthru
      _
    // Predicated region
    $region74: #{tpu_custom_call.1} parent=1 // pred_check
      _
    $region75: #{tpu_custom_call.1} parent=1 // pred_check_branch
      %66 = sbr.rel (0) target = $region77
    $region76: #{tpu_custom_call.1} parent=1 // pred_region
      _
    $region77: #{tpu_custom_call.1} parent=1 // pred_fallthru
      _
    // Predicated region
    $region78: #{tpu_custom_call.1} parent=1 // pred_check
      _
    $region79: #{tpu_custom_call.1} parent=1 // pred_check_branch
      %68 = sbr.rel (0) target = $region81
    $region80: #{tpu_custom_call.1} parent=1 // pred_region
      _
    $region81: #{tpu_custom_call.1} parent=1 // pred_fallthru
      _
    // Predicated region
    $region82: #{tpu_custom_call.1} parent=1 // pred_check
      _
    $region83: #{tpu_custom_call.1} parent=1 // pred_check_branch
      %70 = sbr.rel (0) target = $region85
    $region84: #{tpu_custom_call.1} parent=1 // pred_region
      _
    $region85: #{tpu_custom_call.1} parent=1 // pred_fallthru
      _
    // Predicated region
    $region86: #{tpu_custom_call.1} parent=1 // pred_check
      _
    $region87: #{tpu_custom_call.1} parent=1 // pred_check_branch
      %72 = sbr.rel (0) target = $region89
    $region88: #{tpu_custom_call.1} parent=1 // pred_region
      _
    $region89: #{tpu_custom_call.1} parent=1 // pred_fallthru
      _
    // Predicated region
    $region90: #{tpu_custom_call.1} parent=1 // pred_check
      _
    $region91: #{tpu_custom_call.1} parent=1 // pred_check_branch
      %74 = sbr.rel (0) target = $region93
    $region92: #{tpu_custom_call.1} parent=1 // pred_region
      _
    $region93: #{tpu_custom_call.1} parent=1 // pred_fallthru
      _
    %v75 = vld [vmem:[%s0] sm:$0xff]
    %v76 = vld [vmem:[%s0 + $0x8] sm:$0xff]
    %v77 = vld [vmem:[%s0 + $0x10] sm:$0xff]
    %v78 = vld [vmem:[%s0 + $0x18] sm:$0xff]
    %v79 = vld [vmem:[%s0 + $0x20] sm:$0xff]
    %v80 = vld [vmem:[%s0 + $0x28] sm:$0xff]
    %v81 = vld [vmem:[%s0 + $0x30] sm:$0xff]
    %v82 = vld [vmem:[%s0 + $0x38] sm:$0xff]
    %vm83 = vcmask 523264
    %v84 = vsel %vm83, %v76, 0.0
    %v85 = vadd.f32 %v75, %v84
    %86 = vadd.xlane.f32.xlu0 %v85
    %v87 = vpop.xlane.xlu0 %86
    %v88 = vsel %vm83, %v78, 0.0
    %v89 = vadd.f32 %v77, %v88
    %90 = vadd.xlane.f32.xlu0 %v89
    %v91 = vpop.xlane.xlu0 %90
    %v92 = vsel %vm83, %v80, 0.0
    %v93 = vadd.f32 %v79, %v92
    %94 = vadd.xlane.f32.xlu0 %v93
    %v95 = vpop.xlane.xlu0 %94
    %v96 = vsel %vm83, %v82, 0.0
    %v97 = vadd.f32 %v81, %v96
    %98 = vadd.xlane.f32.xlu0 %v97
    %v99 = vpop.xlane.xlu0 %98
    %v100 = vrcp.pop 192.0
    %v101 = vmul.f32 %v87, %v100
    %v102 = vmul.f32 %v91, %v100
    %v103 = vmul.f32 %v95, %v100
    %v104 = vmul.f32 %v99, %v100
    %v105 = vsub.f32 %v75, %v101
    %v106 = vsub.f32 %v76, %v101
    %v107 = vsub.f32 %v77, %v102
    %v108 = vsub.f32 %v78, %v102
    %v109 = vsub.f32 %v79, %v103
    %v110 = vsub.f32 %v80, %v103
    %v111 = vsub.f32 %v81, %v104
    %v112 = vsub.f32 %v82, %v104
    %v113 = vmul.f32 %v105, %v105
    %v114 = vmul.f32 %v106, %v106
    %v115 = vmul.f32 %v107, %v107
    %v116 = vmul.f32 %v108, %v108
    %v117 = vmul.f32 %v109, %v109
    %v118 = vmul.f32 %v110, %v110
    %v119 = vmul.f32 %v111, %v111
    %v120 = vmul.f32 %v112, %v112
    %v121 = vsel %vm83, %v114, 0.0
    %v122 = vadd.f32 %v113, %v121
    %123 = vadd.xlane.f32.xlu0 %v122
    %v124 = vpop.xlane.xlu0 %123
    %v125 = vsel %vm83, %v116, 0.0
    %v126 = vadd.f32 %v115, %v125
    %127 = vadd.xlane.f32.xlu0 %v126
    %v128 = vpop.xlane.xlu0 %127
    %v129 = vsel %vm83, %v118, 0.0
    %v130 = vadd.f32 %v117, %v129
    %131 = vadd.xlane.f32.xlu0 %v130
    %v132 = vpop.xlane.xlu0 %131
    %v133 = vsel %vm83, %v120, 0.0
    %v134 = vadd.f32 %v119, %v133
    %135 = vadd.xlane.f32.xlu0 %v134
    %v136 = vpop.xlane.xlu0 %135
    %v137 = vmul.f32 %v124, %v100
    %v138 = vmul.f32 %v128, %v100
    %v139 = vmul.f32 %v132, %v100
    %v140 = vmul.f32 %v136, %v100
    %v141 = vadd.f32 %v137, 1e-05
    %v142 = vadd.f32 %v138, 1e-05
    %v143 = vadd.f32 %v139, 1e-05
    %v144 = vadd.f32 %v140, 1e-05
    %v145 = vrsqrt.pop %v141
    %v146 = vrsqrt.pop %v142
    %v147 = vrsqrt.pop %v143
    %v148 = vrsqrt.pop %v144
    %v149 = vmul.f32 %v105, %v145
    %v150 = vmul.f32 %v106, %v145
    %v151 = vmul.f32 %v107, %v146
    %v152 = vmul.f32 %v108, %v146
    %v153 = vmul.f32 %v109, %v147
    %v154 = vmul.f32 %v110, %v147
    %v155 = vmul.f32 %v111, %v148
    %v156 = vmul.f32 %v112, %v148
    %v157 = vld [vmem:[%s1] sm:$0xff]
    %v158 = vld [vmem:[%s1 + $0x8] sm:$0xff]
    %v159 = vld [vmem:[%s1 + $0x10] sm:$0xff]
    %v160 = vld [vmem:[%s1 + $0x18] sm:$0xff]
    %v161 = vld [vmem:[%s1 + $0x20] sm:$0xff]
    %v162 = vld [vmem:[%s1 + $0x28] sm:$0xff]
    %v163 = vld [vmem:[%s1 + $0x30] sm:$0xff]
    %v164 = vld [vmem:[%s1 + $0x38] sm:$0xff]
    %v165 = vld [vmem:[%s1 + $0x40] sm:$0xff]
    %v166 = vld [vmem:[%s1 + $0x48] sm:$0xff]
    %v167 = vld [vmem:[%s1 + $0x50] sm:$0xff]
    %v168 = vld [vmem:[%s1 + $0x58] sm:$0xff]
    %v169 = vld [vmem:[%s1 + $0x60] sm:$0xff]
    %v170 = vld [vmem:[%s1 + $0x68] sm:$0xff]
    %v171 = vld [vmem:[%s1 + $0x70] sm:$0xff]
    %v172 = vld [vmem:[%s1 + $0x78] sm:$0xff]
    %v173 = vld [vmem:[%s1 + $0x80] sm:$0xff]
    %v174 = vld [vmem:[%s1 + $0x88] sm:$0xff]
    %v175 = vld [vmem:[%s1 + $0x90] sm:$0xff]
    %v176 = vld [vmem:[%s1 + $0x98] sm:$0xff]
    %v177 = vld [vmem:[%s1 + $0xa0] sm:$0xff]
    %v178 = vld [vmem:[%s1 + $0xa8] sm:$0xff]
    %v179 = vld [vmem:[%s1 + $0xb0] sm:$0xff]
    %v180 = vld [vmem:[%s1 + $0xb8] sm:$0xff]
    %v181 = vld [vmem:[%s2] sm:$0x1]
    %v183 = vlaneseq
    %v184 = vshrl.u32 %v183, 7
    %v185 = vsub.s32 0, %v184
    %v186 = vrot.slane %v181, %v185
    %v189 = vsel %vm83, %v150, 0
    %v192 = vsel %vm83, %v152, 0
    %v195 = vsel %vm83, %v154, 0
    %v198 = vsel %vm83, %v156, 0
    %200 = vmatprep.subr.mxu0 0.0
    %201 = vmatpush1.msra.mxu0 %v157
    %202 = vmatprep.subr.mxu0 0.0
    %203 = vmatpush1.msra.mxu0 %v158
    %204 = vmatprep.subr.mxu0 0.0
    %205 = vmatpush1.msra.mxu0 %v159
    %206 = vmatprep.subr.mxu0 0.0
    %207 = vmatpush1.msra.mxu0 %v160
    %208 = vmatprep.subr.mxu0 0.0
    %209 = vmatpush1.msra.mxu0 %v161
    %210 = vmatprep.subr.mxu0 0.0
    %211 = vmatpush1.msra.mxu0 %v162
    %212 = vmatprep.subr.mxu0 0.0
    %213 = vmatpush1.msra.mxu0 %v163
    %214 = vmatprep.subr.mxu0 0.0
    %215 = vmatpush1.msra.mxu0 %v164
    %216 = vmatprep.subr.mxu0 0.0
    %217 = vmatpush1.msra.mxu0 %v165
    %218 = vmatprep.subr.mxu0 0.0
    %219 = vmatpush1.msra.mxu0 %v166
    %220 = vmatprep.subr.mxu0 0.0
    %221 = vmatpush1.msra.mxu0 %v167
    %222 = vmatprep.subr.mxu0 0.0
    %223 = vmatpush1.msra.mxu0 %v168
    %224 = vmatprep.subr.mxu0 0.0
    %225 = vmatpush1.msra.mxu0 %v169
    %226 = vmatprep.subr.mxu0 0.0
    %227 = vmatpush1.msra.mxu0 %v170
    %228 = vmatprep.subr.mxu0 0.0
    %229 = vmatpush1.msra.mxu0 %v171
    %230 = vmatprep.subr.mxu0 0.0
    %231 = vmatpush1.msra.mxu0 %v172
    %232 = vmatprep.subr.mxu0 0.0
    %233 = vmatpush1.msra.mxu0 %v173
    %234 = vmatprep.subr.mxu0 0.0
    %235 = vmatpush1.msra.mxu0 %v174
    %236 = vmatprep.subr.mxu0 0.0
    %237 = vmatpush1.msra.mxu0 %v175
    %238 = vmatprep.subr.mxu0 0.0
    %239 = vmatpush1.msra.mxu0 %v176
    %240 = vmatprep.subr.mxu0 0.0
    %241 = vmatpush1.msra.mxu0 %v177
    %242 = vmatprep.subr.mxu0 0.0
    %243 = vmatpush1.msra.mxu0 %v178
    %244 = vmatprep.subr.mxu0 0.0
    %245 = vmatpush1.msra.mxu0 %v179
    %246 = vmatprep.subr.mxu0 0.0
    %247 = vmatpush1.msra.mxu0 %v180
    %248 = vmatprep.subr.mxu0 0.0
    %249 = vmatpush1.msra.mxu0 0.0
    %250 = vmatprep.subr.mxu0 0.0
    %251 = vmatpush1.msra.mxu0 0.0
    %252 = vmatprep.subr.mxu0 0.0
    %253 = vmatpush1.msra.mxu0 0.0
    %254 = vmatprep.subr.mxu0 0.0
    %255 = vmatpush1.msra.mxu0 0.0
    %256 = vmatprep.subr.mxu0 0.0
    %257 = vmatpush1.msra.mxu0 0.0
    %258 = vmatprep.subr.mxu0 0.0
    %259 = vmatpush1.msra.mxu0 0.0
    %260 = vmatprep.subr.mxu0 0.0
    %261 = vmatpush1.msra.mxu0 0.0
    %262 = vmatprep.subr.mxu0 0.0
    %263 = vmatpush1.msra.mxu0 0.0
    %264 = vmatprep.mubr.f32.mxu0 %v189
    %265 = vmatmul.mubr.f32.gmra.mrb[0].mxu0 %v149
    %v266 = vpop.f32.mrb[0].mxu0
    %v267 = vadd.f32 %v186, %v266
    %v268 = vpop.f32.mrb[0].mxu0
    %269 = vmatprep.mubr.f32.mxu0 %v192
    %270 = vmatmul.mubr.f32.gmra.mrb[0].mxu0 %v151
    %v271 = vpop.f32.mrb[0].mxu0
    %v272 = vadd.f32 %v186, %v271
    %v273 = vpop.f32.mrb[0].mxu0
    %274 = vmatprep.mubr.f32.mxu0 %v195
    %275 = vmatmul.mubr.f32.gmra.mrb[0].mxu0 %v153
    %v276 = vpop.f32.mrb[0].mxu0
    %v277 = vadd.f32 %v186, %v276
    %v278 = vpop.f32.mrb[0].mxu0
    %279 = vmatprep.mubr.f32.mxu0 %v198
    %280 = vmatmul.mubr.f32.gmra.mrb[0].mxu0 %v155
    %v281 = vpop.f32.mrb[0].mxu0
    %v282 = vadd.f32 %v186, %v281
    %v283 = vpop.f32.mrb[0].mxu0
    %284 = vdwg.mxu0
    %vm285 = vcmask 261120
    %v286 = vsel %vm285, %v267, 0.0
    %287 = vadd.xlane.f32.xlu0 %v286
    %v288 = vpop.xlane.xlu0 %287
    %v289 = vsel %vm285, %v272, 0.0
    %290 = vadd.xlane.f32.xlu0 %v289
    %v291 = vpop.xlane.xlu0 %290
    %v292 = vsel %vm285, %v277, 0.0
    %293 = vadd.xlane.f32.xlu0 %v292
    %v294 = vpop.xlane.xlu0 %293
    %v295 = vsel %vm285, %v282, 0.0
    %296 = vadd.xlane.f32.xlu0 %v295
    %v297 = vpop.xlane.xlu0 %296
    %v298 = vrcp.pop 32.0
    %v299 = vmul.f32 %v288, %v298
    %v300 = vmul.f32 %v291, %v298
    %v301 = vmul.f32 %v294, %v298
    %v302 = vmul.f32 %v297, %v298
    %v303 = vsub.f32 %v267, %v299
    %v304 = vsub.f32 %v272, %v300
    %v305 = vsub.f32 %v277, %v301
    %v306 = vsub.f32 %v282, %v302
    %v307 = vmul.f32 %v303, %v303
    %v308 = vmul.f32 %v304, %v304
    %v309 = vmul.f32 %v305, %v305
    %v310 = vmul.f32 %v306, %v306
    %v311 = vsel %vm285, %v307, 0.0
    %312 = vadd.xlane.f32.xlu0 %v311
    %v313 = vpop.xlane.xlu0 %312
    %v314 = vsel %vm285, %v308, 0.0
    %315 = vadd.xlane.f32.xlu0 %v314
    %v316 = vpop.xlane.xlu0 %315
    %v317 = vsel %vm285, %v309, 0.0
    %318 = vadd.xlane.f32.xlu0 %v317
    %v319 = vpop.xlane.xlu0 %318
    %v320 = vsel %vm285, %v310, 0.0
    %321 = vadd.xlane.f32.xlu0 %v320
    %v322 = vpop.xlane.xlu0 %321
    %v323 = vmul.f32 %v313, %v298
    %v324 = vmul.f32 %v316, %v298
    %v325 = vmul.f32 %v319, %v298
    %v326 = vmul.f32 %v322, %v298
    %v327 = vadd.f32 %v323, 1e-05
    %v328 = vadd.f32 %v324, 1e-05
    %v329 = vadd.f32 %v325, 1e-05
    %v330 = vadd.f32 %v326, 1e-05
    %v331 = vrsqrt.pop %v327
    %v332 = vrsqrt.pop %v328
    %v333 = vrsqrt.pop %v329
    %v334 = vrsqrt.pop %v330
    %v335 = vmul.f32 %v303, %v331
    %v336 = vmul.f32 %v304, %v332
    %v337 = vmul.f32 %v305, %v333
    %v338 = vmul.f32 %v306, %v334
    %v339 = vld [vmem:[%s3] sm:$0x1]
    %v341 = vlaneseq
    %v342 = vshrl.u32 %v341, 7
    %v343 = vsub.s32 0, %v342
    %v344 = vrot.slane %v339, %v343
    %v346 = vmul.f32 %v335, %v344
    %v347 = vmul.f32 %v336, %v344
    %v348 = vmul.f32 %v337, %v344
    %v349 = vmul.f32 %v338, %v344
    %v350 = vld [vmem:[%s4] sm:$0x1]
    %v352 = vlaneseq
    %v353 = vshrl.u32 %v352, 7
    %v354 = vsub.s32 0, %v353
    %v355 = vrot.slane %v350, %v354
    %v357 = vadd.f32 %v346, %v355
    %v358 = vadd.f32 %v347, %v355
    %v359 = vadd.f32 %v348, %v355
    %v360 = vadd.f32 %v349, %v355
    %v361 = vld [vmem:[%s7] sm:$0xff]
    %v362 = vld [vmem:[%s7 + $0x8] sm:$0xff]
    %v363 = vld [vmem:[%s7 + $0x10] sm:$0xff]
    %v364 = vld [vmem:[%s7 + $0x18] sm:$0xff]
    %v365 = vld [vmem:[%s6] sm:$0xff]
    %v366 = vld [vmem:[%s6 + $0x8] sm:$0xff]
    %v367 = vld [vmem:[%s6 + $0x10] sm:$0xff]
    %v368 = vld [vmem:[%s6 + $0x18] sm:$0xff]
    %v369 = vadd.f32 %v357, %v365
    %v370 = vadd.f32 %v358, %v366
    %v371 = vadd.f32 %v359, %v367
    %v372 = vadd.f32 %v360, %v368
    %374 = vset.pattern.permute.xlu0 0
    %375 = vperm.xlu0 %374, %v361
    %v376 = vpop.permute.xlu0 %375
    %379 = vset.pattern.permute.xlu0 0
    %380 = vperm.xlu0 %379, %v362
    %v381 = vpop.permute.xlu0 %380
    %384 = vset.pattern.permute.xlu0 0
    %385 = vperm.xlu0 %384, %v363
    %v386 = vpop.permute.xlu0 %385
    %389 = vset.pattern.permute.xlu0 0
    %390 = vperm.xlu0 %389, %v364
    %v391 = vpop.permute.xlu0 %390
    %v393 = vmul.f32 %v376, %v369
    %v394 = vmul.f32 %v381, %v370
    %v395 = vmul.f32 %v386, %v371
    %v396 = vmul.f32 %v391, %v372
    %v397 = vld [vmem:[%s5] sm:$0xff]
    %v398 = vld [vmem:[%s5 + $0x8] sm:$0xff]
    %v399 = vld [vmem:[%s5 + $0x10] sm:$0xff]
    %v400 = vld [vmem:[%s5 + $0x18] sm:$0xff]
    %v401 = vadd.f32 %v393, %v397
    %v402 = vadd.f32 %v394, %v398
    %v403 = vadd.f32 %v395, %v399
    %v404 = vadd.f32 %v396, %v400
    %v405 = vld [vmem:[%s8] sm:$0xff]
    %v406 = vld [vmem:[%s8 + $0x8] sm:$0xff]
    %v407 = vld [vmem:[%s8 + $0x10] sm:$0xff]
    %v408 = vld [vmem:[%s8 + $0x18] sm:$0xff]
    %v409 = vsel %vm285, %v401, 0.0
    %410 = vadd.xlane.f32.xlu0 %v409
    %v411 = vpop.xlane.xlu0 %410
    %v412 = vsel %vm285, %v402, 0.0
    %413 = vadd.xlane.f32.xlu0 %v412
    %v414 = vpop.xlane.xlu0 %413
    %v415 = vsel %vm285, %v403, 0.0
    %416 = vadd.xlane.f32.xlu0 %v415
    %v417 = vpop.xlane.xlu0 %416
    %v418 = vsel %vm285, %v404, 0.0
    %419 = vadd.xlane.f32.xlu0 %v418
    %v420 = vpop.xlane.xlu0 %419
    %v421 = vmul.f32 %v411, %v298
    %v422 = vmul.f32 %v414, %v298
    %v423 = vmul.f32 %v417, %v298
    %v424 = vmul.f32 %v420, %v298
    %v425 = vsub.f32 %v401, %v421
    %v426 = vsub.f32 %v402, %v422
    %v427 = vsub.f32 %v403, %v423
    %v428 = vsub.f32 %v404, %v424
    %v429 = vmul.f32 %v425, %v425
    %v430 = vmul.f32 %v426, %v426
    %v431 = vmul.f32 %v427, %v427
    %v432 = vmul.f32 %v428, %v428
    %v433 = vsel %vm285, %v429, 0.0
    %434 = vadd.xlane.f32.xlu0 %v433
    %v435 = vpop.xlane.xlu0 %434
    %v436 = vsel %vm285, %v430, 0.0
    %437 = vadd.xlane.f32.xlu0 %v436
    %v438 = vpop.xlane.xlu0 %437
    %v439 = vsel %vm285, %v431, 0.0
    %440 = vadd.xlane.f32.xlu0 %v439
    %v441 = vpop.xlane.xlu0 %440
    %v442 = vsel %vm285, %v432, 0.0
    %443 = vadd.xlane.f32.xlu0 %v442
    %v444 = vpop.xlane.xlu0 %443
    %v445 = vmul.f32 %v435, %v298
    %v446 = vmul.f32 %v438, %v298
    %v447 = vmul.f32 %v441, %v298
    %v448 = vmul.f32 %v444, %v298
    %v449 = vadd.f32 %v445, 1e-05
    %v450 = vadd.f32 %v446, 1e-05
    %v451 = vadd.f32 %v447, 1e-05
    %v452 = vadd.f32 %v448, 1e-05
    %v453 = vrsqrt.pop %v449
    %v454 = vrsqrt.pop %v450
    %v455 = vrsqrt.pop %v451
    %v456 = vrsqrt.pop %v452
    %v457 = vmul.f32 %v425, %v453
    %v458 = vmul.f32 %v426, %v454
    %v459 = vmul.f32 %v427, %v455
    %v460 = vmul.f32 %v428, %v456
    %v461 = vld [vmem:[%s9] sm:$0xff]
    %v462 = vld [vmem:[%s9 + $0x8] sm:$0xff]
    %v463 = vld [vmem:[%s9 + $0x10] sm:$0xff]
    %v464 = vld [vmem:[%s9 + $0x18] sm:$0xff]
    %v465 = vld [vmem:[%s12] sm:$0x1]
    %v467 = vlaneseq
    %v468 = vshrl.u32 %v467, 7
    %v469 = vsub.s32 0, %v468
    %v470 = vrot.slane %v465, %v469
    %v473 = vsel %vm285, %v457, 0
    %v476 = vsel %vm285, %v458, 0
    %v479 = vsel %vm285, %v459, 0
    %v482 = vsel %vm285, %v460, 0
    %484 = vmatprep.subr.mxu0 0.0
    %485 = vmatpush1.msra.mxu0 %v461
    %486 = vmatprep.subr.mxu0 0.0
    %487 = vmatpush1.msra.mxu0 %v462
    %488 = vmatprep.subr.mxu0 0.0
    %489 = vmatpush1.msra.mxu0 %v463
    %490 = vmatprep.subr.mxu0 0.0
    %491 = vmatpush1.msra.mxu0 %v464
    %492 = vmatprep.subr.mxu0 0.0
    %493 = vmatpush1.msra.mxu0 0.0
    %494 = vmatprep.subr.mxu0 0.0
    %495 = vmatpush1.msra.mxu0 0.0
    %496 = vmatprep.subr.mxu0 0.0
    %497 = vmatpush1.msra.mxu0 0.0
    %498 = vmatprep.subr.mxu0 0.0
    %499 = vmatpush1.msra.mxu0 0.0
    %500 = vmatprep.subr.mxu0 0.0
    %501 = vmatpush1.msra.mxu0 0.0
    %502 = vmatprep.subr.mxu0 0.0
    %503 = vmatpush1.msra.mxu0 0.0
    %504 = vmatprep.subr.mxu0 0.0
    %505 = vmatpush1.msra.mxu0 0.0
    %506 = vmatprep.subr.mxu0 0.0
    %507 = vmatpush1.msra.mxu0 0.0
    %508 = vmatprep.subr.mxu0 0.0
    %509 = vmatpush1.msra.mxu0 0.0
    %510 = vmatprep.subr.mxu0 0.0
    %511 = vmatpush1.msra.mxu0 0.0
    %512 = vmatprep.subr.mxu0 0.0
    %513 = vmatpush1.msra.mxu0 0.0
    %514 = vmatprep.subr.mxu0 0.0
    %515 = vmatpush1.msra.mxu0 0.0
    %516 = vmatprep.subr.mxu0 0.0
    %517 = vmatpush1.msra.mxu0 0.0
    %518 = vmatprep.subr.mxu0 0.0
    %519 = vmatpush1.msra.mxu0 0.0
    %520 = vmatprep.subr.mxu0 0.0
    %521 = vmatpush1.msra.mxu0 0.0
    %522 = vmatprep.subr.mxu0 0.0
    %523 = vmatpush1.msra.mxu0 0.0
    %524 = vmatprep.subr.mxu0 0.0
    %525 = vmatpush1.msra.mxu0 0.0
    %526 = vmatprep.subr.mxu0 0.0
    %527 = vmatpush1.msra.mxu0 0.0
    %528 = vmatprep.subr.mxu0 0.0
    %529 = vmatpush1.msra.mxu0 0.0
    %530 = vmatprep.subr.mxu0 0.0
    %531 = vmatpush1.msra.mxu0 0.0
    %532 = vmatprep.subr.mxu0 0.0
    %533 = vmatpush1.msra.mxu0 0.0
    %534 = vmatprep.subr.mxu0 0.0
    %535 = vmatpush1.msra.mxu0 0.0
    %536 = vmatprep.subr.mxu0 0.0
    %537 = vmatpush1.msra.mxu0 0.0
    %538 = vmatprep.subr.mxu0 0.0
    %539 = vmatpush1.msra.mxu0 0.0
    %540 = vmatprep.subr.mxu0 0.0
    %541 = vmatpush1.msra.mxu0 0.0
    %542 = vmatprep.subr.mxu0 0.0
    %543 = vmatpush1.msra.mxu0 0.0
    %544 = vmatprep.subr.mxu0 0.0
    %545 = vmatpush1.msra.mxu0 0.0
    %546 = vmatprep.subr.mxu0 0.0
    %547 = vmatpush1.msra.mxu0 0.0
    %548 = vmatprep.mubr.f32.mxu0 0.0
    %549 = vmatmul.mubr.f32.gmra.mrb[0].mxu0 %v473
    %v550 = vpop.f32.mrb[0].mxu0
    %v551 = vadd.f32 %v470, %v550
    %v552 = vpop.f32.mrb[0].mxu0
    %553 = vmatprep.mubr.f32.mxu0 0.0
    %554 = vmatmul.mubr.f32.gmra.mrb[0].mxu0 %v476
    %v555 = vpop.f32.mrb[0].mxu0
    %v556 = vadd.f32 %v470, %v555
    %v557 = vpop.f32.mrb[0].mxu0
    %558 = vmatprep.mubr.f32.mxu0 0.0
    %559 = vmatmul.mubr.f32.gmra.mrb[0].mxu0 %v479
    %v560 = vpop.f32.mrb[0].mxu0
    %v561 = vadd.f32 %v470, %v560
    %v562 = vpop.f32.mrb[0].mxu0
    %563 = vmatprep.mubr.f32.mxu0 0.0
    %564 = vmatmul.mubr.f32.gmra.mrb[0].mxu0 %v482
    %v565 = vpop.f32.mrb[0].mxu0
    %v566 = vadd.f32 %v470, %v565
    %v567 = vpop.f32.mrb[0].mxu0
    %568 = vdwg.mxu0
    %v569 = vld [vmem:[%s10] sm:$0xff]
    %v570 = vld [vmem:[%s10 + $0x8] sm:$0xff]
    %v571 = vld [vmem:[%s10 + $0x10] sm:$0xff]
    %v572 = vld [vmem:[%s10 + $0x18] sm:$0xff]
    %v573 = vld [vmem:[%s13] sm:$0x1]
    %v575 = vlaneseq
    %v576 = vshrl.u32 %v575, 7
    %v577 = vsub.s32 0, %v576
    %v578 = vrot.slane %v573, %v577
    %580 = vmatprep.subr.mxu0 0.0
    %581 = vmatpush1.msra.mxu0 %v569
    %582 = vmatprep.subr.mxu0 0.0
    %583 = vmatpush1.msra.mxu0 %v570
    %584 = vmatprep.subr.mxu0 0.0
    %585 = vmatpush1.msra.mxu0 %v571
    %586 = vmatprep.subr.mxu0 0.0
    %587 = vmatpush1.msra.mxu0 %v572
    %588 = vmatprep.subr.mxu0 0.0
    %589 = vmatpush1.msra.mxu0 0.0
    %590 = vmatprep.subr.mxu0 0.0
    %591 = vmatpush1.msra.mxu0 0.0
    %592 = vmatprep.subr.mxu0 0.0
    %593 = vmatpush1.msra.mxu0 0.0
    %594 = vmatprep.subr.mxu0 0.0
    %595 = vmatpush1.msra.mxu0 0.0
    %596 = vmatprep.subr.mxu0 0.0
    %597 = vmatpush1.msra.mxu0 0.0
    %598 = vmatprep.subr.mxu0 0.0
    %599 = vmatpush1.msra.mxu0 0.0
    %600 = vmatprep.subr.mxu0 0.0
    %601 = vmatpush1.msra.mxu0 0.0
    %602 = vmatprep.subr.mxu0 0.0
    %603 = vmatpush1.msra.mxu0 0.0
    %604 = vmatprep.subr.mxu0 0.0
    %605 = vmatpush1.msra.mxu0 0.0
    %606 = vmatprep.subr.mxu0 0.0
    %607 = vmatpush1.msra.mxu0 0.0
    %608 = vmatprep.subr.mxu0 0.0
    %609 = vmatpush1.msra.mxu0 0.0
    %610 = vmatprep.subr.mxu0 0.0
    %611 = vmatpush1.msra.mxu0 0.0
    %612 = vmatprep.subr.mxu0 0.0
    %613 = vmatpush1.msra.mxu0 0.0
    %614 = vmatprep.subr.mxu0 0.0
    %615 = vmatpush1.msra.mxu0 0.0
    %616 = vmatprep.subr.mxu0 0.0
    %617 = vmatpush1.msra.mxu0 0.0
    %618 = vmatprep.subr.mxu0 0.0
    %619 = vmatpush1.msra.mxu0 0.0
    %620 = vmatprep.subr.mxu0 0.0
    %621 = vmatpush1.msra.mxu0 0.0
    %622 = vmatprep.subr.mxu0 0.0
    %623 = vmatpush1.msra.mxu0 0.0
    %624 = vmatprep.subr.mxu0 0.0
    %625 = vmatpush1.msra.mxu0 0.0
    %626 = vmatprep.subr.mxu0 0.0
    %627 = vmatpush1.msra.mxu0 0.0
    %628 = vmatprep.subr.mxu0 0.0
    %629 = vmatpush1.msra.mxu0 0.0
    %630 = vmatprep.subr.mxu0 0.0
    %631 = vmatpush1.msra.mxu0 0.0
    %632 = vmatprep.subr.mxu0 0.0
    %633 = vmatpush1.msra.mxu0 0.0
    %634 = vmatprep.subr.mxu0 0.0
    %635 = vmatpush1.msra.mxu0 0.0
    %636 = vmatprep.subr.mxu0 0.0
    %637 = vmatpush1.msra.mxu0 0.0
    %638 = vmatprep.subr.mxu0 0.0
    %639 = vmatpush1.msra.mxu0 0.0
    %640 = vmatprep.subr.mxu0 0.0
    %641 = vmatpush1.msra.mxu0 0.0
    %642 = vmatprep.subr.mxu0 0.0
    %643 = vmatpush1.msra.mxu0 0.0
    %644 = vmatprep.mubr.f32.mxu0 0.0
    %645 = vmatmul.mubr.f32.gmra.mrb[0].mxu0 %v473
    %v646 = vpop.f32.mrb[0].mxu0
    %v647 = vadd.f32 %v578, %v646
    %v648 = vpop.f32.mrb[0].mxu0
    %649 = vmatprep.mubr.f32.mxu0 0.0
    %650 = vmatmul.mubr.f32.gmra.mrb[0].mxu0 %v476
    %v651 = vpop.f32.mrb[0].mxu0
    %v652 = vadd.f32 %v578, %v651
    %v653 = vpop.f32.mrb[0].mxu0
    %654 = vmatprep.mubr.f32.mxu0 0.0
    %655 = vmatmul.mubr.f32.gmra.mrb[0].mxu0 %v479
    %v656 = vpop.f32.mrb[0].mxu0
    %v657 = vadd.f32 %v578, %v656
    %v658 = vpop.f32.mrb[0].mxu0
    %659 = vmatprep.mubr.f32.mxu0 0.0
    %660 = vmatmul.mubr.f32.gmra.mrb[0].mxu0 %v482
    %v661 = vpop.f32.mrb[0].mxu0
    %v662 = vadd.f32 %v578, %v661
    %v663 = vpop.f32.mrb[0].mxu0
    %664 = vdwg.mxu0
    %v665 = vld [vmem:[%s11] sm:$0xff]
    %v666 = vld [vmem:[%s11 + $0x8] sm:$0xff]
    %v667 = vld [vmem:[%s11 + $0x10] sm:$0xff]
    %v668 = vld [vmem:[%s11 + $0x18] sm:$0xff]
    %v669 = vld [vmem:[%s14] sm:$0x1]
    %v671 = vlaneseq
    %v672 = vshrl.u32 %v671, 7
    %v673 = vsub.s32 0, %v672
    %v674 = vrot.slane %v669, %v673
    %676 = vmatprep.subr.mxu0 0.0
    %677 = vmatpush1.msra.mxu0 %v665
    %678 = vmatprep.subr.mxu0 0.0
    %679 = vmatpush1.msra.mxu0 %v666
    %680 = vmatprep.subr.mxu0 0.0
    %681 = vmatpush1.msra.mxu0 %v667
    %682 = vmatprep.subr.mxu0 0.0
    %683 = vmatpush1.msra.mxu0 %v668
    %684 = vmatprep.subr.mxu0 0.0
    %685 = vmatpush1.msra.mxu0 0.0
    %686 = vmatprep.subr.mxu0 0.0
    %687 = vmatpush1.msra.mxu0 0.0
    %688 = vmatprep.subr.mxu0 0.0
    %689 = vmatpush1.msra.mxu0 0.0
    %690 = vmatprep.subr.mxu0 0.0
    %691 = vmatpush1.msra.mxu0 0.0
    %692 = vmatprep.subr.mxu0 0.0
    %693 = vmatpush1.msra.mxu0 0.0
    %694 = vmatprep.subr.mxu0 0.0
    %695 = vmatpush1.msra.mxu0 0.0
    %696 = vmatprep.subr.mxu0 0.0
    %697 = vmatpush1.msra.mxu0 0.0
    %698 = vmatprep.subr.mxu0 0.0
    %699 = vmatpush1.msra.mxu0 0.0
    %700 = vmatprep.subr.mxu0 0.0
    %701 = vmatpush1.msra.mxu0 0.0
    %702 = vmatprep.subr.mxu0 0.0
    %703 = vmatpush1.msra.mxu0 0.0
    %704 = vmatprep.subr.mxu0 0.0
    %705 = vmatpush1.msra.mxu0 0.0
    %706 = vmatprep.subr.mxu0 0.0
    %707 = vmatpush1.msra.mxu0 0.0
    %708 = vmatprep.subr.mxu0 0.0
    %709 = vmatpush1.msra.mxu0 0.0
    %710 = vmatprep.subr.mxu0 0.0
    %711 = vmatpush1.msra.mxu0 0.0
    %712 = vmatprep.subr.mxu0 0.0
    %713 = vmatpush1.msra.mxu0 0.0
    %714 = vmatprep.subr.mxu0 0.0
    %715 = vmatpush1.msra.mxu0 0.0
    %716 = vmatprep.subr.mxu0 0.0
    %717 = vmatpush1.msra.mxu0 0.0
    %718 = vmatprep.subr.mxu0 0.0
    %719 = vmatpush1.msra.mxu0 0.0
    %720 = vmatprep.subr.mxu0 0.0
    %721 = vmatpush1.msra.mxu0 0.0
    %722 = vmatprep.subr.mxu0 0.0
    %723 = vmatpush1.msra.mxu0 0.0
    %724 = vmatprep.subr.mxu0 0.0
    %725 = vmatpush1.msra.mxu0 0.0
    %726 = vmatprep.subr.mxu0 0.0
    %727 = vmatpush1.msra.mxu0 0.0
    %728 = vmatprep.subr.mxu0 0.0
    %729 = vmatpush1.msra.mxu0 0.0
    %730 = vmatprep.subr.mxu0 0.0
    %731 = vmatpush1.msra.mxu0 0.0
    %732 = vmatprep.subr.mxu0 0.0
    %733 = vmatpush1.msra.mxu0 0.0
    %734 = vmatprep.subr.mxu0 0.0
    %735 = vmatpush1.msra.mxu0 0.0
    %736 = vmatprep.subr.mxu0 0.0
    %737 = vmatpush1.msra.mxu0 0.0
    %738 = vmatprep.subr.mxu0 0.0
    %739 = vmatpush1.msra.mxu0 0.0
    %740 = vmatprep.mubr.f32.mxu0 0.0
    %741 = vmatmul.mubr.f32.gmra.mrb[0].mxu0 %v473
    %v742 = vpop.f32.mrb[0].mxu0
    %v743 = vadd.f32 %v674, %v742
    %v744 = vpop.f32.mrb[0].mxu0
    %745 = vmatprep.mubr.f32.mxu0 0.0
    %746 = vmatmul.mubr.f32.gmra.mrb[0].mxu0 %v476
    %v747 = vpop.f32.mrb[0].mxu0
    %v748 = vadd.f32 %v674, %v747
    %v749 = vpop.f32.mrb[0].mxu0
    %750 = vmatprep.mubr.f32.mxu0 0.0
    %751 = vmatmul.mubr.f32.gmra.mrb[0].mxu0 %v479
    %v752 = vpop.f32.mrb[0].mxu0
    %v753 = vadd.f32 %v674, %v752
    %v754 = vpop.f32.mrb[0].mxu0
    %755 = vmatprep.mubr.f32.mxu0 0.0
    %756 = vmatmul.mubr.f32.gmra.mrb[0].mxu0 %v482
    %v757 = vpop.f32.mrb[0].mxu0
    %v758 = vadd.f32 %v674, %v757
    %v759 = vpop.f32.mrb[0].mxu0
    %760 = vdwg.mxu0
    %765 = vrot.lane.b32.xlu0 %v551, 112
    %v766 = vpop.permute.xlu0 %765
    %767 = vrot.lane.b32.xlu0 %v556, 112
    %v768 = vpop.permute.xlu0 %767
    %769 = vrot.lane.b32.xlu0 %v561, 112
    %v770 = vpop.permute.xlu0 %769
    %771 = vrot.lane.b32.xlu0 %v566, 112
    %v772 = vpop.permute.xlu0 %771
    %773 = vrot.lane.b32.xlu0 %v551, 96
    %v774 = vpop.permute.xlu0 %773
    %775 = vrot.lane.b32.xlu0 %v556, 96
    %v776 = vpop.permute.xlu0 %775
    %777 = vrot.lane.b32.xlu0 %v561, 96
    %v778 = vpop.permute.xlu0 %777
    %779 = vrot.lane.b32.xlu0 %v566, 96
    %v780 = vpop.permute.xlu0 %779
    %781 = vrot.lane.b32.xlu0 %v551, 80
    %v782 = vpop.permute.xlu0 %781
    %783 = vrot.lane.b32.xlu0 %v556, 80
    %v784 = vpop.permute.xlu0 %783
    %785 = vrot.lane.b32.xlu0 %v561, 80
    %v786 = vpop.permute.xlu0 %785
    %787 = vrot.lane.b32.xlu0 %v566, 80
    %v788 = vpop.permute.xlu0 %787
    %793 = vrot.lane.b32.xlu0 %v647, 112
    %v794 = vpop.permute.xlu0 %793
    %795 = vrot.lane.b32.xlu0 %v652, 112
    %v796 = vpop.permute.xlu0 %795
    %797 = vrot.lane.b32.xlu0 %v657, 112
    %v798 = vpop.permute.xlu0 %797
    %799 = vrot.lane.b32.xlu0 %v662, 112
    %v800 = vpop.permute.xlu0 %799
    %801 = vrot.lane.b32.xlu0 %v647, 96
    %v802 = vpop.permute.xlu0 %801
    %803 = vrot.lane.b32.xlu0 %v652, 96
    %v804 = vpop.permute.xlu0 %803
    %805 = vrot.lane.b32.xlu0 %v657, 96
    %v806 = vpop.permute.xlu0 %805
    %807 = vrot.lane.b32.xlu0 %v662, 96
    %v808 = vpop.permute.xlu0 %807
    %809 = vrot.lane.b32.xlu0 %v647, 80
    %v810 = vpop.permute.xlu0 %809
    %811 = vrot.lane.b32.xlu0 %v652, 80
    %v812 = vpop.permute.xlu0 %811
    %813 = vrot.lane.b32.xlu0 %v657, 80
    %v814 = vpop.permute.xlu0 %813
    %815 = vrot.lane.b32.xlu0 %v662, 80
    %v816 = vpop.permute.xlu0 %815
    %821 = vrot.lane.b32.xlu0 %v743, 112
    %v822 = vpop.permute.xlu0 %821
    %823 = vrot.lane.b32.xlu0 %v748, 112
    %v824 = vpop.permute.xlu0 %823
    %825 = vrot.lane.b32.xlu0 %v753, 112
    %v826 = vpop.permute.xlu0 %825
    %827 = vrot.lane.b32.xlu0 %v758, 112
    %v828 = vpop.permute.xlu0 %827
    %833 = vrot.lane.b32.xlu0 %v743, 96
    %v834 = vpop.permute.xlu0 %833
    %835 = vrot.lane.b32.xlu0 %v748, 96
    %v836 = vpop.permute.xlu0 %835
    %837 = vrot.lane.b32.xlu0 %v753, 96
    %v838 = vpop.permute.xlu0 %837
    %839 = vrot.lane.b32.xlu0 %v758, 96
    %v840 = vpop.permute.xlu0 %839
    %845 = vrot.lane.b32.xlu0 %v743, 80
    %v846 = vpop.permute.xlu0 %845
    %847 = vrot.lane.b32.xlu0 %v748, 80
    %v848 = vpop.permute.xlu0 %847
    %849 = vrot.lane.b32.xlu0 %v753, 80
    %v850 = vpop.permute.xlu0 %849
    %851 = vrot.lane.b32.xlu0 %v758, 80
    %v852 = vpop.permute.xlu0 %851
    %vm857 = vcmask 130048
    %v858 = vsel %vm857, %v551, 0
    %v860 = vsel %vm857, %v556, 0
    %v862 = vsel %vm857, %v561, 0
    %v864 = vsel %vm857, %v566, 0
    %v866 = vsel %vm857, %v647, 0
    %v868 = vsel %vm857, %v652, 0
    %v870 = vsel %vm857, %v657, 0
    %v872 = vsel %vm857, %v662, 0
    %874 = vmatprep.subr.mxu0 0.0
    %875 = vmatpush1.xpose.msra.mxu0 %v866
    %876 = vmatprep.subr.mxu0 0.0
    %877 = vmatpush1.xpose.msra.mxu0 %v868
    %878 = vmatprep.subr.mxu0 0.0
    %879 = vmatpush1.xpose.msra.mxu0 %v870
    %880 = vmatprep.subr.mxu0 0.0
    %881 = vmatpush1.xpose.msra.mxu0 %v872
    %882 = vmatprep.subr.mxu0 0.0
    %883 = vmatpush1.xpose.msra.mxu0 0.0
    %884 = vmatprep.subr.mxu0 0.0
    %885 = vmatpush1.xpose.msra.mxu0 0.0
    %886 = vmatprep.subr.mxu0 0.0
    %887 = vmatpush1.xpose.msra.mxu0 0.0
    %888 = vmatprep.subr.mxu0 0.0
    %889 = vmatpush1.xpose.msra.mxu0 0.0
    %890 = vmatprep.subr.mxu0 0.0
    %891 = vmatpush1.xpose.msra.mxu0 0.0
    %892 = vmatprep.subr.mxu0 0.0
    %893 = vmatpush1.xpose.msra.mxu0 0.0
    %894 = vmatprep.subr.mxu0 0.0
    %895 = vmatpush1.xpose.msra.mxu0 0.0
    %896 = vmatprep.subr.mxu0 0.0
    %897 = vmatpush1.xpose.msra.mxu0 0.0
    %898 = vmatprep.subr.mxu0 0.0
    %899 = vmatpush1.xpose.msra.mxu0 0.0
    %900 = vmatprep.subr.mxu0 0.0
    %901 = vmatpush1.xpose.msra.mxu0 0.0
    %902 = vmatprep.subr.mxu0 0.0
    %903 = vmatpush1.xpose.msra.mxu0 0.0
    %904 = vmatprep.subr.mxu0 0.0
    %905 = vmatpush1.xpose.msra.mxu0 0.0
    %906 = vmatprep.subr.mxu0 0.0
    %907 = vmatpush1.xpose.msra.mxu0 0.0
    %908 = vmatprep.subr.mxu0 0.0
    %909 = vmatpush1.xpose.msra.mxu0 0.0
    %910 = vmatprep.subr.mxu0 0.0
    %911 = vmatpush1.xpose.msra.mxu0 0.0
    %912 = vmatprep.subr.mxu0 0.0
    %913 = vmatpush1.xpose.msra.mxu0 0.0
    %914 = vmatprep.subr.mxu0 0.0
    %915 = vmatpush1.xpose.msra.mxu0 0.0
    %916 = vmatprep.subr.mxu0 0.0
    %917 = vmatpush1.xpose.msra.mxu0 0.0
    %918 = vmatprep.subr.mxu0 0.0
    %919 = vmatpush1.xpose.msra.mxu0 0.0
    %920 = vmatprep.subr.mxu0 0.0
    %921 = vmatpush1.xpose.msra.mxu0 0.0
    %922 = vmatprep.subr.mxu0 0.0
    %923 = vmatpush1.xpose.msra.mxu0 0.0
    %924 = vmatprep.subr.mxu0 0.0
    %925 = vmatpush1.xpose.msra.mxu0 0.0
    %926 = vmatprep.subr.mxu0 0.0
    %927 = vmatpush1.xpose.msra.mxu0 0.0
    %928 = vmatprep.subr.mxu0 0.0
    %929 = vmatpush1.xpose.msra.mxu0 0.0
    %930 = vmatprep.subr.mxu0 0.0
    %931 = vmatpush1.xpose.msra.mxu0 0.0
    %932 = vmatprep.subr.mxu0 0.0
    %933 = vmatpush1.xpose.msra.mxu0 0.0
    %934 = vmatprep.subr.mxu0 0.0
    %935 = vmatpush1.xpose.msra.mxu0 0.0
    %936 = vmatprep.subr.mxu0 0.0
    %937 = vmatpush1.xpose.msra.mxu0 0.0
    %938 = vmatprep.mubr.f32.mxu0 0.0
    %939 = vmatmul.mubr.f32.gmra.mrb[0].mxu0 %v858
    %v940 = vpop.f32.mrb[0].mxu0
    %v941 = vadd.f32 0.0, %v940
    %v942 = vpop.f32.mrb[0].mxu0
    %943 = vmatprep.mubr.f32.mxu0 0.0
    %944 = vmatmul.mubr.f32.gmra.mrb[0].mxu0 %v860
    %v945 = vpop.f32.mrb[0].mxu0
    %v946 = vadd.f32 0.0, %v945
    %v947 = vpop.f32.mrb[0].mxu0
    %948 = vmatprep.mubr.f32.mxu0 0.0
    %949 = vmatmul.mubr.f32.gmra.mrb[0].mxu0 %v862
    %v950 = vpop.f32.mrb[0].mxu0
    %v951 = vadd.f32 0.0, %v950
    %v952 = vpop.f32.mrb[0].mxu0
    %953 = vmatprep.mubr.f32.mxu0 0.0
    %954 = vmatmul.mubr.f32.gmra.mrb[0].mxu0 %v864
    %v955 = vpop.f32.mrb[0].mxu0
    %v956 = vadd.f32 0.0, %v955
    %v957 = vpop.f32.mrb[0].mxu0
    %958 = vdwg.mxu0
    %v959 = vsel %vm857, %v766, 0
    %v961 = vsel %vm857, %v768, 0
    %v963 = vsel %vm857, %v770, 0
    %v965 = vsel %vm857, %v772, 0
    %v967 = vsel %vm857, %v794, 0
    %v969 = vsel %vm857, %v796, 0
    %v971 = vsel %vm857, %v798, 0
    %v973 = vsel %vm857, %v800, 0
    %975 = vmatprep.subr.mxu0 0.0
    %976 = vmatpush1.xpose.msra.mxu0 %v967
    %977 = vmatprep.subr.mxu0 0.0
    %978 = vmatpush1.xpose.msra.mxu0 %v969
    %979 = vmatprep.subr.mxu0 0.0
    %980 = vmatpush1.xpose.msra.mxu0 %v971
    %981 = vmatprep.subr.mxu0 0.0
    %982 = vmatpush1.xpose.msra.mxu0 %v973
    %983 = vmatprep.subr.mxu0 0.0
    %984 = vmatpush1.xpose.msra.mxu0 0.0
    %985 = vmatprep.subr.mxu0 0.0
    %986 = vmatpush1.xpose.msra.mxu0 0.0
    %987 = vmatprep.subr.mxu0 0.0
    %988 = vmatpush1.xpose.msra.mxu0 0.0
    %989 = vmatprep.subr.mxu0 0.0
    %990 = vmatpush1.xpose.msra.mxu0 0.0
    %991 = vmatprep.subr.mxu0 0.0
    %992 = vmatpush1.xpose.msra.mxu0 0.0
    %993 = vmatprep.subr.mxu0 0.0
    %994 = vmatpush1.xpose.msra.mxu0 0.0
    %995 = vmatprep.subr.mxu0 0.0
    %996 = vmatpush1.xpose.msra.mxu0 0.0
    %997 = vmatprep.subr.mxu0 0.0
    %998 = vmatpush1.xpose.msra.mxu0 0.0
    %999 = vmatprep.subr.mxu0 0.0
    %1000 = vmatpush1.xpose.msra.mxu0 0.0
    %1001 = vmatprep.subr.mxu0 0.0
    %1002 = vmatpush1.xpose.msra.mxu0 0.0
    %1003 = vmatprep.subr.mxu0 0.0
    %1004 = vmatpush1.xpose.msra.mxu0 0.0
    %1005 = vmatprep.subr.mxu0 0.0
    %1006 = vmatpush1.xpose.msra.mxu0 0.0
    %1007 = vmatprep.subr.mxu0 0.0
    %1008 = vmatpush1.xpose.msra.mxu0 0.0
    %1009 = vmatprep.subr.mxu0 0.0
    %1010 = vmatpush1.xpose.msra.mxu0 0.0
    %1011 = vmatprep.subr.mxu0 0.0
    %1012 = vmatpush1.xpose.msra.mxu0 0.0
    %1013 = vmatprep.subr.mxu0 0.0
    %1014 = vmatpush1.xpose.msra.mxu0 0.0
    %1015 = vmatprep.subr.mxu0 0.0
    %1016 = vmatpush1.xpose.msra.mxu0 0.0
    %1017 = vmatprep.subr.mxu0 0.0
    %1018 = vmatpush1.xpose.msra.mxu0 0.0
    %1019 = vmatprep.subr.mxu0 0.0
    %1020 = vmatpush1.xpose.msra.mxu0 0.0
    %1021 = vmatprep.subr.mxu0 0.0
    %1022 = vmatpush1.xpose.msra.mxu0 0.0
    %1023 = vmatprep.subr.mxu0 0.0
    %1024 = vmatpush1.xpose.msra.mxu0 0.0
    %1025 = vmatprep.subr.mxu0 0.0
    %1026 = vmatpush1.xpose.msra.mxu0 0.0
    %1027 = vmatprep.subr.mxu0 0.0
    %1028 = vmatpush1.xpose.msra.mxu0 0.0
    %1029 = vmatprep.subr.mxu0 0.0
    %1030 = vmatpush1.xpose.msra.mxu0 0.0
    %1031 = vmatprep.subr.mxu0 0.0
    %1032 = vmatpush1.xpose.msra.mxu0 0.0
    %1033 = vmatprep.subr.mxu0 0.0
    %1034 = vmatpush1.xpose.msra.mxu0 0.0
    %1035 = vmatprep.subr.mxu0 0.0
    %1036 = vmatpush1.xpose.msra.mxu0 0.0
    %1037 = vmatprep.subr.mxu0 0.0
    %1038 = vmatpush1.xpose.msra.mxu0 0.0
    %1039 = vmatprep.mubr.f32.mxu0 0.0
    %1040 = vmatmul.mubr.f32.gmra.mrb[0].mxu0 %v959
    %v1041 = vpop.f32.mrb[0].mxu0
    %v1042 = vadd.f32 0.0, %v1041
    %v1043 = vpop.f32.mrb[0].mxu0
    %1044 = vmatprep.mubr.f32.mxu0 0.0
    %1045 = vmatmul.mubr.f32.gmra.mrb[0].mxu0 %v961
    %v1046 = vpop.f32.mrb[0].mxu0
    %v1047 = vadd.f32 0.0, %v1046
    %v1048 = vpop.f32.mrb[0].mxu0
    %1049 = vmatprep.mubr.f32.mxu0 0.0
    %1050 = vmatmul.mubr.f32.gmra.mrb[0].mxu0 %v963
    %v1051 = vpop.f32.mrb[0].mxu0
    %v1052 = vadd.f32 0.0, %v1051
    %v1053 = vpop.f32.mrb[0].mxu0
    %1054 = vmatprep.mubr.f32.mxu0 0.0
    %1055 = vmatmul.mubr.f32.gmra.mrb[0].mxu0 %v965
    %v1056 = vpop.f32.mrb[0].mxu0
    %v1057 = vadd.f32 0.0, %v1056
    %v1058 = vpop.f32.mrb[0].mxu0
    %1059 = vdwg.mxu0
    %v1060 = vsel %vm857, %v774, 0
    %v1062 = vsel %vm857, %v776, 0
    %v1064 = vsel %vm857, %v778, 0
    %v1066 = vsel %vm857, %v780, 0
    %v1068 = vsel %vm857, %v802, 0
    %v1070 = vsel %vm857, %v804, 0
    %v1072 = vsel %vm857, %v806, 0
    %v1074 = vsel %vm857, %v808, 0
    %1076 = vmatprep.subr.mxu0 0.0
    %1077 = vmatpush1.xpose.msra.mxu0 %v1068
    %1078 = vmatprep.subr.mxu0 0.0
    %1079 = vmatpush1.xpose.msra.mxu0 %v1070
    %1080 = vmatprep.subr.mxu0 0.0
    %1081 = vmatpush1.xpose.msra.mxu0 %v1072
    %1082 = vmatprep.subr.mxu0 0.0
    %1083 = vmatpush1.xpose.msra.mxu0 %v1074
    %1084 = vmatprep.subr.mxu0 0.0
    %1085 = vmatpush1.xpose.msra.mxu0 0.0
    %1086 = vmatprep.subr.mxu0 0.0
    %1087 = vmatpush1.xpose.msra.mxu0 0.0
    %1088 = vmatprep.subr.mxu0 0.0
    %1089 = vmatpush1.xpose.msra.mxu0 0.0
    %1090 = vmatprep.subr.mxu0 0.0
    %1091 = vmatpush1.xpose.msra.mxu0 0.0
    %1092 = vmatprep.subr.mxu0 0.0
    %1093 = vmatpush1.xpose.msra.mxu0 0.0
    %1094 = vmatprep.subr.mxu0 0.0
    %1095 = vmatpush1.xpose.msra.mxu0 0.0
    %1096 = vmatprep.subr.mxu0 0.0
    %1097 = vmatpush1.xpose.msra.mxu0 0.0
    %1098 = vmatprep.subr.mxu0 0.0
    %1099 = vmatpush1.xpose.msra.mxu0 0.0
    %1100 = vmatprep.subr.mxu0 0.0
    %1101 = vmatpush1.xpose.msra.mxu0 0.0
    %1102 = vmatprep.subr.mxu0 0.0
    %1103 = vmatpush1.xpose.msra.mxu0 0.0
    %1104 = vmatprep.subr.mxu0 0.0
    %1105 = vmatpush1.xpose.msra.mxu0 0.0
    %1106 = vmatprep.subr.mxu0 0.0
    %1107 = vmatpush1.xpose.msra.mxu0 0.0
    %1108 = vmatprep.subr.mxu0 0.0
    %1109 = vmatpush1.xpose.msra.mxu0 0.0
    %1110 = vmatprep.subr.mxu0 0.0
    %1111 = vmatpush1.xpose.msra.mxu0 0.0
    %1112 = vmatprep.subr.mxu0 0.0
    %1113 = vmatpush1.xpose.msra.mxu0 0.0
    %1114 = vmatprep.subr.mxu0 0.0
    %1115 = vmatpush1.xpose.msra.mxu0 0.0
    %1116 = vmatprep.subr.mxu0 0.0
    %1117 = vmatpush1.xpose.msra.mxu0 0.0
    %1118 = vmatprep.subr.mxu0 0.0
    %1119 = vmatpush1.xpose.msra.mxu0 0.0
    %1120 = vmatprep.subr.mxu0 0.0
    %1121 = vmatpush1.xpose.msra.mxu0 0.0
    %1122 = vmatprep.subr.mxu0 0.0
    %1123 = vmatpush1.xpose.msra.mxu0 0.0
    %1124 = vmatprep.subr.mxu0 0.0
    %1125 = vmatpush1.xpose.msra.mxu0 0.0
    %1126 = vmatprep.subr.mxu0 0.0
    %1127 = vmatpush1.xpose.msra.mxu0 0.0
    %1128 = vmatprep.subr.mxu0 0.0
    %1129 = vmatpush1.xpose.msra.mxu0 0.0
    %1130 = vmatprep.subr.mxu0 0.0
    %1131 = vmatpush1.xpose.msra.mxu0 0.0
    %1132 = vmatprep.subr.mxu0 0.0
    %1133 = vmatpush1.xpose.msra.mxu0 0.0
    %1134 = vmatprep.subr.mxu0 0.0
    %1135 = vmatpush1.xpose.msra.mxu0 0.0
    %1136 = vmatprep.subr.mxu0 0.0
    %1137 = vmatpush1.xpose.msra.mxu0 0.0
    %1138 = vmatprep.subr.mxu0 0.0
    %1139 = vmatpush1.xpose.msra.mxu0 0.0
    %1140 = vmatprep.mubr.f32.mxu0 0.0
    %1141 = vmatmul.mubr.f32.gmra.mrb[0].mxu0 %v1060
    %v1142 = vpop.f32.mrb[0].mxu0
    %v1143 = vadd.f32 0.0, %v1142
    %v1144 = vpop.f32.mrb[0].mxu0
    %1145 = vmatprep.mubr.f32.mxu0 0.0
    %1146 = vmatmul.mubr.f32.gmra.mrb[0].mxu0 %v1062
    %v1147 = vpop.f32.mrb[0].mxu0
    %v1148 = vadd.f32 0.0, %v1147
    %v1149 = vpop.f32.mrb[0].mxu0
    %1150 = vmatprep.mubr.f32.mxu0 0.0
    %1151 = vmatmul.mubr.f32.gmra.mrb[0].mxu0 %v1064
    %v1152 = vpop.f32.mrb[0].mxu0
    %v1153 = vadd.f32 0.0, %v1152
    %v1154 = vpop.f32.mrb[0].mxu0
    %1155 = vmatprep.mubr.f32.mxu0 0.0
    %1156 = vmatmul.mubr.f32.gmra.mrb[0].mxu0 %v1066
    %v1157 = vpop.f32.mrb[0].mxu0
    %v1158 = vadd.f32 0.0, %v1157
    %v1159 = vpop.f32.mrb[0].mxu0
    %1160 = vdwg.mxu0
    %v1161 = vsel %vm857, %v782, 0
    %v1163 = vsel %vm857, %v784, 0
    %v1165 = vsel %vm857, %v786, 0
    %v1167 = vsel %vm857, %v788, 0
    %v1169 = vsel %vm857, %v810, 0
    %v1171 = vsel %vm857, %v812, 0
    %v1173 = vsel %vm857, %v814, 0
    %v1175 = vsel %vm857, %v816, 0
    %1177 = vmatprep.subr.mxu0 0.0
    %1178 = vmatpush1.xpose.msra.mxu0 %v1169
    %1179 = vmatprep.subr.mxu0 0.0
    %1180 = vmatpush1.xpose.msra.mxu0 %v1171
    %1181 = vmatprep.subr.mxu0 0.0
    %1182 = vmatpush1.xpose.msra.mxu0 %v1173
    %1183 = vmatprep.subr.mxu0 0.0
    %1184 = vmatpush1.xpose.msra.mxu0 %v1175
    %1185 = vmatprep.subr.mxu0 0.0
    %1186 = vmatpush1.xpose.msra.mxu0 0.0
    %1187 = vmatprep.subr.mxu0 0.0
    %1188 = vmatpush1.xpose.msra.mxu0 0.0
    %1189 = vmatprep.subr.mxu0 0.0
    %1190 = vmatpush1.xpose.msra.mxu0 0.0
    %1191 = vmatprep.subr.mxu0 0.0
    %1192 = vmatpush1.xpose.msra.mxu0 0.0
    %1193 = vmatprep.subr.mxu0 0.0
    %1194 = vmatpush1.xpose.msra.mxu0 0.0
    %1195 = vmatprep.subr.mxu0 0.0
    %1196 = vmatpush1.xpose.msra.mxu0 0.0
    %1197 = vmatprep.subr.mxu0 0.0
    %1198 = vmatpush1.xpose.msra.mxu0 0.0
    %1199 = vmatprep.subr.mxu0 0.0
    %1200 = vmatpush1.xpose.msra.mxu0 0.0
    %1201 = vmatprep.subr.mxu0 0.0
    %1202 = vmatpush1.xpose.msra.mxu0 0.0
    %1203 = vmatprep.subr.mxu0 0.0
    %1204 = vmatpush1.xpose.msra.mxu0 0.0
    %1205 = vmatprep.subr.mxu0 0.0
    %1206 = vmatpush1.xpose.msra.mxu0 0.0
    %1207 = vmatprep.subr.mxu0 0.0
    %1208 = vmatpush1.xpose.msra.mxu0 0.0
    %1209 = vmatprep.subr.mxu0 0.0
    %1210 = vmatpush1.xpose.msra.mxu0 0.0
    %1211 = vmatprep.subr.mxu0 0.0
    %1212 = vmatpush1.xpose.msra.mxu0 0.0
    %1213 = vmatprep.subr.mxu0 0.0
    %1214 = vmatpush1.xpose.msra.mxu0 0.0
    %1215 = vmatprep.subr.mxu0 0.0
    %1216 = vmatpush1.xpose.msra.mxu0 0.0
    %1217 = vmatprep.subr.mxu0 0.0
    %1218 = vmatpush1.xpose.msra.mxu0 0.0
    %1219 = vmatprep.subr.mxu0 0.0
    %1220 = vmatpush1.xpose.msra.mxu0 0.0
    %1221 = vmatprep.subr.mxu0 0.0
    %1222 = vmatpush1.xpose.msra.mxu0 0.0
    %1223 = vmatprep.subr.mxu0 0.0
    %1224 = vmatpush1.xpose.msra.mxu0 0.0
    %1225 = vmatprep.subr.mxu0 0.0
    %1226 = vmatpush1.xpose.msra.mxu0 0.0
    %1227 = vmatprep.subr.mxu0 0.0
    %1228 = vmatpush1.xpose.msra.mxu0 0.0
    %1229 = vmatprep.subr.mxu0 0.0
    %1230 = vmatpush1.xpose.msra.mxu0 0.0
    %1231 = vmatprep.subr.mxu0 0.0
    %1232 = vmatpush1.xpose.msra.mxu0 0.0
    %1233 = vmatprep.subr.mxu0 0.0
    %1234 = vmatpush1.xpose.msra.mxu0 0.0
    %1235 = vmatprep.subr.mxu0 0.0
    %1236 = vmatpush1.xpose.msra.mxu0 0.0
    %1237 = vmatprep.subr.mxu0 0.0
    %1238 = vmatpush1.xpose.msra.mxu0 0.0
    %1239 = vmatprep.subr.mxu0 0.0
    %1240 = vmatpush1.xpose.msra.mxu0 0.0
    %1241 = vmatprep.mubr.f32.mxu0 0.0
    %1242 = vmatmul.mubr.f32.gmra.mrb[0].mxu0 %v1161
    %v1243 = vpop.f32.mrb[0].mxu0
    %v1244 = vadd.f32 0.0, %v1243
    %v1245 = vpop.f32.mrb[0].mxu0
    %1246 = vmatprep.mubr.f32.mxu0 0.0
    %1247 = vmatmul.mubr.f32.gmra.mrb[0].mxu0 %v1163
    %v1248 = vpop.f32.mrb[0].mxu0
    %v1249 = vadd.f32 0.0, %v1248
    %v1250 = vpop.f32.mrb[0].mxu0
    %1251 = vmatprep.mubr.f32.mxu0 0.0
    %1252 = vmatmul.mubr.f32.gmra.mrb[0].mxu0 %v1165
    %v1253 = vpop.f32.mrb[0].mxu0
    %v1254 = vadd.f32 0.0, %v1253
    %v1255 = vpop.f32.mrb[0].mxu0
    %1256 = vmatprep.mubr.f32.mxu0 0.0
    %1257 = vmatmul.mubr.f32.gmra.mrb[0].mxu0 %v1167
    %v1258 = vpop.f32.mrb[0].mxu0
    %v1259 = vadd.f32 0.0, %v1258
    %v1260 = vpop.f32.mrb[0].mxu0
    %1261 = vdwg.mxu0
    %v1262 = vmul.f32 %v941, 0.25
    %v1263 = vmul.f32 %v946, 0.25
    %v1264 = vmul.f32 %v951, 0.25
    %v1265 = vmul.f32 %v956, 0.25
    %v1266 = vmul.f32 %v1042, 0.25
    %v1267 = vmul.f32 %v1047, 0.25
    %v1268 = vmul.f32 %v1052, 0.25
    %v1269 = vmul.f32 %v1057, 0.25
    %v1270 = vmul.f32 %v1143, 0.25
    %v1271 = vmul.f32 %v1148, 0.25
    %v1272 = vmul.f32 %v1153, 0.25
    %v1273 = vmul.f32 %v1158, 0.25
    %v1274 = vmul.f32 %v1244, 0.25
    %v1275 = vmul.f32 %v1249, 0.25
    %v1276 = vmul.f32 %v1254, 0.25
    %v1277 = vmul.f32 %v1259, 0.25
    %v1278 = vadd.f32 %v1262, %v405
    %v1279 = vadd.f32 %v1263, %v406
    %v1280 = vadd.f32 %v1264, %v407
    %v1281 = vadd.f32 %v1265, %v408
    %v1282 = vadd.f32 %v1266, %v405
    %v1283 = vadd.f32 %v1267, %v406
    %v1284 = vadd.f32 %v1268, %v407
    %v1285 = vadd.f32 %v1269, %v408
    %v1286 = vadd.f32 %v1270, %v405
    %v1287 = vadd.f32 %v1271, %v406
    %v1288 = vadd.f32 %v1272, %v407
    %v1289 = vadd.f32 %v1273, %v408
    %v1290 = vadd.f32 %v1274, %v405
    %v1291 = vadd.f32 %v1275, %v406
    %v1292 = vadd.f32 %v1276, %v407
    %v1293 = vadd.f32 %v1277, %v408
    %v1294 = vsel %vm285, %v1278, -inf
    %1295 = vmax.xlane.f32.xlu0 %v1294
    %v1296 = vpop.xlane.xlu0 %1295
    %v1297 = vsel %vm285, %v1279, -inf
    %1298 = vmax.xlane.f32.xlu0 %v1297
    %v1299 = vpop.xlane.xlu0 %1298
    %v1300 = vsel %vm285, %v1280, -inf
    %1301 = vmax.xlane.f32.xlu0 %v1300
    %v1302 = vpop.xlane.xlu0 %1301
    %v1303 = vsel %vm285, %v1281, -inf
    %1304 = vmax.xlane.f32.xlu0 %v1303
    %v1305 = vpop.xlane.xlu0 %1304
    %v1306 = vsel %vm285, %v1282, -inf
    %1307 = vmax.xlane.f32.xlu0 %v1306
    %v1308 = vpop.xlane.xlu0 %1307
    %v1309 = vsel %vm285, %v1283, -inf
    %1310 = vmax.xlane.f32.xlu0 %v1309
    %v1311 = vpop.xlane.xlu0 %1310
    %v1312 = vsel %vm285, %v1284, -inf
    %1313 = vmax.xlane.f32.xlu0 %v1312
    %v1314 = vpop.xlane.xlu0 %1313
    %v1315 = vsel %vm285, %v1285, -inf
    %1316 = vmax.xlane.f32.xlu0 %v1315
    %v1317 = vpop.xlane.xlu0 %1316
    %v1318 = vsel %vm285, %v1286, -inf
    %1319 = vmax.xlane.f32.xlu0 %v1318
    %v1320 = vpop.xlane.xlu0 %1319
    %v1321 = vsel %vm285, %v1287, -inf
    %1322 = vmax.xlane.f32.xlu0 %v1321
    %v1323 = vpop.xlane.xlu0 %1322
    %v1324 = vsel %vm285, %v1288, -inf
    %1325 = vmax.xlane.f32.xlu0 %v1324
    %v1326 = vpop.xlane.xlu0 %1325
    %v1327 = vsel %vm285, %v1289, -inf
    %1328 = vmax.xlane.f32.xlu0 %v1327
    %v1329 = vpop.xlane.xlu0 %1328
    %v1330 = vsel %vm285, %v1290, -inf
    %1331 = vmax.xlane.f32.xlu0 %v1330
    %v1332 = vpop.xlane.xlu0 %1331
    %v1333 = vsel %vm285, %v1291, -inf
    %1334 = vmax.xlane.f32.xlu0 %v1333
    %v1335 = vpop.xlane.xlu0 %1334
    %v1336 = vsel %vm285, %v1292, -inf
    %1337 = vmax.xlane.f32.xlu0 %v1336
    %v1338 = vpop.xlane.xlu0 %1337
    %v1339 = vsel %vm285, %v1293, -inf
    %1340 = vmax.xlane.f32.xlu0 %v1339
    %v1341 = vpop.xlane.xlu0 %1340
    %v1342 = vsub.f32 %v1278, %v1296
    %v1343 = vsub.f32 %v1279, %v1299
    %v1344 = vsub.f32 %v1280, %v1302
    %v1345 = vsub.f32 %v1281, %v1305
    %v1346 = vsub.f32 %v1282, %v1308
    %v1347 = vsub.f32 %v1283, %v1311
    %v1348 = vsub.f32 %v1284, %v1314
    %v1349 = vsub.f32 %v1285, %v1317
    %v1350 = vsub.f32 %v1286, %v1320
    %v1351 = vsub.f32 %v1287, %v1323
    %v1352 = vsub.f32 %v1288, %v1326
    %v1353 = vsub.f32 %v1289, %v1329
    %v1354 = vsub.f32 %v1290, %v1332
    %v1355 = vsub.f32 %v1291, %v1335
    %v1356 = vsub.f32 %v1292, %v1338
    %v1357 = vsub.f32 %v1293, %v1341
    %v1358 = vmul.f32 %v1342, 1.442695
    %v1359 = vpow.pop %v1358
    %v1360 = vmul.f32 %v1343, 1.442695
    %v1361 = vpow.pop %v1360
    %v1362 = vmul.f32 %v1344, 1.442695
    %v1363 = vpow.pop %v1362
    %v1364 = vmul.f32 %v1345, 1.442695
    %v1365 = vpow.pop %v1364
    %v1366 = vmul.f32 %v1346, 1.442695
    %v1367 = vpow.pop %v1366
    %v1368 = vmul.f32 %v1347, 1.442695
    %v1369 = vpow.pop %v1368
    %v1370 = vmul.f32 %v1348, 1.442695
    %v1371 = vpow.pop %v1370
    %v1372 = vmul.f32 %v1349, 1.442695
    %v1373 = vpow.pop %v1372
    %v1374 = vmul.f32 %v1350, 1.442695
    %v1375 = vpow.pop %v1374
    %v1376 = vmul.f32 %v1351, 1.442695
    %v1377 = vpow.pop %v1376
    %v1378 = vmul.f32 %v1352, 1.442695
    %v1379 = vpow.pop %v1378
    %v1380 = vmul.f32 %v1353, 1.442695
    %v1381 = vpow.pop %v1380
    %v1382 = vmul.f32 %v1354, 1.442695
    %v1383 = vpow.pop %v1382
    %v1384 = vmul.f32 %v1355, 1.442695
    %v1385 = vpow.pop %v1384
    %v1386 = vmul.f32 %v1356, 1.442695
    %v1387 = vpow.pop %v1386
    %v1388 = vmul.f32 %v1357, 1.442695
    %v1389 = vpow.pop %v1388
    %v1390 = vsel %vm285, %v1359, 0.0
    %1391 = vadd.xlane.f32.xlu0 %v1390
    %v1392 = vpop.xlane.xlu0 %1391
    %v1393 = vsel %vm285, %v1361, 0.0
    %1394 = vadd.xlane.f32.xlu0 %v1393
    %v1395 = vpop.xlane.xlu0 %1394
    %v1396 = vsel %vm285, %v1363, 0.0
    %1397 = vadd.xlane.f32.xlu0 %v1396
    %v1398 = vpop.xlane.xlu0 %1397
    %v1399 = vsel %vm285, %v1365, 0.0
    %1400 = vadd.xlane.f32.xlu0 %v1399
    %v1401 = vpop.xlane.xlu0 %1400
    %v1402 = vsel %vm285, %v1367, 0.0
    %1403 = vadd.xlane.f32.xlu0 %v1402
    %v1404 = vpop.xlane.xlu0 %1403
    %v1405 = vsel %vm285, %v1369, 0.0
    %1406 = vadd.xlane.f32.xlu0 %v1405
    %v1407 = vpop.xlane.xlu0 %1406
    %v1408 = vsel %vm285, %v1371, 0.0
    %1409 = vadd.xlane.f32.xlu0 %v1408
    %v1410 = vpop.xlane.xlu0 %1409
    %v1411 = vsel %vm285, %v1373, 0.0
    %1412 = vadd.xlane.f32.xlu0 %v1411
    %v1413 = vpop.xlane.xlu0 %1412
    %v1414 = vsel %vm285, %v1375, 0.0
    %1415 = vadd.xlane.f32.xlu0 %v1414
    %v1416 = vpop.xlane.xlu0 %1415
    %v1417 = vsel %vm285, %v1377, 0.0
    %1418 = vadd.xlane.f32.xlu0 %v1417
    %v1419 = vpop.xlane.xlu0 %1418
    %v1420 = vsel %vm285, %v1379, 0.0
    %1421 = vadd.xlane.f32.xlu0 %v1420
    %v1422 = vpop.xlane.xlu0 %1421
    %v1423 = vsel %vm285, %v1381, 0.0
    %1424 = vadd.xlane.f32.xlu0 %v1423
    %v1425 = vpop.xlane.xlu0 %1424
    %v1426 = vsel %vm285, %v1383, 0.0
    %1427 = vadd.xlane.f32.xlu0 %v1426
    %v1428 = vpop.xlane.xlu0 %1427
    %v1429 = vsel %vm285, %v1385, 0.0
    %1430 = vadd.xlane.f32.xlu0 %v1429
    %v1431 = vpop.xlane.xlu0 %1430
    %v1432 = vsel %vm285, %v1387, 0.0
    %1433 = vadd.xlane.f32.xlu0 %v1432
    %v1434 = vpop.xlane.xlu0 %1433
    %v1435 = vsel %vm285, %v1389, 0.0
    %1436 = vadd.xlane.f32.xlu0 %v1435
    %v1437 = vpop.xlane.xlu0 %1436
    %v1438 = vrcp.pop %v1392
    %v1439 = vrcp.pop %v1395
    %v1440 = vrcp.pop %v1398
    %v1441 = vrcp.pop %v1401
    %v1442 = vrcp.pop %v1404
    %v1443 = vrcp.pop %v1407
    %v1444 = vrcp.pop %v1410
    %v1445 = vrcp.pop %v1413
    %v1446 = vrcp.pop %v1416
    %v1447 = vrcp.pop %v1419
    %v1448 = vrcp.pop %v1422
    %v1449 = vrcp.pop %v1425
    %v1450 = vrcp.pop %v1428
    %v1451 = vrcp.pop %v1431
    %v1452 = vrcp.pop %v1434
    %v1453 = vrcp.pop %v1437
    %v1454 = vmul.f32 %v1359, %v1438
    %v1455 = vmul.f32 %v1361, %v1439
    %v1456 = vmul.f32 %v1363, %v1440
    %v1457 = vmul.f32 %v1365, %v1441
    %v1458 = vmul.f32 %v1367, %v1442
    %v1459 = vmul.f32 %v1369, %v1443
    %v1460 = vmul.f32 %v1371, %v1444
    %v1461 = vmul.f32 %v1373, %v1445
    %v1462 = vmul.f32 %v1375, %v1446
    %v1463 = vmul.f32 %v1377, %v1447
    %v1464 = vmul.f32 %v1379, %v1448
    %v1465 = vmul.f32 %v1381, %v1449
    %v1466 = vmul.f32 %v1383, %v1450
    %v1467 = vmul.f32 %v1385, %v1451
    %v1468 = vmul.f32 %v1387, %v1452
    %v1469 = vmul.f32 %v1389, %v1453
    %v1471 = vsel %vm285, %v1454, 0
    %v1474 = vsel %vm285, %v1455, 0
    %v1477 = vsel %vm285, %v1456, 0
    %v1480 = vsel %vm285, %v1457, 0
    %1482 = vmatprep.subr.mxu0 0.0
    %1483 = vmatpush1.msra.mxu0 %v743
    %1484 = vmatprep.subr.mxu0 0.0
    %1485 = vmatpush1.msra.mxu0 %v748
    %1486 = vmatprep.subr.mxu0 0.0
    %1487 = vmatpush1.msra.mxu0 %v753
    %1488 = vmatprep.subr.mxu0 0.0
    %1489 = vmatpush1.msra.mxu0 %v758
    %1490 = vmatprep.subr.mxu0 0.0
    %1491 = vmatpush1.msra.mxu0 0.0
    %1492 = vmatprep.subr.mxu0 0.0
    %1493 = vmatpush1.msra.mxu0 0.0
    %1494 = vmatprep.subr.mxu0 0.0
    %1495 = vmatpush1.msra.mxu0 0.0
    %1496 = vmatprep.subr.mxu0 0.0
    %1497 = vmatpush1.msra.mxu0 0.0
    %1498 = vmatprep.subr.mxu0 0.0
    %1499 = vmatpush1.msra.mxu0 0.0
    %1500 = vmatprep.subr.mxu0 0.0
    %1501 = vmatpush1.msra.mxu0 0.0
    %1502 = vmatprep.subr.mxu0 0.0
    %1503 = vmatpush1.msra.mxu0 0.0
    %1504 = vmatprep.subr.mxu0 0.0
    %1505 = vmatpush1.msra.mxu0 0.0
    %1506 = vmatprep.subr.mxu0 0.0
    %1507 = vmatpush1.msra.mxu0 0.0
    %1508 = vmatprep.subr.mxu0 0.0
    %1509 = vmatpush1.msra.mxu0 0.0
    %1510 = vmatprep.subr.mxu0 0.0
    %1511 = vmatpush1.msra.mxu0 0.0
    %1512 = vmatprep.subr.mxu0 0.0
    %1513 = vmatpush1.msra.mxu0 0.0
    %1514 = vmatprep.subr.mxu0 0.0
    %1515 = vmatpush1.msra.mxu0 0.0
    %1516 = vmatprep.subr.mxu0 0.0
    %1517 = vmatpush1.msra.mxu0 0.0
    %1518 = vmatprep.subr.mxu0 0.0
    %1519 = vmatpush1.msra.mxu0 0.0
    %1520 = vmatprep.subr.mxu0 0.0
    %1521 = vmatpush1.msra.mxu0 0.0
    %1522 = vmatprep.subr.mxu0 0.0
    %1523 = vmatpush1.msra.mxu0 0.0
    %1524 = vmatprep.subr.mxu0 0.0
    %1525 = vmatpush1.msra.mxu0 0.0
    %1526 = vmatprep.subr.mxu0 0.0
    %1527 = vmatpush1.msra.mxu0 0.0
    %1528 = vmatprep.subr.mxu0 0.0
    %1529 = vmatpush1.msra.mxu0 0.0
    %1530 = vmatprep.subr.mxu0 0.0
    %1531 = vmatpush1.msra.mxu0 0.0
    %1532 = vmatprep.subr.mxu0 0.0
    %1533 = vmatpush1.msra.mxu0 0.0
    %1534 = vmatprep.subr.mxu0 0.0
    %1535 = vmatpush1.msra.mxu0 0.0
    %1536 = vmatprep.subr.mxu0 0.0
    %1537 = vmatpush1.msra.mxu0 0.0
    %1538 = vmatprep.subr.mxu0 0.0
    %1539 = vmatpush1.msra.mxu0 0.0
    %1540 = vmatprep.subr.mxu0 0.0
    %1541 = vmatpush1.msra.mxu0 0.0
    %1542 = vmatprep.subr.mxu0 0.0
    %1543 = vmatpush1.msra.mxu0 0.0
    %1544 = vmatprep.subr.mxu0 0.0
    %1545 = vmatpush1.msra.mxu0 0.0
    %1546 = vmatprep.mubr.f32.mxu0 0.0
    %1547 = vmatmul.mubr.f32.gmra.mrb[0].mxu0 %v1471
    %v1548 = vpop.f32.mrb[0].mxu0
    %v1549 = vadd.f32 0.0, %v1548
    %v1550 = vpop.f32.mrb[0].mxu0
    %1551 = vmatprep.mubr.f32.mxu0 0.0
    %1552 = vmatmul.mubr.f32.gmra.mrb[0].mxu0 %v1474
    %v1553 = vpop.f32.mrb[0].mxu0
    %v1554 = vadd.f32 0.0, %v1553
    %v1555 = vpop.f32.mrb[0].mxu0
    %1556 = vmatprep.mubr.f32.mxu0 0.0
    %1557 = vmatmul.mubr.f32.gmra.mrb[0].mxu0 %v1477
    %v1558 = vpop.f32.mrb[0].mxu0
    %v1559 = vadd.f32 0.0, %v1558
    %v1560 = vpop.f32.mrb[0].mxu0
    %1561 = vmatprep.mubr.f32.mxu0 0.0
    %1562 = vmatmul.mubr.f32.gmra.mrb[0].mxu0 %v1480
    %v1563 = vpop.f32.mrb[0].mxu0
    %v1564 = vadd.f32 0.0, %v1563
    %v1565 = vpop.f32.mrb[0].mxu0
    %1566 = vdwg.mxu0
    %v1568 = vsel %vm285, %v1458, 0
    %v1571 = vsel %vm285, %v1459, 0
    %v1574 = vsel %vm285, %v1460, 0
    %v1577 = vsel %vm285, %v1461, 0
    %1579 = vmatprep.subr.mxu0 0.0
    %1580 = vmatpush1.msra.mxu0 %v822
    %1581 = vmatprep.subr.mxu0 0.0
    %1582 = vmatpush1.msra.mxu0 %v824
    %1583 = vmatprep.subr.mxu0 0.0
    %1584 = vmatpush1.msra.mxu0 %v826
    %1585 = vmatprep.subr.mxu0 0.0
    %1586 = vmatpush1.msra.mxu0 %v828
    %1587 = vmatprep.subr.mxu0 0.0
    %1588 = vmatpush1.msra.mxu0 0.0
    %1589 = vmatprep.subr.mxu0 0.0
    %1590 = vmatpush1.msra.mxu0 0.0
    %1591 = vmatprep.subr.mxu0 0.0
    %1592 = vmatpush1.msra.mxu0 0.0
    %1593 = vmatprep.subr.mxu0 0.0
    %1594 = vmatpush1.msra.mxu0 0.0
    %1595 = vmatprep.subr.mxu0 0.0
    %1596 = vmatpush1.msra.mxu0 0.0
    %1597 = vmatprep.subr.mxu0 0.0
    %1598 = vmatpush1.msra.mxu0 0.0
    %1599 = vmatprep.subr.mxu0 0.0
    %1600 = vmatpush1.msra.mxu0 0.0
    %1601 = vmatprep.subr.mxu0 0.0
    %1602 = vmatpush1.msra.mxu0 0.0
    %1603 = vmatprep.subr.mxu0 0.0
    %1604 = vmatpush1.msra.mxu0 0.0
    %1605 = vmatprep.subr.mxu0 0.0
    %1606 = vmatpush1.msra.mxu0 0.0
    %1607 = vmatprep.subr.mxu0 0.0
    %1608 = vmatpush1.msra.mxu0 0.0
    %1609 = vmatprep.subr.mxu0 0.0
    %1610 = vmatpush1.msra.mxu0 0.0
    %1611 = vmatprep.subr.mxu0 0.0
    %1612 = vmatpush1.msra.mxu0 0.0
    %1613 = vmatprep.subr.mxu0 0.0
    %1614 = vmatpush1.msra.mxu0 0.0
    %1615 = vmatprep.subr.mxu0 0.0
    %1616 = vmatpush1.msra.mxu0 0.0
    %1617 = vmatprep.subr.mxu0 0.0
    %1618 = vmatpush1.msra.mxu0 0.0
    %1619 = vmatprep.subr.mxu0 0.0
    %1620 = vmatpush1.msra.mxu0 0.0
    %1621 = vmatprep.subr.mxu0 0.0
    %1622 = vmatpush1.msra.mxu0 0.0
    %1623 = vmatprep.subr.mxu0 0.0
    %1624 = vmatpush1.msra.mxu0 0.0
    %1625 = vmatprep.subr.mxu0 0.0
    %1626 = vmatpush1.msra.mxu0 0.0
    %1627 = vmatprep.subr.mxu0 0.0
    %1628 = vmatpush1.msra.mxu0 0.0
    %1629 = vmatprep.subr.mxu0 0.0
    %1630 = vmatpush1.msra.mxu0 0.0
    %1631 = vmatprep.subr.mxu0 0.0
    %1632 = vmatpush1.msra.mxu0 0.0
    %1633 = vmatprep.subr.mxu0 0.0
    %1634 = vmatpush1.msra.mxu0 0.0
    %1635 = vmatprep.subr.mxu0 0.0
    %1636 = vmatpush1.msra.mxu0 0.0
    %1637 = vmatprep.subr.mxu0 0.0
    %1638 = vmatpush1.msra.mxu0 0.0
    %1639 = vmatprep.subr.mxu0 0.0
    %1640 = vmatpush1.msra.mxu0 0.0
    %1641 = vmatprep.subr.mxu0 0.0
    %1642 = vmatpush1.msra.mxu0 0.0
    %1643 = vmatprep.mubr.f32.mxu0 0.0
    %1644 = vmatmul.mubr.f32.gmra.mrb[0].mxu0 %v1568
    %v1645 = vpop.f32.mrb[0].mxu0
    %v1646 = vadd.f32 0.0, %v1645
    %v1647 = vpop.f32.mrb[0].mxu0
    %1648 = vmatprep.mubr.f32.mxu0 0.0
    %1649 = vmatmul.mubr.f32.gmra.mrb[0].mxu0 %v1571
    %v1650 = vpop.f32.mrb[0].mxu0
    %v1651 = vadd.f32 0.0, %v1650
    %v1652 = vpop.f32.mrb[0].mxu0
    %1653 = vmatprep.mubr.f32.mxu0 0.0
    %1654 = vmatmul.mubr.f32.gmra.mrb[0].mxu0 %v1574
    %v1655 = vpop.f32.mrb[0].mxu0
    %v1656 = vadd.f32 0.0, %v1655
    %v1657 = vpop.f32.mrb[0].mxu0
    %1658 = vmatprep.mubr.f32.mxu0 0.0
    %1659 = vmatmul.mubr.f32.gmra.mrb[0].mxu0 %v1577
    %v1660 = vpop.f32.mrb[0].mxu0
    %v1661 = vadd.f32 0.0, %v1660
    %v1662 = vpop.f32.mrb[0].mxu0
    %1663 = vdwg.mxu0
    %v1665 = vsel %vm285, %v1462, 0
    %v1668 = vsel %vm285, %v1463, 0
    %v1671 = vsel %vm285, %v1464, 0
    %v1674 = vsel %vm285, %v1465, 0
    %1676 = vmatprep.subr.mxu0 0.0
    %1677 = vmatpush1.msra.mxu0 %v834
    %1678 = vmatprep.subr.mxu0 0.0
    %1679 = vmatpush1.msra.mxu0 %v836
    %1680 = vmatprep.subr.mxu0 0.0
    %1681 = vmatpush1.msra.mxu0 %v838
    %1682 = vmatprep.subr.mxu0 0.0
    %1683 = vmatpush1.msra.mxu0 %v840
    %1684 = vmatprep.subr.mxu0 0.0
    %1685 = vmatpush1.msra.mxu0 0.0
    %1686 = vmatprep.subr.mxu0 0.0
    %1687 = vmatpush1.msra.mxu0 0.0
    %1688 = vmatprep.subr.mxu0 0.0
    %1689 = vmatpush1.msra.mxu0 0.0
    %1690 = vmatprep.subr.mxu0 0.0
    %1691 = vmatpush1.msra.mxu0 0.0
    %1692 = vmatprep.subr.mxu0 0.0
    %1693 = vmatpush1.msra.mxu0 0.0
    %1694 = vmatprep.subr.mxu0 0.0
    %1695 = vmatpush1.msra.mxu0 0.0
    %1696 = vmatprep.subr.mxu0 0.0
    %1697 = vmatpush1.msra.mxu0 0.0
    %1698 = vmatprep.subr.mxu0 0.0
    %1699 = vmatpush1.msra.mxu0 0.0
    %1700 = vmatprep.subr.mxu0 0.0
    %1701 = vmatpush1.msra.mxu0 0.0
    %1702 = vmatprep.subr.mxu0 0.0
    %1703 = vmatpush1.msra.mxu0 0.0
    %1704 = vmatprep.subr.mxu0 0.0
    %1705 = vmatpush1.msra.mxu0 0.0
    %1706 = vmatprep.subr.mxu0 0.0
    %1707 = vmatpush1.msra.mxu0 0.0
    %1708 = vmatprep.subr.mxu0 0.0
    %1709 = vmatpush1.msra.mxu0 0.0
    %1710 = vmatprep.subr.mxu0 0.0
    %1711 = vmatpush1.msra.mxu0 0.0
    %1712 = vmatprep.subr.mxu0 0.0
    %1713 = vmatpush1.msra.mxu0 0.0
    %1714 = vmatprep.subr.mxu0 0.0
    %1715 = vmatpush1.msra.mxu0 0.0
    %1716 = vmatprep.subr.mxu0 0.0
    %1717 = vmatpush1.msra.mxu0 0.0
    %1718 = vmatprep.subr.mxu0 0.0
    %1719 = vmatpush1.msra.mxu0 0.0
    %1720 = vmatprep.subr.mxu0 0.0
    %1721 = vmatpush1.msra.mxu0 0.0
    %1722 = vmatprep.subr.mxu0 0.0
    %1723 = vmatpush1.msra.mxu0 0.0
    %1724 = vmatprep.subr.mxu0 0.0
    %1725 = vmatpush1.msra.mxu0 0.0
    %1726 = vmatprep.subr.mxu0 0.0
    %1727 = vmatpush1.msra.mxu0 0.0
    %1728 = vmatprep.subr.mxu0 0.0
    %1729 = vmatpush1.msra.mxu0 0.0
    %1730 = vmatprep.subr.mxu0 0.0
    %1731 = vmatpush1.msra.mxu0 0.0
    %1732 = vmatprep.subr.mxu0 0.0
    %1733 = vmatpush1.msra.mxu0 0.0
    %1734 = vmatprep.subr.mxu0 0.0
    %1735 = vmatpush1.msra.mxu0 0.0
    %1736 = vmatprep.subr.mxu0 0.0
    %1737 = vmatpush1.msra.mxu0 0.0
    %1738 = vmatprep.subr.mxu0 0.0
    %1739 = vmatpush1.msra.mxu0 0.0
    %1740 = vmatprep.mubr.f32.mxu0 0.0
    %1741 = vmatmul.mubr.f32.gmra.mrb[0].mxu0 %v1665
    %v1742 = vpop.f32.mrb[0].mxu0
    %v1743 = vadd.f32 0.0, %v1742
    %v1744 = vpop.f32.mrb[0].mxu0
    %1745 = vmatprep.mubr.f32.mxu0 0.0
    %1746 = vmatmul.mubr.f32.gmra.mrb[0].mxu0 %v1668
    %v1747 = vpop.f32.mrb[0].mxu0
    %v1748 = vadd.f32 0.0, %v1747
    %v1749 = vpop.f32.mrb[0].mxu0
    %1750 = vmatprep.mubr.f32.mxu0 0.0
    %1751 = vmatmul.mubr.f32.gmra.mrb[0].mxu0 %v1671
    %v1752 = vpop.f32.mrb[0].mxu0
    %v1753 = vadd.f32 0.0, %v1752
    %v1754 = vpop.f32.mrb[0].mxu0
    %1755 = vmatprep.mubr.f32.mxu0 0.0
    %1756 = vmatmul.mubr.f32.gmra.mrb[0].mxu0 %v1674
    %v1757 = vpop.f32.mrb[0].mxu0
    %v1758 = vadd.f32 0.0, %v1757
    %v1759 = vpop.f32.mrb[0].mxu0
    %1760 = vdwg.mxu0
    %v1762 = vsel %vm285, %v1466, 0
    %v1765 = vsel %vm285, %v1467, 0
    %v1768 = vsel %vm285, %v1468, 0
    %v1771 = vsel %vm285, %v1469, 0
    %1773 = vmatprep.subr.mxu0 0.0
    %1774 = vmatpush1.msra.mxu0 %v846
    %1775 = vmatprep.subr.mxu0 0.0
    %1776 = vmatpush1.msra.mxu0 %v848
    %1777 = vmatprep.subr.mxu0 0.0
    %1778 = vmatpush1.msra.mxu0 %v850
    %1779 = vmatprep.subr.mxu0 0.0
    %1780 = vmatpush1.msra.mxu0 %v852
    %1781 = vmatprep.subr.mxu0 0.0
    %1782 = vmatpush1.msra.mxu0 0.0
    %1783 = vmatprep.subr.mxu0 0.0
    %1784 = vmatpush1.msra.mxu0 0.0
    %1785 = vmatprep.subr.mxu0 0.0
    %1786 = vmatpush1.msra.mxu0 0.0
    %1787 = vmatprep.subr.mxu0 0.0
    %1788 = vmatpush1.msra.mxu0 0.0
    %1789 = vmatprep.subr.mxu0 0.0
    %1790 = vmatpush1.msra.mxu0 0.0
    %1791 = vmatprep.subr.mxu0 0.0
    %1792 = vmatpush1.msra.mxu0 0.0
    %1793 = vmatprep.subr.mxu0 0.0
    %1794 = vmatpush1.msra.mxu0 0.0
    %1795 = vmatprep.subr.mxu0 0.0
    %1796 = vmatpush1.msra.mxu0 0.0
    %1797 = vmatprep.subr.mxu0 0.0
    %1798 = vmatpush1.msra.mxu0 0.0
    %1799 = vmatprep.subr.mxu0 0.0
    %1800 = vmatpush1.msra.mxu0 0.0
    %1801 = vmatprep.subr.mxu0 0.0
    %1802 = vmatpush1.msra.mxu0 0.0
    %1803 = vmatprep.subr.mxu0 0.0
    %1804 = vmatpush1.msra.mxu0 0.0
    %1805 = vmatprep.subr.mxu0 0.0
    %1806 = vmatpush1.msra.mxu0 0.0
    %1807 = vmatprep.subr.mxu0 0.0
    %1808 = vmatpush1.msra.mxu0 0.0
    %1809 = vmatprep.subr.mxu0 0.0
    %1810 = vmatpush1.msra.mxu0 0.0
    %1811 = vmatprep.subr.mxu0 0.0
    %1812 = vmatpush1.msra.mxu0 0.0
    %1813 = vmatprep.subr.mxu0 0.0
    %1814 = vmatpush1.msra.mxu0 0.0
    %1815 = vmatprep.subr.mxu0 0.0
    %1816 = vmatpush1.msra.mxu0 0.0
    %1817 = vmatprep.subr.mxu0 0.0
    %1818 = vmatpush1.msra.mxu0 0.0
    %1819 = vmatprep.subr.mxu0 0.0
    %1820 = vmatpush1.msra.mxu0 0.0
    %1821 = vmatprep.subr.mxu0 0.0
    %1822 = vmatpush1.msra.mxu0 0.0
    %1823 = vmatprep.subr.mxu0 0.0
    %1824 = vmatpush1.msra.mxu0 0.0
    %1825 = vmatprep.subr.mxu0 0.0
    %1826 = vmatpush1.msra.mxu0 0.0
    %1827 = vmatprep.subr.mxu0 0.0
    %1828 = vmatpush1.msra.mxu0 0.0
    %1829 = vmatprep.subr.mxu0 0.0
    %1830 = vmatpush1.msra.mxu0 0.0
    %1831 = vmatprep.subr.mxu0 0.0
    %1832 = vmatpush1.msra.mxu0 0.0
    %1833 = vmatprep.subr.mxu0 0.0
    %1834 = vmatpush1.msra.mxu0 0.0
    %1835 = vmatprep.subr.mxu0 0.0
    %1836 = vmatpush1.msra.mxu0 0.0
    %1837 = vmatprep.mubr.f32.mxu0 0.0
    %1838 = vmatmul.mubr.f32.gmra.mrb[0].mxu0 %v1762
    %v1839 = vpop.f32.mrb[0].mxu0
    %v1840 = vadd.f32 0.0, %v1839
    %v1841 = vpop.f32.mrb[0].mxu0
    %1842 = vmatprep.mubr.f32.mxu0 0.0
    %1843 = vmatmul.mubr.f32.gmra.mrb[0].mxu0 %v1765
    %v1844 = vpop.f32.mrb[0].mxu0
    %v1845 = vadd.f32 0.0, %v1844
    %v1846 = vpop.f32.mrb[0].mxu0
    %1847 = vmatprep.mubr.f32.mxu0 0.0
    %1848 = vmatmul.mubr.f32.gmra.mrb[0].mxu0 %v1768
    %v1849 = vpop.f32.mrb[0].mxu0
    %v1850 = vadd.f32 0.0, %v1849
    %v1851 = vpop.f32.mrb[0].mxu0
    %1852 = vmatprep.mubr.f32.mxu0 0.0
    %1853 = vmatmul.mubr.f32.gmra.mrb[0].mxu0 %v1771
    %v1854 = vpop.f32.mrb[0].mxu0
    %v1855 = vadd.f32 0.0, %v1854
    %v1856 = vpop.f32.mrb[0].mxu0
    %1857 = vdwg.mxu0
    %1862 = vrot.lane.b32.xlu0 %v1646, 16
    %v1863 = vpop.permute.xlu0 %1862
    %1864 = vrot.lane.b32.xlu0 %v1651, 16
    %v1865 = vpop.permute.xlu0 %1864
    %1866 = vrot.lane.b32.xlu0 %v1656, 16
    %v1867 = vpop.permute.xlu0 %1866
    %1868 = vrot.lane.b32.xlu0 %v1661, 16
    %v1869 = vpop.permute.xlu0 %1868
    %1878 = vrot.lane.b32.xlu0 %v1743, 32
    %v1879 = vpop.permute.xlu0 %1878
    %1880 = vrot.lane.b32.xlu0 %v1748, 32
    %v1881 = vpop.permute.xlu0 %1880
    %1882 = vrot.lane.b32.xlu0 %v1753, 32
    %v1883 = vpop.permute.xlu0 %1882
    %1884 = vrot.lane.b32.xlu0 %v1758, 32
    %v1885 = vpop.permute.xlu0 %1884
    %1894 = vrot.lane.b32.xlu0 %v1840, 48
    %v1895 = vpop.permute.xlu0 %1894
    %1896 = vrot.lane.b32.xlu0 %v1845, 48
    %v1897 = vpop.permute.xlu0 %1896
    %1898 = vrot.lane.b32.xlu0 %v1850, 48
    %v1899 = vpop.permute.xlu0 %1898
    %1900 = vrot.lane.b32.xlu0 %v1855, 48
    %v1901 = vpop.permute.xlu0 %1900
    %v1906 = vsel %vm857, %v1549, %v1863
    %v1907 = vsel %vm857, %v1554, %v1865
    %v1908 = vsel %vm857, %v1559, %v1867
    %v1909 = vsel %vm857, %v1564, %v1869
    %v1910 = vsel %vm285, %v1906, %v1879
    %v1911 = vsel %vm285, %v1907, %v1881
    %v1912 = vsel %vm285, %v1908, %v1883
    %v1913 = vsel %vm285, %v1909, %v1885
    %vm1914 = vcmask 392192
    %v1915 = vsel %vm1914, %v1910, %v1895
    %v1916 = vsel %vm1914, %v1911, %v1897
    %v1917 = vsel %vm1914, %v1912, %v1899
    %v1918 = vsel %vm1914, %v1913, %v1901
    %v1919 = vld [vmem:[%s15] sm:$0xff]
    %v1920 = vld [vmem:[%s15 + $0x8] sm:$0xff]
    %v1921 = vld [vmem:[%s15 + $0x10] sm:$0xff]
    %v1922 = vld [vmem:[%s15 + $0x18] sm:$0xff]
    %v1923 = vld [vmem:[%s15 + $0x20] sm:$0xff]
    %v1924 = vld [vmem:[%s15 + $0x28] sm:$0xff]
    %v1925 = vld [vmem:[%s15 + $0x30] sm:$0xff]
    %v1926 = vld [vmem:[%s15 + $0x38] sm:$0xff]
    %v1928 = vsel %vm83, %v1915, 0
    %v1931 = vsel %vm83, %v1916, 0
    %v1934 = vsel %vm83, %v1917, 0
    %v1937 = vsel %vm83, %v1918, 0
    %1939 = vmatprep.subr.mxu0 0.0
    %1940 = vmatpush1.msra.mxu0 %v1919
    %1941 = vmatprep.subr.mxu0 0.0
    %1942 = vmatpush1.msra.mxu0 %v1920
    %1943 = vmatprep.subr.mxu0 0.0
    %1944 = vmatpush1.msra.mxu0 %v1921
    %1945 = vmatprep.subr.mxu0 0.0
    %1946 = vmatpush1.msra.mxu0 %v1922
    %1947 = vmatprep.subr.mxu0 0.0
    %1948 = vmatpush1.msra.mxu0 %v1923
    %1949 = vmatprep.subr.mxu0 0.0
    %1950 = vmatpush1.msra.mxu0 %v1924
    %1951 = vmatprep.subr.mxu0 0.0
    %1952 = vmatpush1.msra.mxu0 %v1925
    %1953 = vmatprep.subr.mxu0 0.0
    %1954 = vmatpush1.msra.mxu0 %v1926
    %1955 = vmatprep.subr.mxu0 0.0
    %1956 = vmatpush1.msra.mxu0 0.0
    %1957 = vmatprep.subr.mxu0 0.0
    %1958 = vmatpush1.msra.mxu0 0.0
    %1959 = vmatprep.subr.mxu0 0.0
    %1960 = vmatpush1.msra.mxu0 0.0
    %1961 = vmatprep.subr.mxu0 0.0
    %1962 = vmatpush1.msra.mxu0 0.0
    %1963 = vmatprep.subr.mxu0 0.0
    %1964 = vmatpush1.msra.mxu0 0.0
    %1965 = vmatprep.subr.mxu0 0.0
    %1966 = vmatpush1.msra.mxu0 0.0
    %1967 = vmatprep.subr.mxu0 0.0
    %1968 = vmatpush1.msra.mxu0 0.0
    %1969 = vmatprep.subr.mxu0 0.0
    %1970 = vmatpush1.msra.mxu0 0.0
    %1971 = vmatprep.subr.mxu0 0.0
    %1972 = vmatpush1.msra.mxu0 0.0
    %1973 = vmatprep.subr.mxu0 0.0
    %1974 = vmatpush1.msra.mxu0 0.0
    %1975 = vmatprep.subr.mxu0 0.0
    %1976 = vmatpush1.msra.mxu0 0.0
    %1977 = vmatprep.subr.mxu0 0.0
    %1978 = vmatpush1.msra.mxu0 0.0
    %1979 = vmatprep.subr.mxu0 0.0
    %1980 = vmatpush1.msra.mxu0 0.0
    %1981 = vmatprep.subr.mxu0 0.0
    %1982 = vmatpush1.msra.mxu0 0.0
    %1983 = vmatprep.subr.mxu0 0.0
    %1984 = vmatpush1.msra.mxu0 0.0
    %1985 = vmatprep.subr.mxu0 0.0
    %1986 = vmatpush1.msra.mxu0 0.0
    %1987 = vmatprep.subr.mxu0 0.0
    %1988 = vmatpush1.msra.mxu0 0.0
    %1989 = vmatprep.subr.mxu0 0.0
    %1990 = vmatpush1.msra.mxu0 0.0
    %1991 = vmatprep.subr.mxu0 0.0
    %1992 = vmatpush1.msra.mxu0 0.0
    %1993 = vmatprep.subr.mxu0 0.0
    %1994 = vmatpush1.msra.mxu0 0.0
    %1995 = vmatprep.subr.mxu0 0.0
    %1996 = vmatpush1.msra.mxu0 0.0
    %1997 = vmatprep.subr.mxu0 0.0
    %1998 = vmatpush1.msra.mxu0 0.0
    %1999 = vmatprep.subr.mxu0 0.0
    %2000 = vmatpush1.msra.mxu0 0.0
    %2001 = vmatprep.subr.mxu0 0.0
    %2002 = vmatpush1.msra.mxu0 0.0
    %2003 = vmatprep.mubr.f32.mxu0 0.0
    %2004 = vmatmul.mubr.f32.gmra.mrb[0].mxu0 %v1928
    %v2005 = vpop.f32.mrb[0].mxu0
    %v2006 = vadd.f32 0.0, %v2005
    %v2007 = vpop.f32.mrb[0].mxu0
    %2008 = vmatprep.mubr.f32.mxu0 0.0
    %2009 = vmatmul.mubr.f32.gmra.mrb[0].mxu0 %v1931
    %v2010 = vpop.f32.mrb[0].mxu0
    %v2011 = vadd.f32 0.0, %v2010
    %v2012 = vpop.f32.mrb[0].mxu0
    %2013 = vmatprep.mubr.f32.mxu0 0.0
    %2014 = vmatmul.mubr.f32.gmra.mrb[0].mxu0 %v1934
    %v2015 = vpop.f32.mrb[0].mxu0
    %v2016 = vadd.f32 0.0, %v2015
    %v2017 = vpop.f32.mrb[0].mxu0
    %2018 = vmatprep.mubr.f32.mxu0 0.0
    %2019 = vmatmul.mubr.f32.gmra.mrb[0].mxu0 %v1937
    %v2020 = vpop.f32.mrb[0].mxu0
    %v2021 = vadd.f32 0.0, %v2020
    %v2022 = vpop.f32.mrb[0].mxu0
    %2023 = vdwg.mxu0
    %v2024 = vadd.f32 %v401, %v2006
    %v2025 = vadd.f32 %v402, %v2011
    %v2026 = vadd.f32 %v403, %v2016
    %v2027 = vadd.f32 %v404, %v2021
    %v2028 = vld [vmem:[%s16] sm:$0x1]
    %v2030 = vlaneseq
    %v2031 = vshrl.u32 %v2030, 7
    %v2032 = vsub.s32 0, %v2031
    %v2033 = vrot.slane %v2028, %v2032
    %v2035 = vadd.f32 %v2024, %v2033
    %v2036 = vadd.f32 %v2025, %v2033
    %v2037 = vadd.f32 %v2026, %v2033
    %v2038 = vadd.f32 %v2027, %v2033
    %v2039 = vsel %vm285, %v2035, 0.0
    %2040 = vadd.xlane.f32.xlu0 %v2039
    %v2041 = vpop.xlane.xlu0 %2040
    %v2042 = vsel %vm285, %v2036, 0.0
    %2043 = vadd.xlane.f32.xlu0 %v2042
    %v2044 = vpop.xlane.xlu0 %2043
    %v2045 = vsel %vm285, %v2037, 0.0
    %2046 = vadd.xlane.f32.xlu0 %v2045
    %v2047 = vpop.xlane.xlu0 %2046
    %v2048 = vsel %vm285, %v2038, 0.0
    %2049 = vadd.xlane.f32.xlu0 %v2048
    %v2050 = vpop.xlane.xlu0 %2049
    %v2051 = vmul.f32 %v2041, %v298
    %v2052 = vmul.f32 %v2044, %v298
    %v2053 = vmul.f32 %v2047, %v298
    %v2054 = vmul.f32 %v2050, %v298
    %v2055 = vsub.f32 %v2035, %v2051
    %v2056 = vsub.f32 %v2036, %v2052
    %v2057 = vsub.f32 %v2037, %v2053
    %v2058 = vsub.f32 %v2038, %v2054
    %v2059 = vmul.f32 %v2055, %v2055
    %v2060 = vmul.f32 %v2056, %v2056
    %v2061 = vmul.f32 %v2057, %v2057
    %v2062 = vmul.f32 %v2058, %v2058
    %v2063 = vsel %vm285, %v2059, 0.0
    %2064 = vadd.xlane.f32.xlu0 %v2063
    %v2065 = vpop.xlane.xlu0 %2064
    %v2066 = vsel %vm285, %v2060, 0.0
    %2067 = vadd.xlane.f32.xlu0 %v2066
    %v2068 = vpop.xlane.xlu0 %2067
    %v2069 = vsel %vm285, %v2061, 0.0
    %2070 = vadd.xlane.f32.xlu0 %v2069
    %v2071 = vpop.xlane.xlu0 %2070
    %v2072 = vsel %vm285, %v2062, 0.0
    %2073 = vadd.xlane.f32.xlu0 %v2072
    %v2074 = vpop.xlane.xlu0 %2073
    %v2075 = vmul.f32 %v2065, %v298
    %v2076 = vmul.f32 %v2068, %v298
    %v2077 = vmul.f32 %v2071, %v298
    %v2078 = vmul.f32 %v2074, %v298
    %v2079 = vadd.f32 %v2075, 1e-05
    %v2080 = vadd.f32 %v2076, 1e-05
    %v2081 = vadd.f32 %v2077, 1e-05
    %v2082 = vadd.f32 %v2078, 1e-05
    %v2083 = vrsqrt.pop %v2079
    %v2084 = vrsqrt.pop %v2080
    %v2085 = vrsqrt.pop %v2081
    %v2086 = vrsqrt.pop %v2082
    %v2087 = vmul.f32 %v2055, %v2083
    %v2088 = vmul.f32 %v2056, %v2084
    %v2089 = vmul.f32 %v2057, %v2085
    %v2090 = vmul.f32 %v2058, %v2086
    %v2091 = vld [vmem:[%s17] sm:$0xff]
    %v2092 = vld [vmem:[%s17 + $0x8] sm:$0xff]
    %v2093 = vld [vmem:[%s17 + $0x10] sm:$0xff]
    %v2094 = vld [vmem:[%s17 + $0x18] sm:$0xff]
    %v2095 = vld [vmem:[%s18] sm:$0x1]
    %v2097 = vlaneseq
    %v2098 = vshrl.u32 %v2097, 7
    %v2099 = vsub.s32 0, %v2098
    %v2100 = vrot.slane %v2095, %v2099
    %v2103 = vsel %vm285, %v2087, 0
    %v2106 = vsel %vm285, %v2088, 0
    %v2109 = vsel %vm285, %v2089, 0
    %v2112 = vsel %vm285, %v2090, 0
    %2114 = vmatprep.subr.mxu0 0.0
    %2115 = vmatpush1.msra.mxu0 %v2091
    %2116 = vmatprep.subr.mxu0 0.0
    %2117 = vmatpush1.msra.mxu0 %v2092
    %2118 = vmatprep.subr.mxu0 0.0
    %2119 = vmatpush1.msra.mxu0 %v2093
    %2120 = vmatprep.subr.mxu0 0.0
    %2121 = vmatpush1.msra.mxu0 %v2094
    %2122 = vmatprep.subr.mxu0 0.0
    %2123 = vmatpush1.msra.mxu0 0.0
    %2124 = vmatprep.subr.mxu0 0.0
    %2125 = vmatpush1.msra.mxu0 0.0
    %2126 = vmatprep.subr.mxu0 0.0
    %2127 = vmatpush1.msra.mxu0 0.0
    %2128 = vmatprep.subr.mxu0 0.0
    %2129 = vmatpush1.msra.mxu0 0.0
    %2130 = vmatprep.subr.mxu0 0.0
    %2131 = vmatpush1.msra.mxu0 0.0
    %2132 = vmatprep.subr.mxu0 0.0
    %2133 = vmatpush1.msra.mxu0 0.0
    %2134 = vmatprep.subr.mxu0 0.0
    %2135 = vmatpush1.msra.mxu0 0.0
    %2136 = vmatprep.subr.mxu0 0.0
    %2137 = vmatpush1.msra.mxu0 0.0
    %2138 = vmatprep.subr.mxu0 0.0
    %2139 = vmatpush1.msra.mxu0 0.0
    %2140 = vmatprep.subr.mxu0 0.0
    %2141 = vmatpush1.msra.mxu0 0.0
    %2142 = vmatprep.subr.mxu0 0.0
    %2143 = vmatpush1.msra.mxu0 0.0
    %2144 = vmatprep.subr.mxu0 0.0
    %2145 = vmatpush1.msra.mxu0 0.0
    %2146 = vmatprep.subr.mxu0 0.0
    %2147 = vmatpush1.msra.mxu0 0.0
    %2148 = vmatprep.subr.mxu0 0.0
    %2149 = vmatpush1.msra.mxu0 0.0
    %2150 = vmatprep.subr.mxu0 0.0
    %2151 = vmatpush1.msra.mxu0 0.0
    %2152 = vmatprep.subr.mxu0 0.0
    %2153 = vmatpush1.msra.mxu0 0.0
    %2154 = vmatprep.subr.mxu0 0.0
    %2155 = vmatpush1.msra.mxu0 0.0
    %2156 = vmatprep.subr.mxu0 0.0
    %2157 = vmatpush1.msra.mxu0 0.0
    %2158 = vmatprep.subr.mxu0 0.0
    %2159 = vmatpush1.msra.mxu0 0.0
    %2160 = vmatprep.subr.mxu0 0.0
    %2161 = vmatpush1.msra.mxu0 0.0
    %2162 = vmatprep.subr.mxu0 0.0
    %2163 = vmatpush1.msra.mxu0 0.0
    %2164 = vmatprep.subr.mxu0 0.0
    %2165 = vmatpush1.msra.mxu0 0.0
    %2166 = vmatprep.subr.mxu0 0.0
    %2167 = vmatpush1.msra.mxu0 0.0
    %2168 = vmatprep.subr.mxu0 0.0
    %2169 = vmatpush1.msra.mxu0 0.0
    %2170 = vmatprep.subr.mxu0 0.0
    %2171 = vmatpush1.msra.mxu0 0.0
    %2172 = vmatprep.subr.mxu0 0.0
    %2173 = vmatpush1.msra.mxu0 0.0
    %2174 = vmatprep.subr.mxu0 0.0
    %2175 = vmatpush1.msra.mxu0 0.0
    %2176 = vmatprep.subr.mxu0 0.0
    %2177 = vmatpush1.msra.mxu0 0.0
    %2178 = vmatprep.mubr.f32.mxu0 0.0
    %2179 = vmatmul.mubr.f32.gmra.mrb[0].mxu0 %v2103
    %v2180 = vpop.f32.mrb[0].mxu0
    %v2181 = vadd.f32 %v2100, %v2180
    %v2182 = vpop.f32.mrb[0].mxu0
    %2183 = vmatprep.mubr.f32.mxu0 0.0
    %2184 = vmatmul.mubr.f32.gmra.mrb[0].mxu0 %v2106
    %v2185 = vpop.f32.mrb[0].mxu0
    %v2186 = vadd.f32 %v2100, %v2185
    %v2187 = vpop.f32.mrb[0].mxu0
    %2188 = vmatprep.mubr.f32.mxu0 0.0
    %2189 = vmatmul.mubr.f32.gmra.mrb[0].mxu0 %v2109
    %v2190 = vpop.f32.mrb[0].mxu0
    %v2191 = vadd.f32 %v2100, %v2190
    %v2192 = vpop.f32.mrb[0].mxu0
    %2193 = vmatprep.mubr.f32.mxu0 0.0
    %2194 = vmatmul.mubr.f32.gmra.mrb[0].mxu0 %v2112
    %v2195 = vpop.f32.mrb[0].mxu0
    %v2196 = vadd.f32 %v2100, %v2195
    %v2197 = vpop.f32.mrb[0].mxu0
    %2198 = vdwg.mxu0
    %v2199 = vmul.f32 %v2181, 0.5
    %v2200 = vmul.f32 %v2186, 0.5
    %v2201 = vmul.f32 %v2191, 0.5
    %v2202 = vmul.f32 %v2196, 0.5
    %v2203 = vmul.f32 %v2181, 0.044715
    %v2204 = vmul.f32 %v2186, 0.044715
    %v2205 = vmul.f32 %v2191, 0.044715
    %v2206 = vmul.f32 %v2196, 0.044715
    %v2207 = vmul.f32 %v2203, %v2181
    %v2208 = vmul.f32 %v2204, %v2186
    %v2209 = vmul.f32 %v2205, %v2191
    %v2210 = vmul.f32 %v2206, %v2196
    %v2211 = vmul.f32 %v2207, %v2181
    %v2212 = vmul.f32 %v2208, %v2186
    %v2213 = vmul.f32 %v2209, %v2191
    %v2214 = vmul.f32 %v2210, %v2196
    %v2215 = vadd.f32 %v2181, %v2211
    %v2216 = vadd.f32 %v2186, %v2212
    %v2217 = vadd.f32 %v2191, %v2213
    %v2218 = vadd.f32 %v2196, %v2214
    %v2219 = vmul.f32 %v2215, 0.7978846
    %v2220 = vmul.f32 %v2216, 0.7978846
    %v2221 = vmul.f32 %v2217, 0.7978846
    %v2222 = vmul.f32 %v2218, 0.7978846
    %v2223 = vtanh.pop %v2219
    %v2224 = vtanh.pop %v2220
    %v2225 = vtanh.pop %v2221
    %v2226 = vtanh.pop %v2222
    %v2227 = vadd.f32 %v2223, 1.0
    %v2228 = vadd.f32 %v2224, 1.0
    %v2229 = vadd.f32 %v2225, 1.0
    %v2230 = vadd.f32 %v2226, 1.0
    %v2231 = vmul.f32 %v2199, %v2227
    %v2232 = vmul.f32 %v2200, %v2228
    %v2233 = vmul.f32 %v2201, %v2229
    %v2234 = vmul.f32 %v2202, %v2230
    %v2235 = vld [vmem:[%s19] sm:$0xff]
    %v2236 = vld [vmem:[%s19 + $0x8] sm:$0xff]
    %v2237 = vld [vmem:[%s19 + $0x10] sm:$0xff]
    %v2238 = vld [vmem:[%s19 + $0x18] sm:$0xff]
    %v2239 = vld [vmem:[%s19 + $0x20] sm:$0xff]
    %v2240 = vld [vmem:[%s19 + $0x28] sm:$0xff]
    %v2241 = vld [vmem:[%s19 + $0x30] sm:$0xff]
    %v2242 = vld [vmem:[%s19 + $0x38] sm:$0xff]
    %v2244 = vsel %vm83, %v2231, 0
    %v2247 = vsel %vm83, %v2232, 0
    %v2250 = vsel %vm83, %v2233, 0
    %v2253 = vsel %vm83, %v2234, 0
    %2255 = vmatprep.subr.mxu0 0.0
    %2256 = vmatpush1.msra.mxu0 %v2235
    %2257 = vmatprep.subr.mxu0 0.0
    %2258 = vmatpush1.msra.mxu0 %v2236
    %2259 = vmatprep.subr.mxu0 0.0
    %2260 = vmatpush1.msra.mxu0 %v2237
    %2261 = vmatprep.subr.mxu0 0.0
    %2262 = vmatpush1.msra.mxu0 %v2238
    %2263 = vmatprep.subr.mxu0 0.0
    %2264 = vmatpush1.msra.mxu0 %v2239
    %2265 = vmatprep.subr.mxu0 0.0
    %2266 = vmatpush1.msra.mxu0 %v2240
    %2267 = vmatprep.subr.mxu0 0.0
    %2268 = vmatpush1.msra.mxu0 %v2241
    %2269 = vmatprep.subr.mxu0 0.0
    %2270 = vmatpush1.msra.mxu0 %v2242
    %2271 = vmatprep.subr.mxu0 0.0
    %2272 = vmatpush1.msra.mxu0 0.0
    %2273 = vmatprep.subr.mxu0 0.0
    %2274 = vmatpush1.msra.mxu0 0.0
    %2275 = vmatprep.subr.mxu0 0.0
    %2276 = vmatpush1.msra.mxu0 0.0
    %2277 = vmatprep.subr.mxu0 0.0
    %2278 = vmatpush1.msra.mxu0 0.0
    %2279 = vmatprep.subr.mxu0 0.0
    %2280 = vmatpush1.msra.mxu0 0.0
    %2281 = vmatprep.subr.mxu0 0.0
    %2282 = vmatpush1.msra.mxu0 0.0
    %2283 = vmatprep.subr.mxu0 0.0
    %2284 = vmatpush1.msra.mxu0 0.0
    %2285 = vmatprep.subr.mxu0 0.0
    %2286 = vmatpush1.msra.mxu0 0.0
    %2287 = vmatprep.subr.mxu0 0.0
    %2288 = vmatpush1.msra.mxu0 0.0
    %2289 = vmatprep.subr.mxu0 0.0
    %2290 = vmatpush1.msra.mxu0 0.0
    %2291 = vmatprep.subr.mxu0 0.0
    %2292 = vmatpush1.msra.mxu0 0.0
    %2293 = vmatprep.subr.mxu0 0.0
    %2294 = vmatpush1.msra.mxu0 0.0
    %2295 = vmatprep.subr.mxu0 0.0
    %2296 = vmatpush1.msra.mxu0 0.0
    %2297 = vmatprep.subr.mxu0 0.0
    %2298 = vmatpush1.msra.mxu0 0.0
    %2299 = vmatprep.subr.mxu0 0.0
    %2300 = vmatpush1.msra.mxu0 0.0
    %2301 = vmatprep.subr.mxu0 0.0
    %2302 = vmatpush1.msra.mxu0 0.0
    %2303 = vmatprep.subr.mxu0 0.0
    %2304 = vmatpush1.msra.mxu0 0.0
    %2305 = vmatprep.subr.mxu0 0.0
    %2306 = vmatpush1.msra.mxu0 0.0
    %2307 = vmatprep.subr.mxu0 0.0
    %2308 = vmatpush1.msra.mxu0 0.0
    %2309 = vmatprep.subr.mxu0 0.0
    %2310 = vmatpush1.msra.mxu0 0.0
    %2311 = vmatprep.subr.mxu0 0.0
    %2312 = vmatpush1.msra.mxu0 0.0
    %2313 = vmatprep.subr.mxu0 0.0
    %2314 = vmatpush1.msra.mxu0 0.0
    %2315 = vmatprep.subr.mxu0 0.0
    %2316 = vmatpush1.msra.mxu0 0.0
    %2317 = vmatprep.subr.mxu0 0.0
    %2318 = vmatpush1.msra.mxu0 0.0
    %2319 = vmatprep.mubr.f32.mxu0 0.0
    %2320 = vmatmul.mubr.f32.gmra.mrb[0].mxu0 %v2244
    %v2321 = vpop.f32.mrb[0].mxu0
    %v2322 = vadd.f32 0.0, %v2321
    %v2323 = vpop.f32.mrb[0].mxu0
    %2324 = vmatprep.mubr.f32.mxu0 0.0
    %2325 = vmatmul.mubr.f32.gmra.mrb[0].mxu0 %v2247
    %v2326 = vpop.f32.mrb[0].mxu0
    %v2327 = vadd.f32 0.0, %v2326
    %v2328 = vpop.f32.mrb[0].mxu0
    %2329 = vmatprep.mubr.f32.mxu0 0.0
    %2330 = vmatmul.mubr.f32.gmra.mrb[0].mxu0 %v2250
    %v2331 = vpop.f32.mrb[0].mxu0
    %v2332 = vadd.f32 0.0, %v2331
    %v2333 = vpop.f32.mrb[0].mxu0
    %2334 = vmatprep.mubr.f32.mxu0 0.0
    %2335 = vmatmul.mubr.f32.gmra.mrb[0].mxu0 %v2253
    %v2336 = vpop.f32.mrb[0].mxu0
    %v2337 = vadd.f32 0.0, %v2336
    %v2338 = vpop.f32.mrb[0].mxu0
    %2339 = vdwg.mxu0
    %v2340 = vadd.f32 %v2035, %v2322
    %v2341 = vadd.f32 %v2036, %v2327
    %v2342 = vadd.f32 %v2037, %v2332
    %v2343 = vadd.f32 %v2038, %v2337
    %v2344 = vld [vmem:[%s20] sm:$0x1]
    %v2346 = vlaneseq
    %v2347 = vshrl.u32 %v2346, 7
    %v2348 = vsub.s32 0, %v2347
    %v2349 = vrot.slane %v2344, %v2348
    %v2351 = vadd.f32 %v2340, %v2349
    %v2352 = vadd.f32 %v2341, %v2349
    %v2353 = vadd.f32 %v2342, %v2349
    %v2354 = vadd.f32 %v2343, %v2349
    %v2355 = vsel %vm285, %v2351, 0.0
    %2356 = vadd.xlane.f32.xlu0 %v2355
    %v2357 = vpop.xlane.xlu0 %2356
    %v2358 = vsel %vm285, %v2352, 0.0
    %2359 = vadd.xlane.f32.xlu0 %v2358
    %v2360 = vpop.xlane.xlu0 %2359
    %v2361 = vsel %vm285, %v2353, 0.0
    %2362 = vadd.xlane.f32.xlu0 %v2361
    %v2363 = vpop.xlane.xlu0 %2362
    %v2364 = vsel %vm285, %v2354, 0.0
    %2365 = vadd.xlane.f32.xlu0 %v2364
    %v2366 = vpop.xlane.xlu0 %2365
    %v2367 = vmul.f32 %v2357, %v298
    %v2368 = vmul.f32 %v2360, %v298
    %v2369 = vmul.f32 %v2363, %v298
    %v2370 = vmul.f32 %v2366, %v298
    %v2371 = vsub.f32 %v2351, %v2367
    %v2372 = vsub.f32 %v2352, %v2368
    %v2373 = vsub.f32 %v2353, %v2369
    %v2374 = vsub.f32 %v2354, %v2370
    %v2375 = vmul.f32 %v2371, %v2371
    %v2376 = vmul.f32 %v2372, %v2372
    %v2377 = vmul.f32 %v2373, %v2373
    %v2378 = vmul.f32 %v2374, %v2374
    %v2379 = vsel %vm285, %v2375, 0.0
    %2380 = vadd.xlane.f32.xlu0 %v2379
    %v2381 = vpop.xlane.xlu0 %2380
    %v2382 = vsel %vm285, %v2376, 0.0
    %2383 = vadd.xlane.f32.xlu0 %v2382
    %v2384 = vpop.xlane.xlu0 %2383
    %v2385 = vsel %vm285, %v2377, 0.0
    %2386 = vadd.xlane.f32.xlu0 %v2385
    %v2387 = vpop.xlane.xlu0 %2386
    %v2388 = vsel %vm285, %v2378, 0.0
    %2389 = vadd.xlane.f32.xlu0 %v2388
    %v2390 = vpop.xlane.xlu0 %2389
    %v2391 = vmul.f32 %v2381, %v298
    %v2392 = vmul.f32 %v2384, %v298
    %v2393 = vmul.f32 %v2387, %v298
    %v2394 = vmul.f32 %v2390, %v298
    %v2395 = vadd.f32 %v2391, 1e-05
    %v2396 = vadd.f32 %v2392, 1e-05
    %v2397 = vadd.f32 %v2393, 1e-05
    %v2398 = vadd.f32 %v2394, 1e-05
    %v2399 = vrsqrt.pop %v2395
    %v2400 = vrsqrt.pop %v2396
    %v2401 = vrsqrt.pop %v2397
    %v2402 = vrsqrt.pop %v2398
    %v2403 = vmul.f32 %v2371, %v2399
    %v2404 = vmul.f32 %v2372, %v2400
    %v2405 = vmul.f32 %v2373, %v2401
    %v2406 = vmul.f32 %v2374, %v2402
    %s2407 = scalar_lea.vmem %s9, 32
    %v2408 = vld [vmem:[%s2407] sm:$0xff]
    %v2409 = vld [vmem:[%s2407 + $0x8] sm:$0xff]
    %v2410 = vld [vmem:[%s2407 + $0x10] sm:$0xff]
    %v2411 = vld [vmem:[%s2407 + $0x18] sm:$0xff]
    %s2412 = scalar_lea.vmem %s12, 1
    %v2413 = vld [vmem:[%s2412] sm:$0x1]
    %v2415 = vlaneseq
    %v2416 = vshrl.u32 %v2415, 7
    %v2417 = vsub.s32 0, %v2416
    %v2418 = vrot.slane %v2413, %v2417
    %v2421 = vsel %vm285, %v2403, 0
    %v2424 = vsel %vm285, %v2404, 0
    %v2427 = vsel %vm285, %v2405, 0
    %v2430 = vsel %vm285, %v2406, 0
    %2432 = vmatprep.subr.mxu0 0.0
    %2433 = vmatpush1.msra.mxu0 %v2408
    %2434 = vmatprep.subr.mxu0 0.0
    %2435 = vmatpush1.msra.mxu0 %v2409
    %2436 = vmatprep.subr.mxu0 0.0
    %2437 = vmatpush1.msra.mxu0 %v2410
    %2438 = vmatprep.subr.mxu0 0.0
    %2439 = vmatpush1.msra.mxu0 %v2411
    %2440 = vmatprep.subr.mxu0 0.0
    %2441 = vmatpush1.msra.mxu0 0.0
    %2442 = vmatprep.subr.mxu0 0.0
    %2443 = vmatpush1.msra.mxu0 0.0
    %2444 = vmatprep.subr.mxu0 0.0
    %2445 = vmatpush1.msra.mxu0 0.0
    %2446 = vmatprep.subr.mxu0 0.0
    %2447 = vmatpush1.msra.mxu0 0.0
    %2448 = vmatprep.subr.mxu0 0.0
    %2449 = vmatpush1.msra.mxu0 0.0
    %2450 = vmatprep.subr.mxu0 0.0
    %2451 = vmatpush1.msra.mxu0 0.0
    %2452 = vmatprep.subr.mxu0 0.0
    %2453 = vmatpush1.msra.mxu0 0.0
    %2454 = vmatprep.subr.mxu0 0.0
    %2455 = vmatpush1.msra.mxu0 0.0
    %2456 = vmatprep.subr.mxu0 0.0
    %2457 = vmatpush1.msra.mxu0 0.0
    %2458 = vmatprep.subr.mxu0 0.0
    %2459 = vmatpush1.msra.mxu0 0.0
    %2460 = vmatprep.subr.mxu0 0.0
    %2461 = vmatpush1.msra.mxu0 0.0
    %2462 = vmatprep.subr.mxu0 0.0
    %2463 = vmatpush1.msra.mxu0 0.0
    %2464 = vmatprep.subr.mxu0 0.0
    %2465 = vmatpush1.msra.mxu0 0.0
    %2466 = vmatprep.subr.mxu0 0.0
    %2467 = vmatpush1.msra.mxu0 0.0
    %2468 = vmatprep.subr.mxu0 0.0
    %2469 = vmatpush1.msra.mxu0 0.0
    %2470 = vmatprep.subr.mxu0 0.0
    %2471 = vmatpush1.msra.mxu0 0.0
    %2472 = vmatprep.subr.mxu0 0.0
    %2473 = vmatpush1.msra.mxu0 0.0
    %2474 = vmatprep.subr.mxu0 0.0
    %2475 = vmatpush1.msra.mxu0 0.0
    %2476 = vmatprep.subr.mxu0 0.0
    %2477 = vmatpush1.msra.mxu0 0.0
    %2478 = vmatprep.subr.mxu0 0.0
    %2479 = vmatpush1.msra.mxu0 0.0
    %2480 = vmatprep.subr.mxu0 0.0
    %2481 = vmatpush1.msra.mxu0 0.0
    %2482 = vmatprep.subr.mxu0 0.0
    %2483 = vmatpush1.msra.mxu0 0.0
    %2484 = vmatprep.subr.mxu0 0.0
    %2485 = vmatpush1.msra.mxu0 0.0
    %2486 = vmatprep.subr.mxu0 0.0
    %2487 = vmatpush1.msra.mxu0 0.0
    %2488 = vmatprep.subr.mxu0 0.0
    %2489 = vmatpush1.msra.mxu0 0.0
    %2490 = vmatprep.subr.mxu0 0.0
    %2491 = vmatpush1.msra.mxu0 0.0
    %2492 = vmatprep.subr.mxu0 0.0
    %2493 = vmatpush1.msra.mxu0 0.0
    %2494 = vmatprep.subr.mxu0 0.0
    %2495 = vmatpush1.msra.mxu0 0.0
    %2496 = vmatprep.mubr.f32.mxu0 0.0
    %2497 = vmatmul.mubr.f32.gmra.mrb[0].mxu0 %v2421
    %v2498 = vpop.f32.mrb[0].mxu0
    %v2499 = vadd.f32 %v2418, %v2498
    %v2500 = vpop.f32.mrb[0].mxu0
    %2501 = vmatprep.mubr.f32.mxu0 0.0
    %2502 = vmatmul.mubr.f32.gmra.mrb[0].mxu0 %v2424
    %v2503 = vpop.f32.mrb[0].mxu0
    %v2504 = vadd.f32 %v2418, %v2503
    %v2505 = vpop.f32.mrb[0].mxu0
    %2506 = vmatprep.mubr.f32.mxu0 0.0
    %2507 = vmatmul.mubr.f32.gmra.mrb[0].mxu0 %v2427
    %v2508 = vpop.f32.mrb[0].mxu0
    %v2509 = vadd.f32 %v2418, %v2508
    %v2510 = vpop.f32.mrb[0].mxu0
    %2511 = vmatprep.mubr.f32.mxu0 0.0
    %2512 = vmatmul.mubr.f32.gmra.mrb[0].mxu0 %v2430
    %v2513 = vpop.f32.mrb[0].mxu0
    %v2514 = vadd.f32 %v2418, %v2513
    %v2515 = vpop.f32.mrb[0].mxu0
    %2516 = vdwg.mxu0
    %s2517 = scalar_lea.vmem %s10, 32
    %v2518 = vld [vmem:[%s2517] sm:$0xff]
    %v2519 = vld [vmem:[%s2517 + $0x8] sm:$0xff]
    %v2520 = vld [vmem:[%s2517 + $0x10] sm:$0xff]
    %v2521 = vld [vmem:[%s2517 + $0x18] sm:$0xff]
    %s2522 = scalar_lea.vmem %s13, 1
    %v2523 = vld [vmem:[%s2522] sm:$0x1]
    %v2525 = vlaneseq
    %v2526 = vshrl.u32 %v2525, 7
    %v2527 = vsub.s32 0, %v2526
    %v2528 = vrot.slane %v2523, %v2527
    %2530 = vmatprep.subr.mxu0 0.0
    %2531 = vmatpush1.msra.mxu0 %v2518
    %2532 = vmatprep.subr.mxu0 0.0
    %2533 = vmatpush1.msra.mxu0 %v2519
    %2534 = vmatprep.subr.mxu0 0.0
    %2535 = vmatpush1.msra.mxu0 %v2520
    %2536 = vmatprep.subr.mxu0 0.0
    %2537 = vmatpush1.msra.mxu0 %v2521
    %2538 = vmatprep.subr.mxu0 0.0
    %2539 = vmatpush1.msra.mxu0 0.0
    %2540 = vmatprep.subr.mxu0 0.0
    %2541 = vmatpush1.msra.mxu0 0.0
    %2542 = vmatprep.subr.mxu0 0.0
    %2543 = vmatpush1.msra.mxu0 0.0
    %2544 = vmatprep.subr.mxu0 0.0
    %2545 = vmatpush1.msra.mxu0 0.0
    %2546 = vmatprep.subr.mxu0 0.0
    %2547 = vmatpush1.msra.mxu0 0.0
    %2548 = vmatprep.subr.mxu0 0.0
    %2549 = vmatpush1.msra.mxu0 0.0
    %2550 = vmatprep.subr.mxu0 0.0
    %2551 = vmatpush1.msra.mxu0 0.0
    %2552 = vmatprep.subr.mxu0 0.0
    %2553 = vmatpush1.msra.mxu0 0.0
    %2554 = vmatprep.subr.mxu0 0.0
    %2555 = vmatpush1.msra.mxu0 0.0
    %2556 = vmatprep.subr.mxu0 0.0
    %2557 = vmatpush1.msra.mxu0 0.0
    %2558 = vmatprep.subr.mxu0 0.0
    %2559 = vmatpush1.msra.mxu0 0.0
    %2560 = vmatprep.subr.mxu0 0.0
    %2561 = vmatpush1.msra.mxu0 0.0
    %2562 = vmatprep.subr.mxu0 0.0
    %2563 = vmatpush1.msra.mxu0 0.0
    %2564 = vmatprep.subr.mxu0 0.0
    %2565 = vmatpush1.msra.mxu0 0.0
    %2566 = vmatprep.subr.mxu0 0.0
    %2567 = vmatpush1.msra.mxu0 0.0
    %2568 = vmatprep.subr.mxu0 0.0
    %2569 = vmatpush1.msra.mxu0 0.0
    %2570 = vmatprep.subr.mxu0 0.0
    %2571 = vmatpush1.msra.mxu0 0.0
    %2572 = vmatprep.subr.mxu0 0.0
    %2573 = vmatpush1.msra.mxu0 0.0
    %2574 = vmatprep.subr.mxu0 0.0
    %2575 = vmatpush1.msra.mxu0 0.0
    %2576 = vmatprep.subr.mxu0 0.0
    %2577 = vmatpush1.msra.mxu0 0.0
    %2578 = vmatprep.subr.mxu0 0.0
    %2579 = vmatpush1.msra.mxu0 0.0
    %2580 = vmatprep.subr.mxu0 0.0
    %2581 = vmatpush1.msra.mxu0 0.0
    %2582 = vmatprep.subr.mxu0 0.0
    %2583 = vmatpush1.msra.mxu0 0.0
    %2584 = vmatprep.subr.mxu0 0.0
    %2585 = vmatpush1.msra.mxu0 0.0
    %2586 = vmatprep.subr.mxu0 0.0
    %2587 = vmatpush1.msra.mxu0 0.0
    %2588 = vmatprep.subr.mxu0 0.0
    %2589 = vmatpush1.msra.mxu0 0.0
    %2590 = vmatprep.subr.mxu0 0.0
    %2591 = vmatpush1.msra.mxu0 0.0
    %2592 = vmatprep.subr.mxu0 0.0
    %2593 = vmatpush1.msra.mxu0 0.0
    %2594 = vmatprep.mubr.f32.mxu0 0.0
    %2595 = vmatmul.mubr.f32.gmra.mrb[0].mxu0 %v2421
    %v2596 = vpop.f32.mrb[0].mxu0
    %v2597 = vadd.f32 %v2528, %v2596
    %v2598 = vpop.f32.mrb[0].mxu0
    %2599 = vmatprep.mubr.f32.mxu0 0.0
    %2600 = vmatmul.mubr.f32.gmra.mrb[0].mxu0 %v2424
    %v2601 = vpop.f32.mrb[0].mxu0
    %v2602 = vadd.f32 %v2528, %v2601
    %v2603 = vpop.f32.mrb[0].mxu0
    %2604 = vmatprep.mubr.f32.mxu0 0.0
    %2605 = vmatmul.mubr.f32.gmra.mrb[0].mxu0 %v2427
    %v2606 = vpop.f32.mrb[0].mxu0
    %v2607 = vadd.f32 %v2528, %v2606
    %v2608 = vpop.f32.mrb[0].mxu0
    %2609 = vmatprep.mubr.f32.mxu0 0.0
    %2610 = vmatmul.mubr.f32.gmra.mrb[0].mxu0 %v2430
    %v2611 = vpop.f32.mrb[0].mxu0
    %v2612 = vadd.f32 %v2528, %v2611
    %v2613 = vpop.f32.mrb[0].mxu0
    %2614 = vdwg.mxu0
    %s2615 = scalar_lea.vmem %s11, 32
    %v2616 = vld [vmem:[%s2615] sm:$0xff]
    %v2617 = vld [vmem:[%s2615 + $0x8] sm:$0xff]
    %v2618 = vld [vmem:[%s2615 + $0x10] sm:$0xff]
    %v2619 = vld [vmem:[%s2615 + $0x18] sm:$0xff]
    %s2620 = scalar_lea.vmem %s14, 1
    %v2621 = vld [vmem:[%s2620] sm:$0x1]
    %v2623 = vlaneseq
    %v2624 = vshrl.u32 %v2623, 7
    %v2625 = vsub.s32 0, %v2624
    %v2626 = vrot.slane %v2621, %v2625
    %2628 = vmatprep.subr.mxu0 0.0
    %2629 = vmatpush1.msra.mxu0 %v2616
    %2630 = vmatprep.subr.mxu0 0.0
    %2631 = vmatpush1.msra.mxu0 %v2617
    %2632 = vmatprep.subr.mxu0 0.0
    %2633 = vmatpush1.msra.mxu0 %v2618
    %2634 = vmatprep.subr.mxu0 0.0
    %2635 = vmatpush1.msra.mxu0 %v2619
    %2636 = vmatprep.subr.mxu0 0.0
    %2637 = vmatpush1.msra.mxu0 0.0
    %2638 = vmatprep.subr.mxu0 0.0
    %2639 = vmatpush1.msra.mxu0 0.0
    %2640 = vmatprep.subr.mxu0 0.0
    %2641 = vmatpush1.msra.mxu0 0.0
    %2642 = vmatprep.subr.mxu0 0.0
    %2643 = vmatpush1.msra.mxu0 0.0
    %2644 = vmatprep.subr.mxu0 0.0
    %2645 = vmatpush1.msra.mxu0 0.0
    %2646 = vmatprep.subr.mxu0 0.0
    %2647 = vmatpush1.msra.mxu0 0.0
    %2648 = vmatprep.subr.mxu0 0.0
    %2649 = vmatpush1.msra.mxu0 0.0
    %2650 = vmatprep.subr.mxu0 0.0
    %2651 = vmatpush1.msra.mxu0 0.0
    %2652 = vmatprep.subr.mxu0 0.0
    %2653 = vmatpush1.msra.mxu0 0.0
    %2654 = vmatprep.subr.mxu0 0.0
    %2655 = vmatpush1.msra.mxu0 0.0
    %2656 = vmatprep.subr.mxu0 0.0
    %2657 = vmatpush1.msra.mxu0 0.0
    %2658 = vmatprep.subr.mxu0 0.0
    %2659 = vmatpush1.msra.mxu0 0.0
    %2660 = vmatprep.subr.mxu0 0.0
    %2661 = vmatpush1.msra.mxu0 0.0
    %2662 = vmatprep.subr.mxu0 0.0
    %2663 = vmatpush1.msra.mxu0 0.0
    %2664 = vmatprep.subr.mxu0 0.0
    %2665 = vmatpush1.msra.mxu0 0.0
    %2666 = vmatprep.subr.mxu0 0.0
    %2667 = vmatpush1.msra.mxu0 0.0
    %2668 = vmatprep.subr.mxu0 0.0
    %2669 = vmatpush1.msra.mxu0 0.0
    %2670 = vmatprep.subr.mxu0 0.0
    %2671 = vmatpush1.msra.mxu0 0.0
    %2672 = vmatprep.subr.mxu0 0.0
    %2673 = vmatpush1.msra.mxu0 0.0
    %2674 = vmatprep.subr.mxu0 0.0
    %2675 = vmatpush1.msra.mxu0 0.0
    %2676 = vmatprep.subr.mxu0 0.0
    %2677 = vmatpush1.msra.mxu0 0.0
    %2678 = vmatprep.subr.mxu0 0.0
    %2679 = vmatpush1.msra.mxu0 0.0
    %2680 = vmatprep.subr.mxu0 0.0
    %2681 = vmatpush1.msra.mxu0 0.0
    %2682 = vmatprep.subr.mxu0 0.0
    %2683 = vmatpush1.msra.mxu0 0.0
    %2684 = vmatprep.subr.mxu0 0.0
    %2685 = vmatpush1.msra.mxu0 0.0
    %2686 = vmatprep.subr.mxu0 0.0
    %2687 = vmatpush1.msra.mxu0 0.0
    %2688 = vmatprep.subr.mxu0 0.0
    %2689 = vmatpush1.msra.mxu0 0.0
    %2690 = vmatprep.subr.mxu0 0.0
    %2691 = vmatpush1.msra.mxu0 0.0
    %2692 = vmatprep.mubr.f32.mxu0 0.0
    %2693 = vmatmul.mubr.f32.gmra.mrb[0].mxu0 %v2421
    %v2694 = vpop.f32.mrb[0].mxu0
    %v2695 = vadd.f32 %v2626, %v2694
    %v2696 = vpop.f32.mrb[0].mxu0
    %2697 = vmatprep.mubr.f32.mxu0 0.0
    %2698 = vmatmul.mubr.f32.gmra.mrb[0].mxu0 %v2424
    %v2699 = vpop.f32.mrb[0].mxu0
    %v2700 = vadd.f32 %v2626, %v2699
    %v2701 = vpop.f32.mrb[0].mxu0
    %2702 = vmatprep.mubr.f32.mxu0 0.0
    %2703 = vmatmul.mubr.f32.gmra.mrb[0].mxu0 %v2427
    %v2704 = vpop.f32.mrb[0].mxu0
    %v2705 = vadd.f32 %v2626, %v2704
    %v2706 = vpop.f32.mrb[0].mxu0
    %2707 = vmatprep.mubr.f32.mxu0 0.0
    %2708 = vmatmul.mubr.f32.gmra.mrb[0].mxu0 %v2430
    %v2709 = vpop.f32.mrb[0].mxu0
    %v2710 = vadd.f32 %v2626, %v2709
    %v2711 = vpop.f32.mrb[0].mxu0
    %2712 = vdwg.mxu0
    %2717 = vrot.lane.b32.xlu0 %v2499, 112
    %v2718 = vpop.permute.xlu0 %2717
    %2719 = vrot.lane.b32.xlu0 %v2504, 112
    %v2720 = vpop.permute.xlu0 %2719
    %2721 = vrot.lane.b32.xlu0 %v2509, 112
    %v2722 = vpop.permute.xlu0 %2721
    %2723 = vrot.lane.b32.xlu0 %v2514, 112
    %v2724 = vpop.permute.xlu0 %2723
    %2725 = vrot.lane.b32.xlu0 %v2499, 96
    %v2726 = vpop.permute.xlu0 %2725
    %2727 = vrot.lane.b32.xlu0 %v2504, 96
    %v2728 = vpop.permute.xlu0 %2727
    %2729 = vrot.lane.b32.xlu0 %v2509, 96
    %v2730 = vpop.permute.xlu0 %2729
    %2731 = vrot.lane.b32.xlu0 %v2514, 96
    %v2732 = vpop.permute.xlu0 %2731
    %2733 = vrot.lane.b32.xlu0 %v2499, 80
    %v2734 = vpop.permute.xlu0 %2733
    %2735 = vrot.lane.b32.xlu0 %v2504, 80
    %v2736 = vpop.permute.xlu0 %2735
    %2737 = vrot.lane.b32.xlu0 %v2509, 80
    %v2738 = vpop.permute.xlu0 %2737
    %2739 = vrot.lane.b32.xlu0 %v2514, 80
    %v2740 = vpop.permute.xlu0 %2739
    %2745 = vrot.lane.b32.xlu0 %v2597, 112
    %v2746 = vpop.permute.xlu0 %2745
    %2747 = vrot.lane.b32.xlu0 %v2602, 112
    %v2748 = vpop.permute.xlu0 %2747
    %2749 = vrot.lane.b32.xlu0 %v2607, 112
    %v2750 = vpop.permute.xlu0 %2749
    %2751 = vrot.lane.b32.xlu0 %v2612, 112
    %v2752 = vpop.permute.xlu0 %2751
    %2753 = vrot.lane.b32.xlu0 %v2597, 96
    %v2754 = vpop.permute.xlu0 %2753
    %2755 = vrot.lane.b32.xlu0 %v2602, 96
    %v2756 = vpop.permute.xlu0 %2755
    %2757 = vrot.lane.b32.xlu0 %v2607, 96
    %v2758 = vpop.permute.xlu0 %2757
    %2759 = vrot.lane.b32.xlu0 %v2612, 96
    %v2760 = vpop.permute.xlu0 %2759
    %2761 = vrot.lane.b32.xlu0 %v2597, 80
    %v2762 = vpop.permute.xlu0 %2761
    %2763 = vrot.lane.b32.xlu0 %v2602, 80
    %v2764 = vpop.permute.xlu0 %2763
    %2765 = vrot.lane.b32.xlu0 %v2607, 80
    %v2766 = vpop.permute.xlu0 %2765
    %2767 = vrot.lane.b32.xlu0 %v2612, 80
    %v2768 = vpop.permute.xlu0 %2767
    %2773 = vrot.lane.b32.xlu0 %v2695, 112
    %v2774 = vpop.permute.xlu0 %2773
    %2775 = vrot.lane.b32.xlu0 %v2700, 112
    %v2776 = vpop.permute.xlu0 %2775
    %2777 = vrot.lane.b32.xlu0 %v2705, 112
    %v2778 = vpop.permute.xlu0 %2777
    %2779 = vrot.lane.b32.xlu0 %v2710, 112
    %v2780 = vpop.permute.xlu0 %2779
    %2785 = vrot.lane.b32.xlu0 %v2695, 96
    %v2786 = vpop.permute.xlu0 %2785
    %2787 = vrot.lane.b32.xlu0 %v2700, 96
    %v2788 = vpop.permute.xlu0 %2787
    %2789 = vrot.lane.b32.xlu0 %v2705, 96
    %v2790 = vpop.permute.xlu0 %2789
    %2791 = vrot.lane.b32.xlu0 %v2710, 96
    %v2792 = vpop.permute.xlu0 %2791
    %2797 = vrot.lane.b32.xlu0 %v2695, 80
    %v2798 = vpop.permute.xlu0 %2797
    %2799 = vrot.lane.b32.xlu0 %v2700, 80
    %v2800 = vpop.permute.xlu0 %2799
    %2801 = vrot.lane.b32.xlu0 %v2705, 80
    %v2802 = vpop.permute.xlu0 %2801
    %2803 = vrot.lane.b32.xlu0 %v2710, 80
    %v2804 = vpop.permute.xlu0 %2803
    %v2809 = vsel %vm857, %v2499, 0
    %v2811 = vsel %vm857, %v2504, 0
    %v2813 = vsel %vm857, %v2509, 0
    %v2815 = vsel %vm857, %v2514, 0
    %v2817 = vsel %vm857, %v2597, 0
    %v2819 = vsel %vm857, %v2602, 0
    %v2821 = vsel %vm857, %v2607, 0
    %v2823 = vsel %vm857, %v2612, 0
    %2825 = vmatprep.subr.mxu0 0.0
    %2826 = vmatpush1.xpose.msra.mxu0 %v2817
    %2827 = vmatprep.subr.mxu0 0.0
    %2828 = vmatpush1.xpose.msra.mxu0 %v2819
    %2829 = vmatprep.subr.mxu0 0.0
    %2830 = vmatpush1.xpose.msra.mxu0 %v2821
    %2831 = vmatprep.subr.mxu0 0.0
    %2832 = vmatpush1.xpose.msra.mxu0 %v2823
    %2833 = vmatprep.subr.mxu0 0.0
    %2834 = vmatpush1.xpose.msra.mxu0 0.0
    %2835 = vmatprep.subr.mxu0 0.0
    %2836 = vmatpush1.xpose.msra.mxu0 0.0
    %2837 = vmatprep.subr.mxu0 0.0
    %2838 = vmatpush1.xpose.msra.mxu0 0.0
    %2839 = vmatprep.subr.mxu0 0.0
    %2840 = vmatpush1.xpose.msra.mxu0 0.0
    %2841 = vmatprep.subr.mxu0 0.0
    %2842 = vmatpush1.xpose.msra.mxu0 0.0
    %2843 = vmatprep.subr.mxu0 0.0
    %2844 = vmatpush1.xpose.msra.mxu0 0.0
    %2845 = vmatprep.subr.mxu0 0.0
    %2846 = vmatpush1.xpose.msra.mxu0 0.0
    %2847 = vmatprep.subr.mxu0 0.0
    %2848 = vmatpush1.xpose.msra.mxu0 0.0
    %2849 = vmatprep.subr.mxu0 0.0
    %2850 = vmatpush1.xpose.msra.mxu0 0.0
    %2851 = vmatprep.subr.mxu0 0.0
    %2852 = vmatpush1.xpose.msra.mxu0 0.0
    %2853 = vmatprep.subr.mxu0 0.0
    %2854 = vmatpush1.xpose.msra.mxu0 0.0
    %2855 = vmatprep.subr.mxu0 0.0
    %2856 = vmatpush1.xpose.msra.mxu0 0.0
    %2857 = vmatprep.subr.mxu0 0.0
    %2858 = vmatpush1.xpose.msra.mxu0 0.0
    %2859 = vmatprep.subr.mxu0 0.0
    %2860 = vmatpush1.xpose.msra.mxu0 0.0
    %2861 = vmatprep.subr.mxu0 0.0
    %2862 = vmatpush1.xpose.msra.mxu0 0.0
    %2863 = vmatprep.subr.mxu0 0.0
    %2864 = vmatpush1.xpose.msra.mxu0 0.0
    %2865 = vmatprep.subr.mxu0 0.0
    %2866 = vmatpush1.xpose.msra.mxu0 0.0
    %2867 = vmatprep.subr.mxu0 0.0
    %2868 = vmatpush1.xpose.msra.mxu0 0.0
    %2869 = vmatprep.subr.mxu0 0.0
    %2870 = vmatpush1.xpose.msra.mxu0 0.0
    %2871 = vmatprep.subr.mxu0 0.0
    %2872 = vmatpush1.xpose.msra.mxu0 0.0
    %2873 = vmatprep.subr.mxu0 0.0
    %2874 = vmatpush1.xpose.msra.mxu0 0.0
    %2875 = vmatprep.subr.mxu0 0.0
    %2876 = vmatpush1.xpose.msra.mxu0 0.0
    %2877 = vmatprep.subr.mxu0 0.0
    %2878 = vmatpush1.xpose.msra.mxu0 0.0
    %2879 = vmatprep.subr.mxu0 0.0
    %2880 = vmatpush1.xpose.msra.mxu0 0.0
    %2881 = vmatprep.subr.mxu0 0.0
    %2882 = vmatpush1.xpose.msra.mxu0 0.0
    %2883 = vmatprep.subr.mxu0 0.0
    %2884 = vmatpush1.xpose.msra.mxu0 0.0
    %2885 = vmatprep.subr.mxu0 0.0
    %2886 = vmatpush1.xpose.msra.mxu0 0.0
    %2887 = vmatprep.subr.mxu0 0.0
    %2888 = vmatpush1.xpose.msra.mxu0 0.0
    %2889 = vmatprep.mubr.f32.mxu0 0.0
    %2890 = vmatmul.mubr.f32.gmra.mrb[0].mxu0 %v2809
    %v2891 = vpop.f32.mrb[0].mxu0
    %v2892 = vadd.f32 0.0, %v2891
    %v2893 = vpop.f32.mrb[0].mxu0
    %2894 = vmatprep.mubr.f32.mxu0 0.0
    %2895 = vmatmul.mubr.f32.gmra.mrb[0].mxu0 %v2811
    %v2896 = vpop.f32.mrb[0].mxu0
    %v2897 = vadd.f32 0.0, %v2896
    %v2898 = vpop.f32.mrb[0].mxu0
    %2899 = vmatprep.mubr.f32.mxu0 0.0
    %2900 = vmatmul.mubr.f32.gmra.mrb[0].mxu0 %v2813
    %v2901 = vpop.f32.mrb[0].mxu0
    %v2902 = vadd.f32 0.0, %v2901
    %v2903 = vpop.f32.mrb[0].mxu0
    %2904 = vmatprep.mubr.f32.mxu0 0.0
    %2905 = vmatmul.mubr.f32.gmra.mrb[0].mxu0 %v2815
    %v2906 = vpop.f32.mrb[0].mxu0
    %v2907 = vadd.f32 0.0, %v2906
    %v2908 = vpop.f32.mrb[0].mxu0
    %2909 = vdwg.mxu0
    %v2910 = vsel %vm857, %v2718, 0
    %v2912 = vsel %vm857, %v2720, 0
    %v2914 = vsel %vm857, %v2722, 0
    %v2916 = vsel %vm857, %v2724, 0
    %v2918 = vsel %vm857, %v2746, 0
    %v2920 = vsel %vm857, %v2748, 0
    %v2922 = vsel %vm857, %v2750, 0
    %v2924 = vsel %vm857, %v2752, 0
    %2926 = vmatprep.subr.mxu0 0.0
    %2927 = vmatpush1.xpose.msra.mxu0 %v2918
    %2928 = vmatprep.subr.mxu0 0.0
    %2929 = vmatpush1.xpose.msra.mxu0 %v2920
    %2930 = vmatprep.subr.mxu0 0.0
    %2931 = vmatpush1.xpose.msra.mxu0 %v2922
    %2932 = vmatprep.subr.mxu0 0.0
    %2933 = vmatpush1.xpose.msra.mxu0 %v2924
    %2934 = vmatprep.subr.mxu0 0.0
    %2935 = vmatpush1.xpose.msra.mxu0 0.0
    %2936 = vmatprep.subr.mxu0 0.0
    %2937 = vmatpush1.xpose.msra.mxu0 0.0
    %2938 = vmatprep.subr.mxu0 0.0
    %2939 = vmatpush1.xpose.msra.mxu0 0.0
    %2940 = vmatprep.subr.mxu0 0.0
    %2941 = vmatpush1.xpose.msra.mxu0 0.0
    %2942 = vmatprep.subr.mxu0 0.0
    %2943 = vmatpush1.xpose.msra.mxu0 0.0
    %2944 = vmatprep.subr.mxu0 0.0
    %2945 = vmatpush1.xpose.msra.mxu0 0.0
    %2946 = vmatprep.subr.mxu0 0.0
    %2947 = vmatpush1.xpose.msra.mxu0 0.0
    %2948 = vmatprep.subr.mxu0 0.0
    %2949 = vmatpush1.xpose.msra.mxu0 0.0
    %2950 = vmatprep.subr.mxu0 0.0
    %2951 = vmatpush1.xpose.msra.mxu0 0.0
    %2952 = vmatprep.subr.mxu0 0.0
    %2953 = vmatpush1.xpose.msra.mxu0 0.0
    %2954 = vmatprep.subr.mxu0 0.0
    %2955 = vmatpush1.xpose.msra.mxu0 0.0
    %2956 = vmatprep.subr.mxu0 0.0
    %2957 = vmatpush1.xpose.msra.mxu0 0.0
    %2958 = vmatprep.subr.mxu0 0.0
    %2959 = vmatpush1.xpose.msra.mxu0 0.0
    %2960 = vmatprep.subr.mxu0 0.0
    %2961 = vmatpush1.xpose.msra.mxu0 0.0
    %2962 = vmatprep.subr.mxu0 0.0
    %2963 = vmatpush1.xpose.msra.mxu0 0.0
    %2964 = vmatprep.subr.mxu0 0.0
    %2965 = vmatpush1.xpose.msra.mxu0 0.0
    %2966 = vmatprep.subr.mxu0 0.0
    %2967 = vmatpush1.xpose.msra.mxu0 0.0
    %2968 = vmatprep.subr.mxu0 0.0
    %2969 = vmatpush1.xpose.msra.mxu0 0.0
    %2970 = vmatprep.subr.mxu0 0.0
    %2971 = vmatpush1.xpose.msra.mxu0 0.0
    %2972 = vmatprep.subr.mxu0 0.0
    %2973 = vmatpush1.xpose.msra.mxu0 0.0
    %2974 = vmatprep.subr.mxu0 0.0
    %2975 = vmatpush1.xpose.msra.mxu0 0.0
    %2976 = vmatprep.subr.mxu0 0.0
    %2977 = vmatpush1.xpose.msra.mxu0 0.0
    %2978 = vmatprep.subr.mxu0 0.0
    %2979 = vmatpush1.xpose.msra.mxu0 0.0
    %2980 = vmatprep.subr.mxu0 0.0
    %2981 = vmatpush1.xpose.msra.mxu0 0.0
    %2982 = vmatprep.subr.mxu0 0.0
    %2983 = vmatpush1.xpose.msra.mxu0 0.0
    %2984 = vmatprep.subr.mxu0 0.0
    %2985 = vmatpush1.xpose.msra.mxu0 0.0
    %2986 = vmatprep.subr.mxu0 0.0
    %2987 = vmatpush1.xpose.msra.mxu0 0.0
    %2988 = vmatprep.subr.mxu0 0.0
    %2989 = vmatpush1.xpose.msra.mxu0 0.0
    %2990 = vmatprep.mubr.f32.mxu0 0.0
    %2991 = vmatmul.mubr.f32.gmra.mrb[0].mxu0 %v2910
    %v2992 = vpop.f32.mrb[0].mxu0
    %v2993 = vadd.f32 0.0, %v2992
    %v2994 = vpop.f32.mrb[0].mxu0
    %2995 = vmatprep.mubr.f32.mxu0 0.0
    %2996 = vmatmul.mubr.f32.gmra.mrb[0].mxu0 %v2912
    %v2997 = vpop.f32.mrb[0].mxu0
    %v2998 = vadd.f32 0.0, %v2997
    %v2999 = vpop.f32.mrb[0].mxu0
    %3000 = vmatprep.mubr.f32.mxu0 0.0
    %3001 = vmatmul.mubr.f32.gmra.mrb[0].mxu0 %v2914
    %v3002 = vpop.f32.mrb[0].mxu0
    %v3003 = vadd.f32 0.0, %v3002
    %v3004 = vpop.f32.mrb[0].mxu0
    %3005 = vmatprep.mubr.f32.mxu0 0.0
    %3006 = vmatmul.mubr.f32.gmra.mrb[0].mxu0 %v2916
    %v3007 = vpop.f32.mrb[0].mxu0
    %v3008 = vadd.f32 0.0, %v3007
    %v3009 = vpop.f32.mrb[0].mxu0
    %3010 = vdwg.mxu0
    %v3011 = vsel %vm857, %v2726, 0
    %v3013 = vsel %vm857, %v2728, 0
    %v3015 = vsel %vm857, %v2730, 0
    %v3017 = vsel %vm857, %v2732, 0
    %v3019 = vsel %vm857, %v2754, 0
    %v3021 = vsel %vm857, %v2756, 0
    %v3023 = vsel %vm857, %v2758, 0
    %v3025 = vsel %vm857, %v2760, 0
    %3027 = vmatprep.subr.mxu0 0.0
    %3028 = vmatpush1.xpose.msra.mxu0 %v3019
    %3029 = vmatprep.subr.mxu0 0.0
    %3030 = vmatpush1.xpose.msra.mxu0 %v3021
    %3031 = vmatprep.subr.mxu0 0.0
    %3032 = vmatpush1.xpose.msra.mxu0 %v3023
    %3033 = vmatprep.subr.mxu0 0.0
    %3034 = vmatpush1.xpose.msra.mxu0 %v3025
    %3035 = vmatprep.subr.mxu0 0.0
    %3036 = vmatpush1.xpose.msra.mxu0 0.0
    %3037 = vmatprep.subr.mxu0 0.0
    %3038 = vmatpush1.xpose.msra.mxu0 0.0
    %3039 = vmatprep.subr.mxu0 0.0
    %3040 = vmatpush1.xpose.msra.mxu0 0.0
    %3041 = vmatprep.subr.mxu0 0.0
    %3042 = vmatpush1.xpose.msra.mxu0 0.0
    %3043 = vmatprep.subr.mxu0 0.0
    %3044 = vmatpush1.xpose.msra.mxu0 0.0
    %3045 = vmatprep.subr.mxu0 0.0
    %3046 = vmatpush1.xpose.msra.mxu0 0.0
    %3047 = vmatprep.subr.mxu0 0.0
    %3048 = vmatpush1.xpose.msra.mxu0 0.0
    %3049 = vmatprep.subr.mxu0 0.0
    %3050 = vmatpush1.xpose.msra.mxu0 0.0
    %3051 = vmatprep.subr.mxu0 0.0
    %3052 = vmatpush1.xpose.msra.mxu0 0.0
    %3053 = vmatprep.subr.mxu0 0.0
    %3054 = vmatpush1.xpose.msra.mxu0 0.0
    %3055 = vmatprep.subr.mxu0 0.0
    %3056 = vmatpush1.xpose.msra.mxu0 0.0
    %3057 = vmatprep.subr.mxu0 0.0
    %3058 = vmatpush1.xpose.msra.mxu0 0.0
    %3059 = vmatprep.subr.mxu0 0.0
    %3060 = vmatpush1.xpose.msra.mxu0 0.0
    %3061 = vmatprep.subr.mxu0 0.0
    %3062 = vmatpush1.xpose.msra.mxu0 0.0
    %3063 = vmatprep.subr.mxu0 0.0
    %3064 = vmatpush1.xpose.msra.mxu0 0.0
    %3065 = vmatprep.subr.mxu0 0.0
    %3066 = vmatpush1.xpose.msra.mxu0 0.0
    %3067 = vmatprep.subr.mxu0 0.0
    %3068 = vmatpush1.xpose.msra.mxu0 0.0
    %3069 = vmatprep.subr.mxu0 0.0
    %3070 = vmatpush1.xpose.msra.mxu0 0.0
    %3071 = vmatprep.subr.mxu0 0.0
    %3072 = vmatpush1.xpose.msra.mxu0 0.0
    %3073 = vmatprep.subr.mxu0 0.0
    %3074 = vmatpush1.xpose.msra.mxu0 0.0
    %3075 = vmatprep.subr.mxu0 0.0
    %3076 = vmatpush1.xpose.msra.mxu0 0.0
    %3077 = vmatprep.subr.mxu0 0.0
    %3078 = vmatpush1.xpose.msra.mxu0 0.0
    %3079 = vmatprep.subr.mxu0 0.0
    %3080 = vmatpush1.xpose.msra.mxu0 0.0
    %3081 = vmatprep.subr.mxu0 0.0
    %3082 = vmatpush1.xpose.msra.mxu0 0.0
    %3083 = vmatprep.subr.mxu0 0.0
    %3084 = vmatpush1.xpose.msra.mxu0 0.0
    %3085 = vmatprep.subr.mxu0 0.0
    %3086 = vmatpush1.xpose.msra.mxu0 0.0
    %3087 = vmatprep.subr.mxu0 0.0
    %3088 = vmatpush1.xpose.msra.mxu0 0.0
    %3089 = vmatprep.subr.mxu0 0.0
    %3090 = vmatpush1.xpose.msra.mxu0 0.0
    %3091 = vmatprep.mubr.f32.mxu0 0.0
    %3092 = vmatmul.mubr.f32.gmra.mrb[0].mxu0 %v3011
    %v3093 = vpop.f32.mrb[0].mxu0
    %v3094 = vadd.f32 0.0, %v3093
    %v3095 = vpop.f32.mrb[0].mxu0
    %3096 = vmatprep.mubr.f32.mxu0 0.0
    %3097 = vmatmul.mubr.f32.gmra.mrb[0].mxu0 %v3013
    %v3098 = vpop.f32.mrb[0].mxu0
    %v3099 = vadd.f32 0.0, %v3098
    %v3100 = vpop.f32.mrb[0].mxu0
    %3101 = vmatprep.mubr.f32.mxu0 0.0
    %3102 = vmatmul.mubr.f32.gmra.mrb[0].mxu0 %v3015
    %v3103 = vpop.f32.mrb[0].mxu0
    %v3104 = vadd.f32 0.0, %v3103
    %v3105 = vpop.f32.mrb[0].mxu0
    %3106 = vmatprep.mubr.f32.mxu0 0.0
    %3107 = vmatmul.mubr.f32.gmra.mrb[0].mxu0 %v3017
    %v3108 = vpop.f32.mrb[0].mxu0
    %v3109 = vadd.f32 0.0, %v3108
    %v3110 = vpop.f32.mrb[0].mxu0
    %3111 = vdwg.mxu0
    %v3112 = vsel %vm857, %v2734, 0
    %v3114 = vsel %vm857, %v2736, 0
    %v3116 = vsel %vm857, %v2738, 0
    %v3118 = vsel %vm857, %v2740, 0
    %v3120 = vsel %vm857, %v2762, 0
    %v3122 = vsel %vm857, %v2764, 0
    %v3124 = vsel %vm857, %v2766, 0
    %v3126 = vsel %vm857, %v2768, 0
    %3128 = vmatprep.subr.mxu0 0.0
    %3129 = vmatpush1.xpose.msra.mxu0 %v3120
    %3130 = vmatprep.subr.mxu0 0.0
    %3131 = vmatpush1.xpose.msra.mxu0 %v3122
    %3132 = vmatprep.subr.mxu0 0.0
    %3133 = vmatpush1.xpose.msra.mxu0 %v3124
    %3134 = vmatprep.subr.mxu0 0.0
    %3135 = vmatpush1.xpose.msra.mxu0 %v3126
    %3136 = vmatprep.subr.mxu0 0.0
    %3137 = vmatpush1.xpose.msra.mxu0 0.0
    %3138 = vmatprep.subr.mxu0 0.0
    %3139 = vmatpush1.xpose.msra.mxu0 0.0
    %3140 = vmatprep.subr.mxu0 0.0
    %3141 = vmatpush1.xpose.msra.mxu0 0.0
    %3142 = vmatprep.subr.mxu0 0.0
    %3143 = vmatpush1.xpose.msra.mxu0 0.0
    %3144 = vmatprep.subr.mxu0 0.0
    %3145 = vmatpush1.xpose.msra.mxu0 0.0
    %3146 = vmatprep.subr.mxu0 0.0
    %3147 = vmatpush1.xpose.msra.mxu0 0.0
    %3148 = vmatprep.subr.mxu0 0.0
    %3149 = vmatpush1.xpose.msra.mxu0 0.0
    %3150 = vmatprep.subr.mxu0 0.0
    %3151 = vmatpush1.xpose.msra.mxu0 0.0
    %3152 = vmatprep.subr.mxu0 0.0
    %3153 = vmatpush1.xpose.msra.mxu0 0.0
    %3154 = vmatprep.subr.mxu0 0.0
    %3155 = vmatpush1.xpose.msra.mxu0 0.0
    %3156 = vmatprep.subr.mxu0 0.0
    %3157 = vmatpush1.xpose.msra.mxu0 0.0
    %3158 = vmatprep.subr.mxu0 0.0
    %3159 = vmatpush1.xpose.msra.mxu0 0.0
    %3160 = vmatprep.subr.mxu0 0.0
    %3161 = vmatpush1.xpose.msra.mxu0 0.0
    %3162 = vmatprep.subr.mxu0 0.0
    %3163 = vmatpush1.xpose.msra.mxu0 0.0
    %3164 = vmatprep.subr.mxu0 0.0
    %3165 = vmatpush1.xpose.msra.mxu0 0.0
    %3166 = vmatprep.subr.mxu0 0.0
    %3167 = vmatpush1.xpose.msra.mxu0 0.0
    %3168 = vmatprep.subr.mxu0 0.0
    %3169 = vmatpush1.xpose.msra.mxu0 0.0
    %3170 = vmatprep.subr.mxu0 0.0
    %3171 = vmatpush1.xpose.msra.mxu0 0.0
    %3172 = vmatprep.subr.mxu0 0.0
    %3173 = vmatpush1.xpose.msra.mxu0 0.0
    %3174 = vmatprep.subr.mxu0 0.0
    %3175 = vmatpush1.xpose.msra.mxu0 0.0
    %3176 = vmatprep.subr.mxu0 0.0
    %3177 = vmatpush1.xpose.msra.mxu0 0.0
    %3178 = vmatprep.subr.mxu0 0.0
    %3179 = vmatpush1.xpose.msra.mxu0 0.0
    %3180 = vmatprep.subr.mxu0 0.0
    %3181 = vmatpush1.xpose.msra.mxu0 0.0
    %3182 = vmatprep.subr.mxu0 0.0
    %3183 = vmatpush1.xpose.msra.mxu0 0.0
    %3184 = vmatprep.subr.mxu0 0.0
    %3185 = vmatpush1.xpose.msra.mxu0 0.0
    %3186 = vmatprep.subr.mxu0 0.0
    %3187 = vmatpush1.xpose.msra.mxu0 0.0
    %3188 = vmatprep.subr.mxu0 0.0
    %3189 = vmatpush1.xpose.msra.mxu0 0.0
    %3190 = vmatprep.subr.mxu0 0.0
    %3191 = vmatpush1.xpose.msra.mxu0 0.0
    %3192 = vmatprep.mubr.f32.mxu0 0.0
    %3193 = vmatmul.mubr.f32.gmra.mrb[0].mxu0 %v3112
    %v3194 = vpop.f32.mrb[0].mxu0
    %v3195 = vadd.f32 0.0, %v3194
    %v3196 = vpop.f32.mrb[0].mxu0
    %3197 = vmatprep.mubr.f32.mxu0 0.0
    %3198 = vmatmul.mubr.f32.gmra.mrb[0].mxu0 %v3114
    %v3199 = vpop.f32.mrb[0].mxu0
    %v3200 = vadd.f32 0.0, %v3199
    %v3201 = vpop.f32.mrb[0].mxu0
    %3202 = vmatprep.mubr.f32.mxu0 0.0
    %3203 = vmatmul.mubr.f32.gmra.mrb[0].mxu0 %v3116
    %v3204 = vpop.f32.mrb[0].mxu0
    %v3205 = vadd.f32 0.0, %v3204
    %v3206 = vpop.f32.mrb[0].mxu0
    %3207 = vmatprep.mubr.f32.mxu0 0.0
    %3208 = vmatmul.mubr.f32.gmra.mrb[0].mxu0 %v3118
    %v3209 = vpop.f32.mrb[0].mxu0
    %v3210 = vadd.f32 0.0, %v3209
    %v3211 = vpop.f32.mrb[0].mxu0
    %3212 = vdwg.mxu0
    %v3213 = vmul.f32 %v2892, 0.25
    %v3214 = vmul.f32 %v2897, 0.25
    %v3215 = vmul.f32 %v2902, 0.25
    %v3216 = vmul.f32 %v2907, 0.25
    %v3217 = vmul.f32 %v2993, 0.25
    %v3218 = vmul.f32 %v2998, 0.25
    %v3219 = vmul.f32 %v3003, 0.25
    %v3220 = vmul.f32 %v3008, 0.25
    %v3221 = vmul.f32 %v3094, 0.25
    %v3222 = vmul.f32 %v3099, 0.25
    %v3223 = vmul.f32 %v3104, 0.25
    %v3224 = vmul.f32 %v3109, 0.25
    %v3225 = vmul.f32 %v3195, 0.25
    %v3226 = vmul.f32 %v3200, 0.25
    %v3227 = vmul.f32 %v3205, 0.25
    %v3228 = vmul.f32 %v3210, 0.25
    %v3229 = vadd.f32 %v3213, %v405
    %v3230 = vadd.f32 %v3214, %v406
    %v3231 = vadd.f32 %v3215, %v407
    %v3232 = vadd.f32 %v3216, %v408
    %v3233 = vadd.f32 %v3217, %v405
    %v3234 = vadd.f32 %v3218, %v406
    %v3235 = vadd.f32 %v3219, %v407
    %v3236 = vadd.f32 %v3220, %v408
    %v3237 = vadd.f32 %v3221, %v405
    %v3238 = vadd.f32 %v3222, %v406
    %v3239 = vadd.f32 %v3223, %v407
    %v3240 = vadd.f32 %v3224, %v408
    %v3241 = vadd.f32 %v3225, %v405
    %v3242 = vadd.f32 %v3226, %v406
    %v3243 = vadd.f32 %v3227, %v407
    %v3244 = vadd.f32 %v3228, %v408
    %v3245 = vsel %vm285, %v3229, -inf
    %3246 = vmax.xlane.f32.xlu0 %v3245
    %v3247 = vpop.xlane.xlu0 %3246
    %v3248 = vsel %vm285, %v3230, -inf
    %3249 = vmax.xlane.f32.xlu0 %v3248
    %v3250 = vpop.xlane.xlu0 %3249
    %v3251 = vsel %vm285, %v3231, -inf
    %3252 = vmax.xlane.f32.xlu0 %v3251
    %v3253 = vpop.xlane.xlu0 %3252
    %v3254 = vsel %vm285, %v3232, -inf
    %3255 = vmax.xlane.f32.xlu0 %v3254
    %v3256 = vpop.xlane.xlu0 %3255
    %v3257 = vsel %vm285, %v3233, -inf
    %3258 = vmax.xlane.f32.xlu0 %v3257
    %v3259 = vpop.xlane.xlu0 %3258
    %v3260 = vsel %vm285, %v3234, -inf
    %3261 = vmax.xlane.f32.xlu0 %v3260
    %v3262 = vpop.xlane.xlu0 %3261
    %v3263 = vsel %vm285, %v3235, -inf
    %3264 = vmax.xlane.f32.xlu0 %v3263
    %v3265 = vpop.xlane.xlu0 %3264
    %v3266 = vsel %vm285, %v3236, -inf
    %3267 = vmax.xlane.f32.xlu0 %v3266
    %v3268 = vpop.xlane.xlu0 %3267
    %v3269 = vsel %vm285, %v3237, -inf
    %3270 = vmax.xlane.f32.xlu0 %v3269
    %v3271 = vpop.xlane.xlu0 %3270
    %v3272 = vsel %vm285, %v3238, -inf
    %3273 = vmax.xlane.f32.xlu0 %v3272
    %v3274 = vpop.xlane.xlu0 %3273
    %v3275 = vsel %vm285, %v3239, -inf
    %3276 = vmax.xlane.f32.xlu0 %v3275
    %v3277 = vpop.xlane.xlu0 %3276
    %v3278 = vsel %vm285, %v3240, -inf
    %3279 = vmax.xlane.f32.xlu0 %v3278
    %v3280 = vpop.xlane.xlu0 %3279
    %v3281 = vsel %vm285, %v3241, -inf
    %3282 = vmax.xlane.f32.xlu0 %v3281
    %v3283 = vpop.xlane.xlu0 %3282
    %v3284 = vsel %vm285, %v3242, -inf
    %3285 = vmax.xlane.f32.xlu0 %v3284
    %v3286 = vpop.xlane.xlu0 %3285
    %v3287 = vsel %vm285, %v3243, -inf
    %3288 = vmax.xlane.f32.xlu0 %v3287
    %v3289 = vpop.xlane.xlu0 %3288
    %v3290 = vsel %vm285, %v3244, -inf
    %3291 = vmax.xlane.f32.xlu0 %v3290
    %v3292 = vpop.xlane.xlu0 %3291
    %v3293 = vsub.f32 %v3229, %v3247
    %v3294 = vsub.f32 %v3230, %v3250
    %v3295 = vsub.f32 %v3231, %v3253
    %v3296 = vsub.f32 %v3232, %v3256
    %v3297 = vsub.f32 %v3233, %v3259
    %v3298 = vsub.f32 %v3234, %v3262
    %v3299 = vsub.f32 %v3235, %v3265
    %v3300 = vsub.f32 %v3236, %v3268
    %v3301 = vsub.f32 %v3237, %v3271
    %v3302 = vsub.f32 %v3238, %v3274
    %v3303 = vsub.f32 %v3239, %v3277
    %v3304 = vsub.f32 %v3240, %v3280
    %v3305 = vsub.f32 %v3241, %v3283
    %v3306 = vsub.f32 %v3242, %v3286
    %v3307 = vsub.f32 %v3243, %v3289
    %v3308 = vsub.f32 %v3244, %v3292
    %v3309 = vmul.f32 %v3293, 1.442695
    %v3310 = vpow.pop %v3309
    %v3311 = vmul.f32 %v3294, 1.442695
    %v3312 = vpow.pop %v3311
    %v3313 = vmul.f32 %v3295, 1.442695
    %v3314 = vpow.pop %v3313
    %v3315 = vmul.f32 %v3296, 1.442695
    %v3316 = vpow.pop %v3315
    %v3317 = vmul.f32 %v3297, 1.442695
    %v3318 = vpow.pop %v3317
    %v3319 = vmul.f32 %v3298, 1.442695
    %v3320 = vpow.pop %v3319
    %v3321 = vmul.f32 %v3299, 1.442695
    %v3322 = vpow.pop %v3321
    %v3323 = vmul.f32 %v3300, 1.442695
    %v3324 = vpow.pop %v3323
    %v3325 = vmul.f32 %v3301, 1.442695
    %v3326 = vpow.pop %v3325
    %v3327 = vmul.f32 %v3302, 1.442695
    %v3328 = vpow.pop %v3327
    %v3329 = vmul.f32 %v3303, 1.442695
    %v3330 = vpow.pop %v3329
    %v3331 = vmul.f32 %v3304, 1.442695
    %v3332 = vpow.pop %v3331
    %v3333 = vmul.f32 %v3305, 1.442695
    %v3334 = vpow.pop %v3333
    %v3335 = vmul.f32 %v3306, 1.442695
    %v3336 = vpow.pop %v3335
    %v3337 = vmul.f32 %v3307, 1.442695
    %v3338 = vpow.pop %v3337
    %v3339 = vmul.f32 %v3308, 1.442695
    %v3340 = vpow.pop %v3339
    %v3341 = vsel %vm285, %v3310, 0.0
    %3342 = vadd.xlane.f32.xlu0 %v3341
    %v3343 = vpop.xlane.xlu0 %3342
    %v3344 = vsel %vm285, %v3312, 0.0
    %3345 = vadd.xlane.f32.xlu0 %v3344
    %v3346 = vpop.xlane.xlu0 %3345
    %v3347 = vsel %vm285, %v3314, 0.0
    %3348 = vadd.xlane.f32.xlu0 %v3347
    %v3349 = vpop.xlane.xlu0 %3348
    %v3350 = vsel %vm285, %v3316, 0.0
    %3351 = vadd.xlane.f32.xlu0 %v3350
    %v3352 = vpop.xlane.xlu0 %3351
    %v3353 = vsel %vm285, %v3318, 0.0
    %3354 = vadd.xlane.f32.xlu0 %v3353
    %v3355 = vpop.xlane.xlu0 %3354
    %v3356 = vsel %vm285, %v3320, 0.0
    %3357 = vadd.xlane.f32.xlu0 %v3356
    %v3358 = vpop.xlane.xlu0 %3357
    %v3359 = vsel %vm285, %v3322, 0.0
    %3360 = vadd.xlane.f32.xlu0 %v3359
    %v3361 = vpop.xlane.xlu0 %3360
    %v3362 = vsel %vm285, %v3324, 0.0
    %3363 = vadd.xlane.f32.xlu0 %v3362
    %v3364 = vpop.xlane.xlu0 %3363
    %v3365 = vsel %vm285, %v3326, 0.0
    %3366 = vadd.xlane.f32.xlu0 %v3365
    %v3367 = vpop.xlane.xlu0 %3366
    %v3368 = vsel %vm285, %v3328, 0.0
    %3369 = vadd.xlane.f32.xlu0 %v3368
    %v3370 = vpop.xlane.xlu0 %3369
    %v3371 = vsel %vm285, %v3330, 0.0
    %3372 = vadd.xlane.f32.xlu0 %v3371
    %v3373 = vpop.xlane.xlu0 %3372
    %v3374 = vsel %vm285, %v3332, 0.0
    %3375 = vadd.xlane.f32.xlu0 %v3374
    %v3376 = vpop.xlane.xlu0 %3375
    %v3377 = vsel %vm285, %v3334, 0.0
    %3378 = vadd.xlane.f32.xlu0 %v3377
    %v3379 = vpop.xlane.xlu0 %3378
    %v3380 = vsel %vm285, %v3336, 0.0
    %3381 = vadd.xlane.f32.xlu0 %v3380
    %v3382 = vpop.xlane.xlu0 %3381
    %v3383 = vsel %vm285, %v3338, 0.0
    %3384 = vadd.xlane.f32.xlu0 %v3383
    %v3385 = vpop.xlane.xlu0 %3384
    %v3386 = vsel %vm285, %v3340, 0.0
    %3387 = vadd.xlane.f32.xlu0 %v3386
    %v3388 = vpop.xlane.xlu0 %3387
    %v3389 = vrcp.pop %v3343
    %v3390 = vrcp.pop %v3346
    %v3391 = vrcp.pop %v3349
    %v3392 = vrcp.pop %v3352
    %v3393 = vrcp.pop %v3355
    %v3394 = vrcp.pop %v3358
    %v3395 = vrcp.pop %v3361
    %v3396 = vrcp.pop %v3364
    %v3397 = vrcp.pop %v3367
    %v3398 = vrcp.pop %v3370
    %v3399 = vrcp.pop %v3373
    %v3400 = vrcp.pop %v3376
    %v3401 = vrcp.pop %v3379
    %v3402 = vrcp.pop %v3382
    %v3403 = vrcp.pop %v3385
    %v3404 = vrcp.pop %v3388
    %v3405 = vmul.f32 %v3310, %v3389
    %v3406 = vmul.f32 %v3312, %v3390
    %v3407 = vmul.f32 %v3314, %v3391
    %v3408 = vmul.f32 %v3316, %v3392
    %v3409 = vmul.f32 %v3318, %v3393
    %v3410 = vmul.f32 %v3320, %v3394
    %v3411 = vmul.f32 %v3322, %v3395
    %v3412 = vmul.f32 %v3324, %v3396
    %v3413 = vmul.f32 %v3326, %v3397
    %v3414 = vmul.f32 %v3328, %v3398
    %v3415 = vmul.f32 %v3330, %v3399
    %v3416 = vmul.f32 %v3332, %v3400
    %v3417 = vmul.f32 %v3334, %v3401
    %v3418 = vmul.f32 %v3336, %v3402
    %v3419 = vmul.f32 %v3338, %v3403
    %v3420 = vmul.f32 %v3340, %v3404
    %v3422 = vsel %vm285, %v3405, 0
    %v3425 = vsel %vm285, %v3406, 0
    %v3428 = vsel %vm285, %v3407, 0
    %v3431 = vsel %vm285, %v3408, 0
    %3433 = vmatprep.subr.mxu0 0.0
    %3434 = vmatpush1.msra.mxu0 %v2695
    %3435 = vmatprep.subr.mxu0 0.0
    %3436 = vmatpush1.msra.mxu0 %v2700
    %3437 = vmatprep.subr.mxu0 0.0
    %3438 = vmatpush1.msra.mxu0 %v2705
    %3439 = vmatprep.subr.mxu0 0.0
    %3440 = vmatpush1.msra.mxu0 %v2710
    %3441 = vmatprep.subr.mxu0 0.0
    %3442 = vmatpush1.msra.mxu0 0.0
    %3443 = vmatprep.subr.mxu0 0.0
    %3444 = vmatpush1.msra.mxu0 0.0
    %3445 = vmatprep.subr.mxu0 0.0
    %3446 = vmatpush1.msra.mxu0 0.0
    %3447 = vmatprep.subr.mxu0 0.0
    %3448 = vmatpush1.msra.mxu0 0.0
    %3449 = vmatprep.subr.mxu0 0.0
    %3450 = vmatpush1.msra.mxu0 0.0
    %3451 = vmatprep.subr.mxu0 0.0
    %3452 = vmatpush1.msra.mxu0 0.0
    %3453 = vmatprep.subr.mxu0 0.0
    %3454 = vmatpush1.msra.mxu0 0.0
    %3455 = vmatprep.subr.mxu0 0.0
    %3456 = vmatpush1.msra.mxu0 0.0
    %3457 = vmatprep.subr.mxu0 0.0
    %3458 = vmatpush1.msra.mxu0 0.0
    %3459 = vmatprep.subr.mxu0 0.0
    %3460 = vmatpush1.msra.mxu0 0.0
    %3461 = vmatprep.subr.mxu0 0.0
    %3462 = vmatpush1.msra.mxu0 0.0
    %3463 = vmatprep.subr.mxu0 0.0
    %3464 = vmatpush1.msra.mxu0 0.0
    %3465 = vmatprep.subr.mxu0 0.0
    %3466 = vmatpush1.msra.mxu0 0.0
    %3467 = vmatprep.subr.mxu0 0.0
    %3468 = vmatpush1.msra.mxu0 0.0
    %3469 = vmatprep.subr.mxu0 0.0
    %3470 = vmatpush1.msra.mxu0 0.0
    %3471 = vmatprep.subr.mxu0 0.0
    %3472 = vmatpush1.msra.mxu0 0.0
    %3473 = vmatprep.subr.mxu0 0.0
    %3474 = vmatpush1.msra.mxu0 0.0
    %3475 = vmatprep.subr.mxu0 0.0
    %3476 = vmatpush1.msra.mxu0 0.0
    %3477 = vmatprep.subr.mxu0 0.0
    %3478 = vmatpush1.msra.mxu0 0.0
    %3479 = vmatprep.subr.mxu0 0.0
    %3480 = vmatpush1.msra.mxu0 0.0
    %3481 = vmatprep.subr.mxu0 0.0
    %3482 = vmatpush1.msra.mxu0 0.0
    %3483 = vmatprep.subr.mxu0 0.0
    %3484 = vmatpush1.msra.mxu0 0.0
    %3485 = vmatprep.subr.mxu0 0.0
    %3486 = vmatpush1.msra.mxu0 0.0
    %3487 = vmatprep.subr.mxu0 0.0
    %3488 = vmatpush1.msra.mxu0 0.0
    %3489 = vmatprep.subr.mxu0 0.0
    %3490 = vmatpush1.msra.mxu0 0.0
    %3491 = vmatprep.subr.mxu0 0.0
    %3492 = vmatpush1.msra.mxu0 0.0
    %3493 = vmatprep.subr.mxu0 0.0
    %3494 = vmatpush1.msra.mxu0 0.0
    %3495 = vmatprep.subr.mxu0 0.0
    %3496 = vmatpush1.msra.mxu0 0.0
    %3497 = vmatprep.mubr.f32.mxu0 0.0
    %3498 = vmatmul.mubr.f32.gmra.mrb[0].mxu0 %v3422
    %v3499 = vpop.f32.mrb[0].mxu0
    %v3500 = vadd.f32 0.0, %v3499
    %v3501 = vpop.f32.mrb[0].mxu0
    %3502 = vmatprep.mubr.f32.mxu0 0.0
    %3503 = vmatmul.mubr.f32.gmra.mrb[0].mxu0 %v3425
    %v3504 = vpop.f32.mrb[0].mxu0
    %v3505 = vadd.f32 0.0, %v3504
    %v3506 = vpop.f32.mrb[0].mxu0
    %3507 = vmatprep.mubr.f32.mxu0 0.0
    %3508 = vmatmul.mubr.f32.gmra.mrb[0].mxu0 %v3428
    %v3509 = vpop.f32.mrb[0].mxu0
    %v3510 = vadd.f32 0.0, %v3509
    %v3511 = vpop.f32.mrb[0].mxu0
    %3512 = vmatprep.mubr.f32.mxu0 0.0
    %3513 = vmatmul.mubr.f32.gmra.mrb[0].mxu0 %v3431
    %v3514 = vpop.f32.mrb[0].mxu0
    %v3515 = vadd.f32 0.0, %v3514
    %v3516 = vpop.f32.mrb[0].mxu0
    %3517 = vdwg.mxu0
    %v3519 = vsel %vm285, %v3409, 0
    %v3522 = vsel %vm285, %v3410, 0
    %v3525 = vsel %vm285, %v3411, 0
    %v3528 = vsel %vm285, %v3412, 0
    %3530 = vmatprep.subr.mxu0 0.0
    %3531 = vmatpush1.msra.mxu0 %v2774
    %3532 = vmatprep.subr.mxu0 0.0
    %3533 = vmatpush1.msra.mxu0 %v2776
    %3534 = vmatprep.subr.mxu0 0.0
    %3535 = vmatpush1.msra.mxu0 %v2778
    %3536 = vmatprep.subr.mxu0 0.0
    %3537 = vmatpush1.msra.mxu0 %v2780
    %3538 = vmatprep.subr.mxu0 0.0
    %3539 = vmatpush1.msra.mxu0 0.0
    %3540 = vmatprep.subr.mxu0 0.0
    %3541 = vmatpush1.msra.mxu0 0.0
    %3542 = vmatprep.subr.mxu0 0.0
    %3543 = vmatpush1.msra.mxu0 0.0
    %3544 = vmatprep.subr.mxu0 0.0
    %3545 = vmatpush1.msra.mxu0 0.0
    %3546 = vmatprep.subr.mxu0 0.0
    %3547 = vmatpush1.msra.mxu0 0.0
    %3548 = vmatprep.subr.mxu0 0.0
    %3549 = vmatpush1.msra.mxu0 0.0
    %3550 = vmatprep.subr.mxu0 0.0
    %3551 = vmatpush1.msra.mxu0 0.0
    %3552 = vmatprep.subr.mxu0 0.0
    %3553 = vmatpush1.msra.mxu0 0.0
    %3554 = vmatprep.subr.mxu0 0.0
    %3555 = vmatpush1.msra.mxu0 0.0
    %3556 = vmatprep.subr.mxu0 0.0
    %3557 = vmatpush1.msra.mxu0 0.0
    %3558 = vmatprep.subr.mxu0 0.0
    %3559 = vmatpush1.msra.mxu0 0.0
    %3560 = vmatprep.subr.mxu0 0.0
    %3561 = vmatpush1.msra.mxu0 0.0
    %3562 = vmatprep.subr.mxu0 0.0
    %3563 = vmatpush1.msra.mxu0 0.0
    %3564 = vmatprep.subr.mxu0 0.0
    %3565 = vmatpush1.msra.mxu0 0.0
    %3566 = vmatprep.subr.mxu0 0.0
    %3567 = vmatpush1.msra.mxu0 0.0
    %3568 = vmatprep.subr.mxu0 0.0
    %3569 = vmatpush1.msra.mxu0 0.0
    %3570 = vmatprep.subr.mxu0 0.0
    %3571 = vmatpush1.msra.mxu0 0.0
    %3572 = vmatprep.subr.mxu0 0.0
    %3573 = vmatpush1.msra.mxu0 0.0
    %3574 = vmatprep.subr.mxu0 0.0
    %3575 = vmatpush1.msra.mxu0 0.0
    %3576 = vmatprep.subr.mxu0 0.0
    %3577 = vmatpush1.msra.mxu0 0.0
    %3578 = vmatprep.subr.mxu0 0.0
    %3579 = vmatpush1.msra.mxu0 0.0
    %3580 = vmatprep.subr.mxu0 0.0
    %3581 = vmatpush1.msra.mxu0 0.0
    %3582 = vmatprep.subr.mxu0 0.0
    %3583 = vmatpush1.msra.mxu0 0.0
    %3584 = vmatprep.subr.mxu0 0.0
    %3585 = vmatpush1.msra.mxu0 0.0
    %3586 = vmatprep.subr.mxu0 0.0
    %3587 = vmatpush1.msra.mxu0 0.0
    %3588 = vmatprep.subr.mxu0 0.0
    %3589 = vmatpush1.msra.mxu0 0.0
    %3590 = vmatprep.subr.mxu0 0.0
    %3591 = vmatpush1.msra.mxu0 0.0
    %3592 = vmatprep.subr.mxu0 0.0
    %3593 = vmatpush1.msra.mxu0 0.0
    %3594 = vmatprep.mubr.f32.mxu0 0.0
    %3595 = vmatmul.mubr.f32.gmra.mrb[0].mxu0 %v3519
    %v3596 = vpop.f32.mrb[0].mxu0
    %v3597 = vadd.f32 0.0, %v3596
    %v3598 = vpop.f32.mrb[0].mxu0
    %3599 = vmatprep.mubr.f32.mxu0 0.0
    %3600 = vmatmul.mubr.f32.gmra.mrb[0].mxu0 %v3522
    %v3601 = vpop.f32.mrb[0].mxu0
    %v3602 = vadd.f32 0.0, %v3601
    %v3603 = vpop.f32.mrb[0].mxu0
    %3604 = vmatprep.mubr.f32.mxu0 0.0
    %3605 = vmatmul.mubr.f32.gmra.mrb[0].mxu0 %v3525
    %v3606 = vpop.f32.mrb[0].mxu0
    %v3607 = vadd.f32 0.0, %v3606
    %v3608 = vpop.f32.mrb[0].mxu0
    %3609 = vmatprep.mubr.f32.mxu0 0.0
    %3610 = vmatmul.mubr.f32.gmra.mrb[0].mxu0 %v3528
    %v3611 = vpop.f32.mrb[0].mxu0
    %v3612 = vadd.f32 0.0, %v3611
    %v3613 = vpop.f32.mrb[0].mxu0
    %3614 = vdwg.mxu0
    %v3616 = vsel %vm285, %v3413, 0
    %v3619 = vsel %vm285, %v3414, 0
    %v3622 = vsel %vm285, %v3415, 0
    %v3625 = vsel %vm285, %v3416, 0
    %3627 = vmatprep.subr.mxu0 0.0
    %3628 = vmatpush1.msra.mxu0 %v2786
    %3629 = vmatprep.subr.mxu0 0.0
    %3630 = vmatpush1.msra.mxu0 %v2788
    %3631 = vmatprep.subr.mxu0 0.0
    %3632 = vmatpush1.msra.mxu0 %v2790
    %3633 = vmatprep.subr.mxu0 0.0
    %3634 = vmatpush1.msra.mxu0 %v2792
    %3635 = vmatprep.subr.mxu0 0.0
    %3636 = vmatpush1.msra.mxu0 0.0
    %3637 = vmatprep.subr.mxu0 0.0
    %3638 = vmatpush1.msra.mxu0 0.0
    %3639 = vmatprep.subr.mxu0 0.0
    %3640 = vmatpush1.msra.mxu0 0.0
    %3641 = vmatprep.subr.mxu0 0.0
    %3642 = vmatpush1.msra.mxu0 0.0
    %3643 = vmatprep.subr.mxu0 0.0
    %3644 = vmatpush1.msra.mxu0 0.0
    %3645 = vmatprep.subr.mxu0 0.0
    %3646 = vmatpush1.msra.mxu0 0.0
    %3647 = vmatprep.subr.mxu0 0.0
    %3648 = vmatpush1.msra.mxu0 0.0
    %3649 = vmatprep.subr.mxu0 0.0
    %3650 = vmatpush1.msra.mxu0 0.0
    %3651 = vmatprep.subr.mxu0 0.0
    %3652 = vmatpush1.msra.mxu0 0.0
    %3653 = vmatprep.subr.mxu0 0.0
    %3654 = vmatpush1.msra.mxu0 0.0
    %3655 = vmatprep.subr.mxu0 0.0
    %3656 = vmatpush1.msra.mxu0 0.0
    %3657 = vmatprep.subr.mxu0 0.0
    %3658 = vmatpush1.msra.mxu0 0.0
    %3659 = vmatprep.subr.mxu0 0.0
    %3660 = vmatpush1.msra.mxu0 0.0
    %3661 = vmatprep.subr.mxu0 0.0
    %3662 = vmatpush1.msra.mxu0 0.0
    %3663 = vmatprep.subr.mxu0 0.0
    %3664 = vmatpush1.msra.mxu0 0.0
    %3665 = vmatprep.subr.mxu0 0.0
    %3666 = vmatpush1.msra.mxu0 0.0
    %3667 = vmatprep.subr.mxu0 0.0
    %3668 = vmatpush1.msra.mxu0 0.0
    %3669 = vmatprep.subr.mxu0 0.0
    %3670 = vmatpush1.msra.mxu0 0.0
    %3671 = vmatprep.subr.mxu0 0.0
    %3672 = vmatpush1.msra.mxu0 0.0
    %3673 = vmatprep.subr.mxu0 0.0
    %3674 = vmatpush1.msra.mxu0 0.0
    %3675 = vmatprep.subr.mxu0 0.0
    %3676 = vmatpush1.msra.mxu0 0.0
    %3677 = vmatprep.subr.mxu0 0.0
    %3678 = vmatpush1.msra.mxu0 0.0
    %3679 = vmatprep.subr.mxu0 0.0
    %3680 = vmatpush1.msra.mxu0 0.0
    %3681 = vmatprep.subr.mxu0 0.0
    %3682 = vmatpush1.msra.mxu0 0.0
    %3683 = vmatprep.subr.mxu0 0.0
    %3684 = vmatpush1.msra.mxu0 0.0
    %3685 = vmatprep.subr.mxu0 0.0
    %3686 = vmatpush1.msra.mxu0 0.0
    %3687 = vmatprep.subr.mxu0 0.0
    %3688 = vmatpush1.msra.mxu0 0.0
    %3689 = vmatprep.subr.mxu0 0.0
    %3690 = vmatpush1.msra.mxu0 0.0
    %3691 = vmatprep.mubr.f32.mxu0 0.0
    %3692 = vmatmul.mubr.f32.gmra.mrb[0].mxu0 %v3616
    %v3693 = vpop.f32.mrb[0].mxu0
    %v3694 = vadd.f32 0.0, %v3693
    %v3695 = vpop.f32.mrb[0].mxu0
    %3696 = vmatprep.mubr.f32.mxu0 0.0
    %3697 = vmatmul.mubr.f32.gmra.mrb[0].mxu0 %v3619
    %v3698 = vpop.f32.mrb[0].mxu0
    %v3699 = vadd.f32 0.0, %v3698
    %v3700 = vpop.f32.mrb[0].mxu0
    %3701 = vmatprep.mubr.f32.mxu0 0.0
    %3702 = vmatmul.mubr.f32.gmra.mrb[0].mxu0 %v3622
    %v3703 = vpop.f32.mrb[0].mxu0
    %v3704 = vadd.f32 0.0, %v3703
    %v3705 = vpop.f32.mrb[0].mxu0
    %3706 = vmatprep.mubr.f32.mxu0 0.0
    %3707 = vmatmul.mubr.f32.gmra.mrb[0].mxu0 %v3625
    %v3708 = vpop.f32.mrb[0].mxu0
    %v3709 = vadd.f32 0.0, %v3708
    %v3710 = vpop.f32.mrb[0].mxu0
    %3711 = vdwg.mxu0
    %v3713 = vsel %vm285, %v3417, 0
    %v3716 = vsel %vm285, %v3418, 0
    %v3719 = vsel %vm285, %v3419, 0
    %v3722 = vsel %vm285, %v3420, 0
    %3724 = vmatprep.subr.mxu0 0.0
    %3725 = vmatpush1.msra.mxu0 %v2798
    %3726 = vmatprep.subr.mxu0 0.0
    %3727 = vmatpush1.msra.mxu0 %v2800
    %3728 = vmatprep.subr.mxu0 0.0
    %3729 = vmatpush1.msra.mxu0 %v2802
    %3730 = vmatprep.subr.mxu0 0.0
    %3731 = vmatpush1.msra.mxu0 %v2804
    %3732 = vmatprep.subr.mxu0 0.0
    %3733 = vmatpush1.msra.mxu0 0.0
    %3734 = vmatprep.subr.mxu0 0.0
    %3735 = vmatpush1.msra.mxu0 0.0
    %3736 = vmatprep.subr.mxu0 0.0
    %3737 = vmatpush1.msra.mxu0 0.0
    %3738 = vmatprep.subr.mxu0 0.0
    %3739 = vmatpush1.msra.mxu0 0.0
    %3740 = vmatprep.subr.mxu0 0.0
    %3741 = vmatpush1.msra.mxu0 0.0
    %3742 = vmatprep.subr.mxu0 0.0
    %3743 = vmatpush1.msra.mxu0 0.0
    %3744 = vmatprep.subr.mxu0 0.0
    %3745 = vmatpush1.msra.mxu0 0.0
    %3746 = vmatprep.subr.mxu0 0.0
    %3747 = vmatpush1.msra.mxu0 0.0
    %3748 = vmatprep.subr.mxu0 0.0
    %3749 = vmatpush1.msra.mxu0 0.0
    %3750 = vmatprep.subr.mxu0 0.0
    %3751 = vmatpush1.msra.mxu0 0.0
    %3752 = vmatprep.subr.mxu0 0.0
    %3753 = vmatpush1.msra.mxu0 0.0
    %3754 = vmatprep.subr.mxu0 0.0
    %3755 = vmatpush1.msra.mxu0 0.0
    %3756 = vmatprep.subr.mxu0 0.0
    %3757 = vmatpush1.msra.mxu0 0.0
    %3758 = vmatprep.subr.mxu0 0.0
    %3759 = vmatpush1.msra.mxu0 0.0
    %3760 = vmatprep.subr.mxu0 0.0
    %3761 = vmatpush1.msra.mxu0 0.0
    %3762 = vmatprep.subr.mxu0 0.0
    %3763 = vmatpush1.msra.mxu0 0.0
    %3764 = vmatprep.subr.mxu0 0.0
    %3765 = vmatpush1.msra.mxu0 0.0
    %3766 = vmatprep.subr.mxu0 0.0
    %3767 = vmatpush1.msra.mxu0 0.0
    %3768 = vmatprep.subr.mxu0 0.0
    %3769 = vmatpush1.msra.mxu0 0.0
    %3770 = vmatprep.subr.mxu0 0.0
    %3771 = vmatpush1.msra.mxu0 0.0
    %3772 = vmatprep.subr.mxu0 0.0
    %3773 = vmatpush1.msra.mxu0 0.0
    %3774 = vmatprep.subr.mxu0 0.0
    %3775 = vmatpush1.msra.mxu0 0.0
    %3776 = vmatprep.subr.mxu0 0.0
    %3777 = vmatpush1.msra.mxu0 0.0
    %3778 = vmatprep.subr.mxu0 0.0
    %3779 = vmatpush1.msra.mxu0 0.0
    %3780 = vmatprep.subr.mxu0 0.0
    %3781 = vmatpush1.msra.mxu0 0.0
    %3782 = vmatprep.subr.mxu0 0.0
    %3783 = vmatpush1.msra.mxu0 0.0
    %3784 = vmatprep.subr.mxu0 0.0
    %3785 = vmatpush1.msra.mxu0 0.0
    %3786 = vmatprep.subr.mxu0 0.0
    %3787 = vmatpush1.msra.mxu0 0.0
    %3788 = vmatprep.mubr.f32.mxu0 0.0
    %3789 = vmatmul.mubr.f32.gmra.mrb[0].mxu0 %v3713
    %v3790 = vpop.f32.mrb[0].mxu0
    %v3791 = vadd.f32 0.0, %v3790
    %v3792 = vpop.f32.mrb[0].mxu0
    %3793 = vmatprep.mubr.f32.mxu0 0.0
    %3794 = vmatmul.mubr.f32.gmra.mrb[0].mxu0 %v3716
    %v3795 = vpop.f32.mrb[0].mxu0
    %v3796 = vadd.f32 0.0, %v3795
    %v3797 = vpop.f32.mrb[0].mxu0
    %3798 = vmatprep.mubr.f32.mxu0 0.0
    %3799 = vmatmul.mubr.f32.gmra.mrb[0].mxu0 %v3719
    %v3800 = vpop.f32.mrb[0].mxu0
    %v3801 = vadd.f32 0.0, %v3800
    %v3802 = vpop.f32.mrb[0].mxu0
    %3803 = vmatprep.mubr.f32.mxu0 0.0
    %3804 = vmatmul.mubr.f32.gmra.mrb[0].mxu0 %v3722
    %v3805 = vpop.f32.mrb[0].mxu0
    %v3806 = vadd.f32 0.0, %v3805
    %v3807 = vpop.f32.mrb[0].mxu0
    %3808 = vdwg.mxu0
    %3813 = vrot.lane.b32.xlu0 %v3597, 16
    %v3814 = vpop.permute.xlu0 %3813
    %3815 = vrot.lane.b32.xlu0 %v3602, 16
    %v3816 = vpop.permute.xlu0 %3815
    %3817 = vrot.lane.b32.xlu0 %v3607, 16
    %v3818 = vpop.permute.xlu0 %3817
    %3819 = vrot.lane.b32.xlu0 %v3612, 16
    %v3820 = vpop.permute.xlu0 %3819
    %3829 = vrot.lane.b32.xlu0 %v3694, 32
    %v3830 = vpop.permute.xlu0 %3829
    %3831 = vrot.lane.b32.xlu0 %v3699, 32
    %v3832 = vpop.permute.xlu0 %3831
    %3833 = vrot.lane.b32.xlu0 %v3704, 32
    %v3834 = vpop.permute.xlu0 %3833
    %3835 = vrot.lane.b32.xlu0 %v3709, 32
    %v3836 = vpop.permute.xlu0 %3835
    %3845 = vrot.lane.b32.xlu0 %v3791, 48
    %v3846 = vpop.permute.xlu0 %3845
    %3847 = vrot.lane.b32.xlu0 %v3796, 48
    %v3848 = vpop.permute.xlu0 %3847
    %3849 = vrot.lane.b32.xlu0 %v3801, 48
    %v3850 = vpop.permute.xlu0 %3849
    %3851 = vrot.lane.b32.xlu0 %v3806, 48
    %v3852 = vpop.permute.xlu0 %3851
    %v3857 = vsel %vm857, %v3500, %v3814
    %v3858 = vsel %vm857, %v3505, %v3816
    %v3859 = vsel %vm857, %v3510, %v3818
    %v3860 = vsel %vm857, %v3515, %v3820
    %v3861 = vsel %vm285, %v3857, %v3830
    %v3862 = vsel %vm285, %v3858, %v3832
    %v3863 = vsel %vm285, %v3859, %v3834
    %v3864 = vsel %vm285, %v3860, %v3836
    %v3865 = vsel %vm1914, %v3861, %v3846
    %v3866 = vsel %vm1914, %v3862, %v3848
    %v3867 = vsel %vm1914, %v3863, %v3850
    %v3868 = vsel %vm1914, %v3864, %v3852
    %s3869 = scalar_lea.vmem %s15, 64
    %v3870 = vld [vmem:[%s3869] sm:$0xff]
    %v3871 = vld [vmem:[%s3869 + $0x8] sm:$0xff]
    %v3872 = vld [vmem:[%s3869 + $0x10] sm:$0xff]
    %v3873 = vld [vmem:[%s3869 + $0x18] sm:$0xff]
    %v3874 = vld [vmem:[%s3869 + $0x20] sm:$0xff]
    %v3875 = vld [vmem:[%s3869 + $0x28] sm:$0xff]
    %v3876 = vld [vmem:[%s3869 + $0x30] sm:$0xff]
    %v3877 = vld [vmem:[%s3869 + $0x38] sm:$0xff]
    %v3879 = vsel %vm83, %v3865, 0
    %v3882 = vsel %vm83, %v3866, 0
    %v3885 = vsel %vm83, %v3867, 0
    %v3888 = vsel %vm83, %v3868, 0
    %3890 = vmatprep.subr.mxu0 0.0
    %3891 = vmatpush1.msra.mxu0 %v3870
    %3892 = vmatprep.subr.mxu0 0.0
    %3893 = vmatpush1.msra.mxu0 %v3871
    %3894 = vmatprep.subr.mxu0 0.0
    %3895 = vmatpush1.msra.mxu0 %v3872
    %3896 = vmatprep.subr.mxu0 0.0
    %3897 = vmatpush1.msra.mxu0 %v3873
    %3898 = vmatprep.subr.mxu0 0.0
    %3899 = vmatpush1.msra.mxu0 %v3874
    %3900 = vmatprep.subr.mxu0 0.0
    %3901 = vmatpush1.msra.mxu0 %v3875
    %3902 = vmatprep.subr.mxu0 0.0
    %3903 = vmatpush1.msra.mxu0 %v3876
    %3904 = vmatprep.subr.mxu0 0.0
    %3905 = vmatpush1.msra.mxu0 %v3877
    %3906 = vmatprep.subr.mxu0 0.0
    %3907 = vmatpush1.msra.mxu0 0.0
    %3908 = vmatprep.subr.mxu0 0.0
    %3909 = vmatpush1.msra.mxu0 0.0
    %3910 = vmatprep.subr.mxu0 0.0
    %3911 = vmatpush1.msra.mxu0 0.0
    %3912 = vmatprep.subr.mxu0 0.0
    %3913 = vmatpush1.msra.mxu0 0.0
    %3914 = vmatprep.subr.mxu0 0.0
    %3915 = vmatpush1.msra.mxu0 0.0
    %3916 = vmatprep.subr.mxu0 0.0
    %3917 = vmatpush1.msra.mxu0 0.0
    %3918 = vmatprep.subr.mxu0 0.0
    %3919 = vmatpush1.msra.mxu0 0.0
    %3920 = vmatprep.subr.mxu0 0.0
    %3921 = vmatpush1.msra.mxu0 0.0
    %3922 = vmatprep.subr.mxu0 0.0
    %3923 = vmatpush1.msra.mxu0 0.0
    %3924 = vmatprep.subr.mxu0 0.0
    %3925 = vmatpush1.msra.mxu0 0.0
    %3926 = vmatprep.subr.mxu0 0.0
    %3927 = vmatpush1.msra.mxu0 0.0
    %3928 = vmatprep.subr.mxu0 0.0
    %3929 = vmatpush1.msra.mxu0 0.0
    %3930 = vmatprep.subr.mxu0 0.0
    %3931 = vmatpush1.msra.mxu0 0.0
    %3932 = vmatprep.subr.mxu0 0.0
    %3933 = vmatpush1.msra.mxu0 0.0
    %3934 = vmatprep.subr.mxu0 0.0
    %3935 = vmatpush1.msra.mxu0 0.0
    %3936 = vmatprep.subr.mxu0 0.0
    %3937 = vmatpush1.msra.mxu0 0.0
    %3938 = vmatprep.subr.mxu0 0.0
    %3939 = vmatpush1.msra.mxu0 0.0
    %3940 = vmatprep.subr.mxu0 0.0
    %3941 = vmatpush1.msra.mxu0 0.0
    %3942 = vmatprep.subr.mxu0 0.0
    %3943 = vmatpush1.msra.mxu0 0.0
    %3944 = vmatprep.subr.mxu0 0.0
    %3945 = vmatpush1.msra.mxu0 0.0
    %3946 = vmatprep.subr.mxu0 0.0
    %3947 = vmatpush1.msra.mxu0 0.0
    %3948 = vmatprep.subr.mxu0 0.0
    %3949 = vmatpush1.msra.mxu0 0.0
    %3950 = vmatprep.subr.mxu0 0.0
    %3951 = vmatpush1.msra.mxu0 0.0
    %3952 = vmatprep.subr.mxu0 0.0
    %3953 = vmatpush1.msra.mxu0 0.0
    %3954 = vmatprep.mubr.f32.mxu0 0.0
    %3955 = vmatmul.mubr.f32.gmra.mrb[0].mxu0 %v3879
    %v3956 = vpop.f32.mrb[0].mxu0
    %v3957 = vadd.f32 0.0, %v3956
    %v3958 = vpop.f32.mrb[0].mxu0
    %3959 = vmatprep.mubr.f32.mxu0 0.0
    %3960 = vmatmul.mubr.f32.gmra.mrb[0].mxu0 %v3882
    %v3961 = vpop.f32.mrb[0].mxu0
    %v3962 = vadd.f32 0.0, %v3961
    %v3963 = vpop.f32.mrb[0].mxu0
    %3964 = vmatprep.mubr.f32.mxu0 0.0
    %3965 = vmatmul.mubr.f32.gmra.mrb[0].mxu0 %v3885
    %v3966 = vpop.f32.mrb[0].mxu0
    %v3967 = vadd.f32 0.0, %v3966
    %v3968 = vpop.f32.mrb[0].mxu0
    %3969 = vmatprep.mubr.f32.mxu0 0.0
    %3970 = vmatmul.mubr.f32.gmra.mrb[0].mxu0 %v3888
    %v3971 = vpop.f32.mrb[0].mxu0
    %v3972 = vadd.f32 0.0, %v3971
    %v3973 = vpop.f32.mrb[0].mxu0
    %3974 = vdwg.mxu0
    %v3975 = vadd.f32 %v2351, %v3957
    %v3976 = vadd.f32 %v2352, %v3962
    %v3977 = vadd.f32 %v2353, %v3967
    %v3978 = vadd.f32 %v2354, %v3972
    %s3979 = scalar_lea.vmem %s16, 1
    %v3980 = vld [vmem:[%s3979] sm:$0x1]
    %v3982 = vlaneseq
    %v3983 = vshrl.u32 %v3982, 7
    %v3984 = vsub.s32 0, %v3983
    %v3985 = vrot.slane %v3980, %v3984
    %v3987 = vadd.f32 %v3975, %v3985
    %v3988 = vadd.f32 %v3976, %v3985
    %v3989 = vadd.f32 %v3977, %v3985
    %v3990 = vadd.f32 %v3978, %v3985
    %v3991 = vsel %vm285, %v3987, 0.0
    %3992 = vadd.xlane.f32.xlu0 %v3991
    %v3993 = vpop.xlane.xlu0 %3992
    %v3994 = vsel %vm285, %v3988, 0.0
    %3995 = vadd.xlane.f32.xlu0 %v3994
    %v3996 = vpop.xlane.xlu0 %3995
    %v3997 = vsel %vm285, %v3989, 0.0
    %3998 = vadd.xlane.f32.xlu0 %v3997
    %v3999 = vpop.xlane.xlu0 %3998
    %v4000 = vsel %vm285, %v3990, 0.0
    %4001 = vadd.xlane.f32.xlu0 %v4000
    %v4002 = vpop.xlane.xlu0 %4001
    %v4003 = vmul.f32 %v3993, %v298
    %v4004 = vmul.f32 %v3996, %v298
    %v4005 = vmul.f32 %v3999, %v298
    %v4006 = vmul.f32 %v4002, %v298
    %v4007 = vsub.f32 %v3987, %v4003
    %v4008 = vsub.f32 %v3988, %v4004
    %v4009 = vsub.f32 %v3989, %v4005
    %v4010 = vsub.f32 %v3990, %v4006
    %v4011 = vmul.f32 %v4007, %v4007
    %v4012 = vmul.f32 %v4008, %v4008
    %v4013 = vmul.f32 %v4009, %v4009
    %v4014 = vmul.f32 %v4010, %v4010
    %v4015 = vsel %vm285, %v4011, 0.0
    %4016 = vadd.xlane.f32.xlu0 %v4015
    %v4017 = vpop.xlane.xlu0 %4016
    %v4018 = vsel %vm285, %v4012, 0.0
    %4019 = vadd.xlane.f32.xlu0 %v4018
    %v4020 = vpop.xlane.xlu0 %4019
    %v4021 = vsel %vm285, %v4013, 0.0
    %4022 = vadd.xlane.f32.xlu0 %v4021
    %v4023 = vpop.xlane.xlu0 %4022
    %v4024 = vsel %vm285, %v4014, 0.0
    %4025 = vadd.xlane.f32.xlu0 %v4024
    %v4026 = vpop.xlane.xlu0 %4025
    %v4027 = vmul.f32 %v4017, %v298
    %v4028 = vmul.f32 %v4020, %v298
    %v4029 = vmul.f32 %v4023, %v298
    %v4030 = vmul.f32 %v4026, %v298
    %v4031 = vadd.f32 %v4027, 1e-05
    %v4032 = vadd.f32 %v4028, 1e-05
    %v4033 = vadd.f32 %v4029, 1e-05
    %v4034 = vadd.f32 %v4030, 1e-05
    %v4035 = vrsqrt.pop %v4031
    %v4036 = vrsqrt.pop %v4032
    %v4037 = vrsqrt.pop %v4033
    %v4038 = vrsqrt.pop %v4034
    %v4039 = vmul.f32 %v4007, %v4035
    %v4040 = vmul.f32 %v4008, %v4036
    %v4041 = vmul.f32 %v4009, %v4037
    %v4042 = vmul.f32 %v4010, %v4038
    %s4043 = scalar_lea.vmem %s17, 32
    %v4044 = vld [vmem:[%s4043] sm:$0xff]
    %v4045 = vld [vmem:[%s4043 + $0x8] sm:$0xff]
    %v4046 = vld [vmem:[%s4043 + $0x10] sm:$0xff]
    %v4047 = vld [vmem:[%s4043 + $0x18] sm:$0xff]
    %s4048 = scalar_lea.vmem %s18, 1
    %v4049 = vld [vmem:[%s4048] sm:$0x1]
    %v4051 = vlaneseq
    %v4052 = vshrl.u32 %v4051, 7
    %v4053 = vsub.s32 0, %v4052
    %v4054 = vrot.slane %v4049, %v4053
    %v4057 = vsel %vm285, %v4039, 0
    %v4060 = vsel %vm285, %v4040, 0
    %v4063 = vsel %vm285, %v4041, 0
    %v4066 = vsel %vm285, %v4042, 0
    %4068 = vmatprep.subr.mxu0 0.0
    %4069 = vmatpush1.msra.mxu0 %v4044
    %4070 = vmatprep.subr.mxu0 0.0
    %4071 = vmatpush1.msra.mxu0 %v4045
    %4072 = vmatprep.subr.mxu0 0.0
    %4073 = vmatpush1.msra.mxu0 %v4046
    %4074 = vmatprep.subr.mxu0 0.0
    %4075 = vmatpush1.msra.mxu0 %v4047
    %4076 = vmatprep.subr.mxu0 0.0
    %4077 = vmatpush1.msra.mxu0 0.0
    %4078 = vmatprep.subr.mxu0 0.0
    %4079 = vmatpush1.msra.mxu0 0.0
    %4080 = vmatprep.subr.mxu0 0.0
    %4081 = vmatpush1.msra.mxu0 0.0
    %4082 = vmatprep.subr.mxu0 0.0
    %4083 = vmatpush1.msra.mxu0 0.0
    %4084 = vmatprep.subr.mxu0 0.0
    %4085 = vmatpush1.msra.mxu0 0.0
    %4086 = vmatprep.subr.mxu0 0.0
    %4087 = vmatpush1.msra.mxu0 0.0
    %4088 = vmatprep.subr.mxu0 0.0
    %4089 = vmatpush1.msra.mxu0 0.0
    %4090 = vmatprep.subr.mxu0 0.0
    %4091 = vmatpush1.msra.mxu0 0.0
    %4092 = vmatprep.subr.mxu0 0.0
    %4093 = vmatpush1.msra.mxu0 0.0
    %4094 = vmatprep.subr.mxu0 0.0
    %4095 = vmatpush1.msra.mxu0 0.0
    %4096 = vmatprep.subr.mxu0 0.0
    %4097 = vmatpush1.msra.mxu0 0.0
    %4098 = vmatprep.subr.mxu0 0.0
    %4099 = vmatpush1.msra.mxu0 0.0
    %4100 = vmatprep.subr.mxu0 0.0
    %4101 = vmatpush1.msra.mxu0 0.0
    %4102 = vmatprep.subr.mxu0 0.0
    %4103 = vmatpush1.msra.mxu0 0.0
    %4104 = vmatprep.subr.mxu0 0.0
    %4105 = vmatpush1.msra.mxu0 0.0
    %4106 = vmatprep.subr.mxu0 0.0
    %4107 = vmatpush1.msra.mxu0 0.0
    %4108 = vmatprep.subr.mxu0 0.0
    %4109 = vmatpush1.msra.mxu0 0.0
    %4110 = vmatprep.subr.mxu0 0.0
    %4111 = vmatpush1.msra.mxu0 0.0
    %4112 = vmatprep.subr.mxu0 0.0
    %4113 = vmatpush1.msra.mxu0 0.0
    %4114 = vmatprep.subr.mxu0 0.0
    %4115 = vmatpush1.msra.mxu0 0.0
    %4116 = vmatprep.subr.mxu0 0.0
    %4117 = vmatpush1.msra.mxu0 0.0
    %4118 = vmatprep.subr.mxu0 0.0
    %4119 = vmatpush1.msra.mxu0 0.0
    %4120 = vmatprep.subr.mxu0 0.0
    %4121 = vmatpush1.msra.mxu0 0.0
    %4122 = vmatprep.subr.mxu0 0.0
    %4123 = vmatpush1.msra.mxu0 0.0
    %4124 = vmatprep.subr.mxu0 0.0
    %4125 = vmatpush1.msra.mxu0 0.0
    %4126 = vmatprep.subr.mxu0 0.0
    %4127 = vmatpush1.msra.mxu0 0.0
    %4128 = vmatprep.subr.mxu0 0.0
    %4129 = vmatpush1.msra.mxu0 0.0
    %4130 = vmatprep.subr.mxu0 0.0
    %4131 = vmatpush1.msra.mxu0 0.0
    %4132 = vmatprep.mubr.f32.mxu0 0.0
    %4133 = vmatmul.mubr.f32.gmra.mrb[0].mxu0 %v4057
    %v4134 = vpop.f32.mrb[0].mxu0
    %v4135 = vadd.f32 %v4054, %v4134
    %v4136 = vpop.f32.mrb[0].mxu0
    %4137 = vmatprep.mubr.f32.mxu0 0.0
    %4138 = vmatmul.mubr.f32.gmra.mrb[0].mxu0 %v4060
    %v4139 = vpop.f32.mrb[0].mxu0
    %v4140 = vadd.f32 %v4054, %v4139
    %v4141 = vpop.f32.mrb[0].mxu0
    %4142 = vmatprep.mubr.f32.mxu0 0.0
    %4143 = vmatmul.mubr.f32.gmra.mrb[0].mxu0 %v4063
    %v4144 = vpop.f32.mrb[0].mxu0
    %v4145 = vadd.f32 %v4054, %v4144
    %v4146 = vpop.f32.mrb[0].mxu0
    %4147 = vmatprep.mubr.f32.mxu0 0.0
    %4148 = vmatmul.mubr.f32.gmra.mrb[0].mxu0 %v4066
    %v4149 = vpop.f32.mrb[0].mxu0
    %v4150 = vadd.f32 %v4054, %v4149
    %v4151 = vpop.f32.mrb[0].mxu0
    %4152 = vdwg.mxu0
    %v4153 = vmul.f32 %v4135, 0.5
    %v4154 = vmul.f32 %v4140, 0.5
    %v4155 = vmul.f32 %v4145, 0.5
    %v4156 = vmul.f32 %v4150, 0.5
    %v4157 = vmul.f32 %v4135, 0.044715
    %v4158 = vmul.f32 %v4140, 0.044715
    %v4159 = vmul.f32 %v4145, 0.044715
    %v4160 = vmul.f32 %v4150, 0.044715
    %v4161 = vmul.f32 %v4157, %v4135
    %v4162 = vmul.f32 %v4158, %v4140
    %v4163 = vmul.f32 %v4159, %v4145
    %v4164 = vmul.f32 %v4160, %v4150
    %v4165 = vmul.f32 %v4161, %v4135
    %v4166 = vmul.f32 %v4162, %v4140
    %v4167 = vmul.f32 %v4163, %v4145
    %v4168 = vmul.f32 %v4164, %v4150
    %v4169 = vadd.f32 %v4135, %v4165
    %v4170 = vadd.f32 %v4140, %v4166
    %v4171 = vadd.f32 %v4145, %v4167
    %v4172 = vadd.f32 %v4150, %v4168
    %v4173 = vmul.f32 %v4169, 0.7978846
    %v4174 = vmul.f32 %v4170, 0.7978846
    %v4175 = vmul.f32 %v4171, 0.7978846
    %v4176 = vmul.f32 %v4172, 0.7978846
    %v4177 = vtanh.pop %v4173
    %v4178 = vtanh.pop %v4174
    %v4179 = vtanh.pop %v4175
    %v4180 = vtanh.pop %v4176
    %v4181 = vadd.f32 %v4177, 1.0
    %v4182 = vadd.f32 %v4178, 1.0
    %v4183 = vadd.f32 %v4179, 1.0
    %v4184 = vadd.f32 %v4180, 1.0
    %v4185 = vmul.f32 %v4153, %v4181
    %v4186 = vmul.f32 %v4154, %v4182
    %v4187 = vmul.f32 %v4155, %v4183
    %v4188 = vmul.f32 %v4156, %v4184
    %s4189 = scalar_lea.vmem %s19, 64
    %v4190 = vld [vmem:[%s4189] sm:$0xff]
    %v4191 = vld [vmem:[%s4189 + $0x8] sm:$0xff]
    %v4192 = vld [vmem:[%s4189 + $0x10] sm:$0xff]
    %v4193 = vld [vmem:[%s4189 + $0x18] sm:$0xff]
    %v4194 = vld [vmem:[%s4189 + $0x20] sm:$0xff]
    %v4195 = vld [vmem:[%s4189 + $0x28] sm:$0xff]
    %v4196 = vld [vmem:[%s4189 + $0x30] sm:$0xff]
    %v4197 = vld [vmem:[%s4189 + $0x38] sm:$0xff]
    %v4199 = vsel %vm83, %v4185, 0
    %v4202 = vsel %vm83, %v4186, 0
    %v4205 = vsel %vm83, %v4187, 0
    %v4208 = vsel %vm83, %v4188, 0
    %4210 = vmatprep.subr.mxu0 0.0
    %4211 = vmatpush1.msra.mxu0 %v4190
    %4212 = vmatprep.subr.mxu0 0.0
    %4213 = vmatpush1.msra.mxu0 %v4191
    %4214 = vmatprep.subr.mxu0 0.0
    %4215 = vmatpush1.msra.mxu0 %v4192
    %4216 = vmatprep.subr.mxu0 0.0
    %4217 = vmatpush1.msra.mxu0 %v4193
    %4218 = vmatprep.subr.mxu0 0.0
    %4219 = vmatpush1.msra.mxu0 %v4194
    %4220 = vmatprep.subr.mxu0 0.0
    %4221 = vmatpush1.msra.mxu0 %v4195
    %4222 = vmatprep.subr.mxu0 0.0
    %4223 = vmatpush1.msra.mxu0 %v4196
    %4224 = vmatprep.subr.mxu0 0.0
    %4225 = vmatpush1.msra.mxu0 %v4197
    %4226 = vmatprep.subr.mxu0 0.0
    %4227 = vmatpush1.msra.mxu0 0.0
    %4228 = vmatprep.subr.mxu0 0.0
    %4229 = vmatpush1.msra.mxu0 0.0
    %4230 = vmatprep.subr.mxu0 0.0
    %4231 = vmatpush1.msra.mxu0 0.0
    %4232 = vmatprep.subr.mxu0 0.0
    %4233 = vmatpush1.msra.mxu0 0.0
    %4234 = vmatprep.subr.mxu0 0.0
    %4235 = vmatpush1.msra.mxu0 0.0
    %4236 = vmatprep.subr.mxu0 0.0
    %4237 = vmatpush1.msra.mxu0 0.0
    %4238 = vmatprep.subr.mxu0 0.0
    %4239 = vmatpush1.msra.mxu0 0.0
    %4240 = vmatprep.subr.mxu0 0.0
    %4241 = vmatpush1.msra.mxu0 0.0
    %4242 = vmatprep.subr.mxu0 0.0
    %4243 = vmatpush1.msra.mxu0 0.0
    %4244 = vmatprep.subr.mxu0 0.0
    %4245 = vmatpush1.msra.mxu0 0.0
    %4246 = vmatprep.subr.mxu0 0.0
    %4247 = vmatpush1.msra.mxu0 0.0
    %4248 = vmatprep.subr.mxu0 0.0
    %4249 = vmatpush1.msra.mxu0 0.0
    %4250 = vmatprep.subr.mxu0 0.0
    %4251 = vmatpush1.msra.mxu0 0.0
    %4252 = vmatprep.subr.mxu0 0.0
    %4253 = vmatpush1.msra.mxu0 0.0
    %4254 = vmatprep.subr.mxu0 0.0
    %4255 = vmatpush1.msra.mxu0 0.0
    %4256 = vmatprep.subr.mxu0 0.0
    %4257 = vmatpush1.msra.mxu0 0.0
    %4258 = vmatprep.subr.mxu0 0.0
    %4259 = vmatpush1.msra.mxu0 0.0
    %4260 = vmatprep.subr.mxu0 0.0
    %4261 = vmatpush1.msra.mxu0 0.0
    %4262 = vmatprep.subr.mxu0 0.0
    %4263 = vmatpush1.msra.mxu0 0.0
    %4264 = vmatprep.subr.mxu0 0.0
    %4265 = vmatpush1.msra.mxu0 0.0
    %4266 = vmatprep.subr.mxu0 0.0
    %4267 = vmatpush1.msra.mxu0 0.0
    %4268 = vmatprep.subr.mxu0 0.0
    %4269 = vmatpush1.msra.mxu0 0.0
    %4270 = vmatprep.subr.mxu0 0.0
    %4271 = vmatpush1.msra.mxu0 0.0
    %4272 = vmatprep.subr.mxu0 0.0
    %4273 = vmatpush1.msra.mxu0 0.0
    %4274 = vmatprep.mubr.f32.mxu0 0.0
    %4275 = vmatmul.mubr.f32.gmra.mrb[0].mxu0 %v4199
    %v4276 = vpop.f32.mrb[0].mxu0
    %v4277 = vadd.f32 0.0, %v4276
    %v4278 = vpop.f32.mrb[0].mxu0
    %4279 = vmatprep.mubr.f32.mxu0 0.0
    %4280 = vmatmul.mubr.f32.gmra.mrb[0].mxu0 %v4202
    %v4281 = vpop.f32.mrb[0].mxu0
    %v4282 = vpop.f32.mrb[0].mxu0
    %4283 = vmatprep.mubr.f32.mxu0 0.0
    %4284 = vmatmul.mubr.f32.gmra.mrb[0].mxu0 %v4205
    %v4285 = vpop.f32.mrb[0].mxu0
    %v4286 = vadd.f32 0.0, %v4285
    %v4287 = vpop.f32.mrb[0].mxu0
    %4288 = vmatprep.mubr.f32.mxu0 0.0
    %4289 = vmatmul.mubr.f32.gmra.mrb[0].mxu0 %v4208
    %v4290 = vpop.f32.mrb[0].mxu0
    %v4291 = vpop.f32.mrb[0].mxu0
    %4292 = vdwg.mxu0
    %v4293 = vadd.f32 %v3987, %v4277
    %v4294 = vadd.f32 %v3989, %v4286
    %s4295 = scalar_lea.vmem %s20, 1
    %v4296 = vld [vmem:[%s4295] sm:$0x1]
    %v4298 = vlaneseq
    %v4299 = vshrl.u32 %v4298, 7
    %v4300 = vsub.s32 0, %v4299
    %v4301 = vrot.slane %v4296, %v4300
    %v4303 = vadd.f32 %v4293, %v4301
    %v4304 = vadd.f32 %v4294, %v4301
    %v4306 = vrot.slane %v4304, 7
    %vm4308 = vcmask 1040384
    %v4309 = vsel %vm4308, %v4303, %v4306
    %vm4310 = vcmask 254976
    %v4311 = vsel %vm4310, %v4309, 0.0
    %4312 = vadd.xlane.f32.xlu0 %v4311
    %v4313 = vpop.xlane.xlu0 %4312
    %v4314 = vmul.f32 %v4313, %v298
    %v4315 = vsub.f32 %v4309, %v4314
    %v4316 = vmul.f32 %v4315, %v4315
    %v4317 = vsel %vm4310, %v4316, 0.0
    %4318 = vadd.xlane.f32.xlu0 %v4317
    %v4319 = vpop.xlane.xlu0 %4318
    %v4320 = vmul.f32 %v4319, %v298
    %v4321 = vadd.f32 %v4320, 1e-05
    %v4322 = vrsqrt.pop %v4321
    %v4323 = vmul.f32 %v4315, %v4322
    %v4324 = vld [vmem:[%s21] sm:$0xff]
    %v4325 = vld [vmem:[%s21 + $0x8] sm:$0xff]
    %v4326 = vld [vmem:[%s21 + $0x10] sm:$0xff]
    %v4327 = vld [vmem:[%s21 + $0x18] sm:$0xff]
    %v4328 = vld [vmem:[%s22] sm:$0x1]
    %v4330 = vlaneseq
    %v4331 = vshrl.u32 %v4330, 7
    %v4332 = vsub.s32 0, %v4331
    %v4333 = vrot.slane %v4328, %v4332
    %v4336 = vsel %vm285, %v4323, 0
    %4338 = vmatprep.subr.mxu0 0.0
    %4339 = vmatpush1.msra.mxu0 %v4324
    %4340 = vmatprep.subr.mxu0 0.0
    %4341 = vmatpush1.msra.mxu0 %v4325
    %4342 = vmatprep.subr.mxu0 0.0
    %4343 = vmatpush1.msra.mxu0 %v4326
    %4344 = vmatprep.subr.mxu0 0.0
    %4345 = vmatpush1.msra.mxu0 %v4327
    %4346 = vmatprep.subr.mxu0 0.0
    %4347 = vmatpush1.msra.mxu0 0.0
    %4348 = vmatprep.subr.mxu0 0.0
    %4349 = vmatpush1.msra.mxu0 0.0
    %4350 = vmatprep.subr.mxu0 0.0
    %4351 = vmatpush1.msra.mxu0 0.0
    %4352 = vmatprep.subr.mxu0 0.0
    %4353 = vmatpush1.msra.mxu0 0.0
    %4354 = vmatprep.subr.mxu0 0.0
    %4355 = vmatpush1.msra.mxu0 0.0
    %4356 = vmatprep.subr.mxu0 0.0
    %4357 = vmatpush1.msra.mxu0 0.0
    %4358 = vmatprep.subr.mxu0 0.0
    %4359 = vmatpush1.msra.mxu0 0.0
    %4360 = vmatprep.subr.mxu0 0.0
    %4361 = vmatpush1.msra.mxu0 0.0
    %4362 = vmatprep.subr.mxu0 0.0
    %4363 = vmatpush1.msra.mxu0 0.0
    %4364 = vmatprep.subr.mxu0 0.0
    %4365 = vmatpush1.msra.mxu0 0.0
    %4366 = vmatprep.subr.mxu0 0.0
    %4367 = vmatpush1.msra.mxu0 0.0
    %4368 = vmatprep.subr.mxu0 0.0
    %4369 = vmatpush1.msra.mxu0 0.0
    %4370 = vmatprep.subr.mxu0 0.0
    %4371 = vmatpush1.msra.mxu0 0.0
    %4372 = vmatprep.subr.mxu0 0.0
    %4373 = vmatpush1.msra.mxu0 0.0
    %4374 = vmatprep.subr.mxu0 0.0
    %4375 = vmatpush1.msra.mxu0 0.0
    %4376 = vmatprep.subr.mxu0 0.0
    %4377 = vmatpush1.msra.mxu0 0.0
    %4378 = vmatprep.subr.mxu0 0.0
    %4379 = vmatpush1.msra.mxu0 0.0
    %4380 = vmatprep.subr.mxu0 0.0
    %4381 = vmatpush1.msra.mxu0 0.0
    %4382 = vmatprep.subr.mxu0 0.0
    %4383 = vmatpush1.msra.mxu0 0.0
    %4384 = vmatprep.subr.mxu0 0.0
    %4385 = vmatpush1.msra.mxu0 0.0
    %4386 = vmatprep.subr.mxu0 0.0
    %4387 = vmatpush1.msra.mxu0 0.0
    %4388 = vmatprep.subr.mxu0 0.0
    %4389 = vmatpush1.msra.mxu0 0.0
    %4390 = vmatprep.subr.mxu0 0.0
    %4391 = vmatpush1.msra.mxu0 0.0
    %4392 = vmatprep.subr.mxu0 0.0
    %4393 = vmatpush1.msra.mxu0 0.0
    %4394 = vmatprep.subr.mxu0 0.0
    %4395 = vmatpush1.msra.mxu0 0.0
    %4396 = vmatprep.subr.mxu0 0.0
    %4397 = vmatpush1.msra.mxu0 0.0
    %4398 = vmatprep.subr.mxu0 0.0
    %4399 = vmatpush1.msra.mxu0 0.0
    %4400 = vmatprep.subr.mxu0 0.0
    %4401 = vmatpush1.msra.mxu0 0.0
    %4402 = vmatprep.mubr.f32.mxu0 0.0
    %4403 = vmatmul.mubr.f32.gmra.mrb[0].mxu0 %v4336
    %v4404 = vpop.f32.mrb[0].mxu0
    %v4405 = vadd.f32 %v4333, %v4404
    %v4406 = vpop.f32.mrb[0].mxu0
    %4407 = vdwg.mxu0
    %vm4408 = vcmask 9216
    %4409 = vst.msk [vmem:[#allocation2] sm:$0x3] %vm4408, %v4405
    // Predicated region
    $region94: #{tpu_custom_call.1} parent=1 // pred_check
      _
    $region95: #{tpu_custom_call.1} parent=1 // pred_check_branch
      %4411 = sbr.rel (0) target = $region97
    $region96: #{tpu_custom_call.1} parent=1 // pred_region
      %s4413 = ssub.s32 32, 32
      %4414 = vsyncadd [#allocation3], %s4413
      %s4416 = sshll.u32 [#allocation2], 4
      %s4417 = int_to_ptr.vmem [resolvable:$true] %s4416
      %4419 = dma.vmem_to_hbm [thread:$0]  %s4417, 32, %s23, [#allocation3]
    $region97: #{tpu_custom_call.1} parent=1 // pred_fallthru
      _
    // Predicated region
    $region98: #{tpu_custom_call.1} parent=1 // pred_check
      _
    $region99: #{tpu_custom_call.1} parent=1 // pred_check_branch
      %4421 = sbr.rel (0) target = $region101
    $region100: #{tpu_custom_call.1} parent=1 // pred_region
      %4422 = dma.done [#allocation3], 32
    $region101: #{tpu_custom_call.1} parent=1 // pred_fallthru
      _
    %4423 = vsyncpa [#allocation3], 1

</llo_original>
